<compile_context>
chip_gen: v7x
topology: tpu7x:2x2x1
jax: 0.10.0
libtpu: 0.0.40
codegen_flags: <defaults>
</compile_context>

<pallas_src>
import math
from functools import partial

import jax
import jax.numpy as jnp
from jax import lax
from jax.experimental import pallas as pl
from jax.experimental.pallas import tpu as pltpu


_N_LAYER_REFS = 15  # per-layer ref count in the fused kernel's argument list


def _layernorm(x, g, b, eps):
    mean = jnp.mean(x, axis=-1, keepdims=True)
    xc = x - mean
    var = jnp.mean(xc * xc, axis=-1, keepdims=True)      # biased, like torch LN
    return xc * lax.rsqrt(var + eps) * g + b


def _forward_kernel(*refs, batch, seq, num_heads, num_layers, eps):
    # refs = [x, emb_w, emb_b, <num_layers * 15 layer refs>, fc_w, fc_b, out]
    x_ref, embw_ref, embb_ref = refs[0], refs[1], refs[2]
    fcw_ref, fcb_ref, o_ref = refs[-3], refs[-2], refs[-1]

    cdt = embw_ref.dtype                       # matmul operand dtype (bfloat16)

    # ---- embedding over the whole (B*S, in) slab: one MXU push ----
    x = x_ref[...]
    h = (jnp.dot(x.astype(cdt), embw_ref[...],
                 preferred_element_type=jnp.float32) + embb_ref[...])  # (B*S, E) f32
    E = h.shape[-1]
    Dh = E // num_heads
    scale = 1.0 / math.sqrt(Dh)

    for layer in range(num_layers):
        base = 3 + layer * _N_LAYER_REFS
        (wq_ref, bq_ref, wk_ref, bk_ref, wvo_ref, bvo_ref, bo_ref,
         ln1g_ref, ln1b_ref, ff1w_ref, ff1b_ref, ff2w_ref, ff2b_ref,
         ln2g_ref, ln2b_ref) = refs[base:base + _N_LAYER_REFS]

        h_mx = h.astype(cdt)                   # bf16 copy feeding the MXU

        # ---- multi-head self-attention --------------------------------
        # Per-head projections run on the FULL (B*S, E) slab; heads are
        # selected by a leading-axis index on the weight refs (no lane
        # slicing).  The softmax core runs per sequence on sublane-aligned
        # 8-row slices.  Wo is pre-folded into Wvo, so each head's
        # contribution is already in model space and heads just accumulate.
        ctx_rows = [None] * batch
        for hh in range(num_heads):
            q_all = (jnp.dot(h_mx, wq_ref[hh],
                             preferred_element_type=jnp.float32) + bq_ref[hh])   # (B*S, Dh)
            k_all = (jnp.dot(h_mx, wk_ref[hh],
                             preferred_element_type=jnp.float32) + bk_ref[hh])   # (B*S, Dh)
            vo_all = (jnp.dot(h_mx, wvo_ref[hh],
                              preferred_element_type=jnp.float32) + bvo_ref[hh])  # (B*S, E)
            for b in range(batch):             # static unroll over sequences
                lo, hi = b * seq, (b + 1) * seq
                q = q_all[lo:hi, :] * scale                        # (S, Dh) f32
                k = k_all[lo:hi, :]
                # q @ k^T without materialising a transpose (contract Dh axes)
                s = lax.dot_general(q, k, (((1,), (1,)), ((), ())),
                                    preferred_element_type=jnp.float32)  # (S, S)
                s = s - jnp.max(s, axis=-1, keepdims=True)
                p = jnp.exp(s)
                p = p / jnp.sum(p, axis=-1, keepdims=True)         # exact softmax
                c = jnp.dot(p, vo_all[lo:hi, :],
                            preferred_element_type=jnp.float32)    # (S, E)
                ctx_rows[b] = c if ctx_rows[b] is None else ctx_rows[b] + c
        attn = jnp.concatenate(ctx_rows, axis=0) + bo_ref[...]     # (B*S, E)

        # ---- residual + LayerNorm 1 (post-norm) ----
        y = _layernorm(h + attn, ln1g_ref[...], ln1b_ref[...], eps)

        # ---- feed-forward (Linear -> ReLU -> Linear) + residual + LN 2 ----
        hid = jnp.maximum(
            jnp.dot(y.astype(cdt), ff1w_ref[...],
                    preferred_element_type=jnp.float32) + ff1b_ref[...], 0.0)
        f = (jnp.dot(hid.astype(cdt), ff2w_ref[...],
                     preferred_element_type=jnp.float32) + ff2b_ref[...])
        h = _layernorm(y + f, ln2g_ref[...], ln2b_ref[...], eps)

    # ---- output head, fused: x[-1] in torch's seq-first layout is the last
    # token of every sequence.  Project the whole slab (one tiny push) and
    # store only the last row per batch element.
    out_all = (jnp.dot(h.astype(cdt), fcw_ref[...],
                       preferred_element_type=jnp.float32) + fcb_ref[...])  # (B*S, out)
    for b in range(batch):
        o_ref[b:b + 1, :] = out_all[(b + 1) * seq - 1:(b + 1) * seq, :]


def _flatten_kernel_args(params, x2d, num_heads, compute_dtype):
    """Build the fused kernel's flat argument list (weight prep runs in XLA)."""
    E = params["embed_w"].shape[1]
    Dh = E // num_heads
    args = [x2d,
            params["embed_w"].astype(compute_dtype),
            params["embed_b"]]
    for lp in params["layers"]:
        wqkv, bqkv = lp["qkv_w"], lp["qkv_b"]                # (E, 3E), (1, 3E)
        wq, wk, wv = wqkv[:, :E], wqkv[:, E:2 * E], wqkv[:, 2 * E:]
        bq, bk, bv = bqkv[:, :E], bqkv[:, E:2 * E], bqkv[:, 2 * E:]
        wo, bo = lp["out_w"], lp["out_b"]

        def to_heads_w(w):                                   # (E,E) -> (H,E,Dh)
            return w.reshape(E, num_heads, Dh).transpose(1, 0, 2)

        def to_heads_b(b):                                   # (1,E) -> (H,1,Dh)
            return b.reshape(num_heads, 1, Dh)

        # Fold the output projection into the per-head value projection:
        #   concat_h(P_h (x Wv_h + bv_h)) @ Wo == sum_h P_h (x Wvo_h + bvo_h)
        wvo = jnp.stack([wv[:, h * Dh:(h + 1) * Dh] @ wo[h * Dh:(h + 1) * Dh, :]
                         for h in range(num_heads)], axis=0)          # (H, E, E)
        bvo = jnp.stack([bv[:, h * Dh:(h + 1) * Dh] @ wo[h * Dh:(h + 1) * Dh, :]
                         for h in range(num_heads)], axis=0)          # (H, 1, E)

        args += [to_heads_w(wq).astype(compute_dtype), to_heads_b(bq),
                 to_heads_w(wk).astype(compute_dtype), to_heads_b(bk),
                 wvo.astype(compute_dtype), bvo,
                 bo,
                 lp["ln1_g"], lp["ln1_b"],
                 lp["ff1_w"].astype(compute_dtype), lp["ff1_b"],
                 lp["ff2_w"].astype(compute_dtype), lp["ff2_b"],
                 lp["ln2_g"], lp["ln2_b"]]
    args += [params["fc_w"].astype(compute_dtype), params["fc_b"]]
    return args


def attention_transformer_forward(params, x, *, input_dim, num_heads,
                                  compute_dtype=jnp.bfloat16, eps=1e-5):
    B = x.shape[0]
    x3 = x.reshape(B, -1, input_dim)                         # (B, S, in)
    S = x3.shape[1]
    E = params["embed_w"].shape[1]
    out_dim = params["fc_w"].shape[1]
    num_layers = len(params["layers"])
    assert E % num_heads == 0

    args = _flatten_kernel_args(
        params, x3.reshape(B * S, input_dim).astype(jnp.float32),
        num_heads, compute_dtype)

    kernel = partial(_forward_kernel, batch=B, seq=S, num_heads=num_heads,
                     num_layers=num_layers, eps=eps)
    return pl.pallas_call(
        kernel,
        out_shape=jax.ShapeDtypeStruct((B, out_dim), jnp.float32),
        # No grid: a single fused invocation with every array whole in VMEM.
        in_specs=[pl.BlockSpec(memory_space=pltpu.MemorySpace.VMEM)] * len(args),
        out_specs=pl.BlockSpec(memory_space=pltpu.MemorySpace.VMEM),
        compiler_params=pltpu.CompilerParams(
            vmem_limit_bytes=32 * 1024 * 1024),
    )(*args)


def init_params(key, input_dim, embed, num_heads, hidden, out_dim, num_layers):
    scale = 0.05

    def lin(k, fan_in, fan_out):
        kw, kb = jax.random.split(k)
        w = jax.random.normal(kw, (fan_in, fan_out), jnp.float32) * scale
        b = jax.random.normal(kb, (1, fan_out), jnp.float32) * scale
        return w, b

    keys = jax.random.split(key, 2 + num_layers)
    params = {}
    params["embed_w"], params["embed_b"] = lin(keys[0], input_dim, embed)
    params["fc_w"], params["fc_b"] = lin(keys[1], embed, out_dim)
    params["layers"] = []
    for i in range(num_layers):
        ks = jax.random.split(keys[2 + i], 4)
        lp = {}
        # packed [q | k | v] columns == transpose of torch in_proj_weight layout
        lp["qkv_w"], lp["qkv_b"] = lin(ks[0], embed, 3 * embed)
        lp["out_w"], lp["out_b"] = lin(ks[1], embed, embed)
        lp["ff1_w"], lp["ff1_b"] = lin(ks[2], embed, hidden)
        lp["ff2_w"], lp["ff2_b"] = lin(ks[3], hidden, embed)
        lp["ln1_g"] = jnp.ones((1, embed), jnp.float32)
        lp["ln1_b"] = jnp.zeros((1, embed), jnp.float32)
        lp["ln2_g"] = jnp.ones((1, embed), jnp.float32)
        lp["ln2_b"] = jnp.zeros((1, embed), jnp.float32)
        params["layers"].append(lp)
    return params


if __name__ == "__main__":
    input_dim, embed_size, num_heads = 16, 32, 4
    hidden_dim, output_dim, num_layers = 64, 8, 2
    batch, seq = 2, 8

    key = jax.random.PRNGKey(0)
    k_param, k_x = jax.random.split(key)
    params = init_params(k_param, input_dim, embed_size, num_heads,
                         hidden_dim, output_dim, num_layers)
    x = jax.random.normal(k_x, (batch, seq, input_dim), jnp.float32)

    fwd = jax.jit(partial(attention_transformer_forward,
                          input_dim=input_dim, num_heads=num_heads))
    out = jax.block_until_ready(fwd(params, x))
    assert out.shape == (batch, output_dim)
    print("KERNEL_OK")
</pallas_src>

<mosaic_0001>
module attributes {stable_mosaic.version = 11 : i64} {
  func.func @_forward_kernel(%arg0: memref<16x16xf32, #tpu.memory_space<vmem>>, %arg1: memref<16x32xbf16, #tpu.memory_space<vmem>>, %arg2: memref<1x32xf32, #tpu.memory_space<vmem>>, %arg3: memref<4x32x8xbf16, #tpu.memory_space<vmem>>, %arg4: memref<4x1x8xf32, #tpu.memory_space<vmem>>, %arg5: memref<4x32x8xbf16, #tpu.memory_space<vmem>>, %arg6: memref<4x1x8xf32, #tpu.memory_space<vmem>>, %arg7: memref<4x32x32xbf16, #tpu.memory_space<vmem>>, %arg8: memref<4x1x32xf32, #tpu.memory_space<vmem>>, %arg9: memref<1x32xf32, #tpu.memory_space<vmem>>, %arg10: memref<1x32xf32, #tpu.memory_space<vmem>>, %arg11: memref<1x32xf32, #tpu.memory_space<vmem>>, %arg12: memref<32x64xbf16, #tpu.memory_space<vmem>>, %arg13: memref<1x64xf32, #tpu.memory_space<vmem>>, %arg14: memref<64x32xbf16, #tpu.memory_space<vmem>>, %arg15: memref<1x32xf32, #tpu.memory_space<vmem>>, %arg16: memref<1x32xf32, #tpu.memory_space<vmem>>, %arg17: memref<1x32xf32, #tpu.memory_space<vmem>>, %arg18: memref<4x32x8xbf16, #tpu.memory_space<vmem>>, %arg19: memref<4x1x8xf32, #tpu.memory_space<vmem>>, %arg20: memref<4x32x8xbf16, #tpu.memory_space<vmem>>, %arg21: memref<4x1x8xf32, #tpu.memory_space<vmem>>, %arg22: memref<4x32x32xbf16, #tpu.memory_space<vmem>>, %arg23: memref<4x1x32xf32, #tpu.memory_space<vmem>>, %arg24: memref<1x32xf32, #tpu.memory_space<vmem>>, %arg25: memref<1x32xf32, #tpu.memory_space<vmem>>, %arg26: memref<1x32xf32, #tpu.memory_space<vmem>>, %arg27: memref<32x64xbf16, #tpu.memory_space<vmem>>, %arg28: memref<1x64xf32, #tpu.memory_space<vmem>>, %arg29: memref<64x32xbf16, #tpu.memory_space<vmem>>, %arg30: memref<1x32xf32, #tpu.memory_space<vmem>>, %arg31: memref<1x32xf32, #tpu.memory_space<vmem>>, %arg32: memref<1x32xf32, #tpu.memory_space<vmem>>, %arg33: memref<32x8xbf16, #tpu.memory_space<vmem>>, %arg34: memref<1x8xf32, #tpu.memory_space<vmem>>, %arg35: memref<2x8xf32, #tpu.memory_space<vmem>>) attributes {dimension_semantics = [], scalar_prefetch = 0 : i64, scratch_operands = 0 : i64, tpu.core_type = #tpu.core_type<tc>} {
    %c0 = arith.constant 0 : index
    %c0_0 = arith.constant 0 : index
    %0 = vector.load %arg0[%c0, %c0_0] : memref<16x16xf32, #tpu.memory_space<vmem>>, vector<16x16xf32>
    %1 = arith.truncf %0 : vector<16x16xf32> to vector<16x16xbf16>
    %c0_1 = arith.constant 0 : index
    %c0_2 = arith.constant 0 : index
    %2 = vector.load %arg1[%c0_1, %c0_2] : memref<16x32xbf16, #tpu.memory_space<vmem>>, vector<16x32xbf16>
    %cst = arith.constant dense<0.000000e+00> : vector<16x32xf32>
    %3 = tpu.matmul %1, %2, %cst {dimension_numbers = #tpu.dot_dimension_numbers<[1], [0], [0], [1], [0, 0, 1, 1], [], []>} : vector<16x16xbf16>, vector<16x32xbf16>, vector<16x32xf32> -> vector<16x32xf32>
    %c0_3 = arith.constant 0 : index
    %c0_4 = arith.constant 0 : index
    %4 = vector.load %arg2[%c0_3, %c0_4] : memref<1x32xf32, #tpu.memory_space<vmem>>, vector<1x32xf32>
    %5 = vector.broadcast %4 : vector<1x32xf32> to vector<16x32xf32>
    %6 = arith.addf %3, %5 : vector<16x32xf32>
    %7 = arith.truncf %6 : vector<16x32xf32> to vector<16x32xbf16>
    %c0_5 = arith.constant 0 : index
    %c0_6 = arith.constant 0 : index
    %c0_7 = arith.constant 0 : index
    %8 = vector.load %arg3[%c0_5, %c0_6, %c0_7] : memref<4x32x8xbf16, #tpu.memory_space<vmem>>, vector<1x32x8xbf16>
    %9 = vector.shape_cast %8 : vector<1x32x8xbf16> to vector<32x8xbf16>
    %cst_8 = arith.constant dense<0.000000e+00> : vector<16x8xf32>
    %10 = tpu.matmul %7, %9, %cst_8 {dimension_numbers = #tpu.dot_dimension_numbers<[1], [0], [0], [1], [0, 0, 1, 1], [], []>} : vector<16x32xbf16>, vector<32x8xbf16>, vector<16x8xf32> -> vector<16x8xf32>
    %c0_9 = arith.constant 0 : index
    %c0_10 = arith.constant 0 : index
    %c0_11 = arith.constant 0 : index
    %11 = vector.load %arg4[%c0_9, %c0_10, %c0_11] : memref<4x1x8xf32, #tpu.memory_space<vmem>>, vector<1x1x8xf32>
    %12 = vector.shape_cast %11 : vector<1x1x8xf32> to vector<1x8xf32>
    %13 = vector.broadcast %12 : vector<1x8xf32> to vector<16x8xf32>
    %14 = arith.addf %10, %13 : vector<16x8xf32>
    %c0_12 = arith.constant 0 : index
    %c0_13 = arith.constant 0 : index
    %c0_14 = arith.constant 0 : index
    %15 = vector.load %arg5[%c0_12, %c0_13, %c0_14] : memref<4x32x8xbf16, #tpu.memory_space<vmem>>, vector<1x32x8xbf16>
    %16 = vector.shape_cast %15 : vector<1x32x8xbf16> to vector<32x8xbf16>
    %cst_15 = arith.constant dense<0.000000e+00> : vector<16x8xf32>
    %17 = tpu.matmul %7, %16, %cst_15 {dimension_numbers = #tpu.dot_dimension_numbers<[1], [0], [0], [1], [0, 0, 1, 1], [], []>} : vector<16x32xbf16>, vector<32x8xbf16>, vector<16x8xf32> -> vector<16x8xf32>
    %c0_16 = arith.constant 0 : index
    %c0_17 = arith.constant 0 : index
    %c0_18 = arith.constant 0 : index
    %18 = vector.load %arg6[%c0_16, %c0_17, %c0_18] : memref<4x1x8xf32, #tpu.memory_space<vmem>>, vector<1x1x8xf32>
    %19 = vector.shape_cast %18 : vector<1x1x8xf32> to vector<1x8xf32>
    %20 = vector.broadcast %19 : vector<1x8xf32> to vector<16x8xf32>
    %21 = arith.addf %17, %20 : vector<16x8xf32>
    %c0_19 = arith.constant 0 : index
    %c0_20 = arith.constant 0 : index
    %c0_21 = arith.constant 0 : index
    %22 = vector.load %arg7[%c0_19, %c0_20, %c0_21] : memref<4x32x32xbf16, #tpu.memory_space<vmem>>, vector<1x32x32xbf16>
    %23 = vector.shape_cast %22 : vector<1x32x32xbf16> to vector<32x32xbf16>
    %cst_22 = arith.constant dense<0.000000e+00> : vector<16x32xf32>
    %24 = tpu.matmul %7, %23, %cst_22 {dimension_numbers = #tpu.dot_dimension_numbers<[1], [0], [0], [1], [0, 0, 1, 1], [], []>} : vector<16x32xbf16>, vector<32x32xbf16>, vector<16x32xf32> -> vector<16x32xf32>
    %c0_23 = arith.constant 0 : index
    %c0_24 = arith.constant 0 : index
    %c0_25 = arith.constant 0 : index
    %25 = vector.load %arg8[%c0_23, %c0_24, %c0_25] : memref<4x1x32xf32, #tpu.memory_space<vmem>>, vector<1x1x32xf32>
    %26 = vector.shape_cast %25 : vector<1x1x32xf32> to vector<1x32xf32>
    %27 = vector.broadcast %26 : vector<1x32xf32> to vector<16x32xf32>
    %28 = arith.addf %24, %27 : vector<16x32xf32>
    %29 = vector.extract_strided_slice %14 {offsets = [0, 0], sizes = [8, 8], strides = [1, 1]} : vector<16x8xf32> to vector<8x8xf32>
    %cst_26 = arith.constant 0.353553385 : f32
    %30 = vector.broadcast %cst_26 : f32 to vector<8x8xf32>
    %31 = arith.mulf %29, %30 : vector<8x8xf32>
    %32 = vector.extract_strided_slice %21 {offsets = [0, 0], sizes = [8, 8], strides = [1, 1]} : vector<16x8xf32> to vector<8x8xf32>
    %cst_27 = arith.constant dense<0.000000e+00> : vector<8x8xf32>
    %33 = tpu.matmul %31, %32, %cst_27 {dimension_numbers = #tpu.dot_dimension_numbers<[1], [1], [0], [0], [0, 0, 1, 0], [], []>} : vector<8x8xf32>, vector<8x8xf32>, vector<8x8xf32> -> vector<8x8xf32>
    %cst_28 = arith.constant dense<0xFF800000> : vector<8xf32>
    %34 = vector.multi_reduction <maximumf>, %33, %cst_28 [1] : vector<8x8xf32> to vector<8xf32>
    %35 = vector.shape_cast %34 : vector<8xf32> to vector<8x1xf32>
    %36 = vector.broadcast %35 : vector<8x1xf32> to vector<8x8xf32>
    %37 = arith.subf %33, %36 : vector<8x8xf32>
    %38 = math.exp %37 : vector<8x8xf32>
    %cst_29 = arith.constant dense<0.000000e+00> : vector<8xf32>
    %39 = vector.multi_reduction <add>, %38, %cst_29 [1] : vector<8x8xf32> to vector<8xf32>
    %40 = vector.shape_cast %39 : vector<8xf32> to vector<8x1xf32>
    %41 = vector.broadcast %40 : vector<8x1xf32> to vector<8x8xf32>
    %42 = arith.divf %38, %41 : vector<8x8xf32>
    %43 = vector.extract_strided_slice %28 {offsets = [0, 0], sizes = [8, 32], strides = [1, 1]} : vector<16x32xf32> to vector<8x32xf32>
    %cst_30 = arith.constant dense<0.000000e+00> : vector<8x32xf32>
    %44 = tpu.matmul %42, %43, %cst_30 {dimension_numbers = #tpu.dot_dimension_numbers<[1], [0], [0], [1], [0, 0, 1, 1], [], []>} : vector<8x8xf32>, vector<8x32xf32>, vector<8x32xf32> -> vector<8x32xf32>
    %45 = vector.extract_strided_slice %14 {offsets = [8, 0], sizes = [8, 8], strides = [1, 1]} : vector<16x8xf32> to vector<8x8xf32>
    %cst_31 = arith.constant 0.353553385 : f32
    %46 = vector.broadcast %cst_31 : f32 to vector<8x8xf32>
    %47 = arith.mulf %45, %46 : vector<8x8xf32>
    %48 = vector.extract_strided_slice %21 {offsets = [8, 0], sizes = [8, 8], strides = [1, 1]} : vector<16x8xf32> to vector<8x8xf32>
    %cst_32 = arith.constant dense<0.000000e+00> : vector<8x8xf32>
    %49 = tpu.matmul %47, %48, %cst_32 {dimension_numbers = #tpu.dot_dimension_numbers<[1], [1], [0], [0], [0, 0, 1, 0], [], []>} : vector<8x8xf32>, vector<8x8xf32>, vector<8x8xf32> -> vector<8x8xf32>
    %cst_33 = arith.constant dense<0xFF800000> : vector<8xf32>
    %50 = vector.multi_reduction <maximumf>, %49, %cst_33 [1] : vector<8x8xf32> to vector<8xf32>
    %51 = vector.shape_cast %50 : vector<8xf32> to vector<8x1xf32>
    %52 = vector.broadcast %51 : vector<8x1xf32> to vector<8x8xf32>
    %53 = arith.subf %49, %52 : vector<8x8xf32>
    %54 = math.exp %53 : vector<8x8xf32>
    %cst_34 = arith.constant dense<0.000000e+00> : vector<8xf32>
    %55 = vector.multi_reduction <add>, %54, %cst_34 [1] : vector<8x8xf32> to vector<8xf32>
    %56 = vector.shape_cast %55 : vector<8xf32> to vector<8x1xf32>
    %57 = vector.broadcast %56 : vector<8x1xf32> to vector<8x8xf32>
    %58 = arith.divf %54, %57 : vector<8x8xf32>
    %59 = vector.extract_strided_slice %28 {offsets = [8, 0], sizes = [8, 32], strides = [1, 1]} : vector<16x32xf32> to vector<8x32xf32>
    %cst_35 = arith.constant dense<0.000000e+00> : vector<8x32xf32>
    %60 = tpu.matmul %58, %59, %cst_35 {dimension_numbers = #tpu.dot_dimension_numbers<[1], [0], [0], [1], [0, 0, 1, 1], [], []>} : vector<8x8xf32>, vector<8x32xf32>, vector<8x32xf32> -> vector<8x32xf32>
    %c1 = arith.constant 1 : index
    %c0_36 = arith.constant 0 : index
    %c0_37 = arith.constant 0 : index
    %61 = vector.load %arg3[%c1, %c0_36, %c0_37] : memref<4x32x8xbf16, #tpu.memory_space<vmem>>, vector<1x32x8xbf16>
    %62 = vector.shape_cast %61 : vector<1x32x8xbf16> to vector<32x8xbf16>
    %cst_38 = arith.constant dense<0.000000e+00> : vector<16x8xf32>
    %63 = tpu.matmul %7, %62, %cst_38 {dimension_numbers = #tpu.dot_dimension_numbers<[1], [0], [0], [1], [0, 0, 1, 1], [], []>} : vector<16x32xbf16>, vector<32x8xbf16>, vector<16x8xf32> -> vector<16x8xf32>
    %c1_39 = arith.constant 1 : index
    %c0_40 = arith.constant 0 : index
    %c0_41 = arith.constant 0 : index
    %64 = vector.load %arg4[%c1_39, %c0_40, %c0_41] : memref<4x1x8xf32, #tpu.memory_space<vmem>>, vector<1x1x8xf32>
    %65 = vector.shape_cast %64 : vector<1x1x8xf32> to vector<1x8xf32>
    %66 = vector.broadcast %65 : vector<1x8xf32> to vector<16x8xf32>
    %67 = arith.addf %63, %66 : vector<16x8xf32>
    %c1_42 = arith.constant 1 : index
    %c0_43 = arith.constant 0 : index
    %c0_44 = arith.constant 0 : index
    %68 = vector.load %arg5[%c1_42, %c0_43, %c0_44] : memref<4x32x8xbf16, #tpu.memory_space<vmem>>, vector<1x32x8xbf16>
    %69 = vector.shape_cast %68 : vector<1x32x8xbf16> to vector<32x8xbf16>
    %cst_45 = arith.constant dense<0.000000e+00> : vector<16x8xf32>
    %70 = tpu.matmul %7, %69, %cst_45 {dimension_numbers = #tpu.dot_dimension_numbers<[1], [0], [0], [1], [0, 0, 1, 1], [], []>} : vector<16x32xbf16>, vector<32x8xbf16>, vector<16x8xf32> -> vector<16x8xf32>
    %c1_46 = arith.constant 1 : index
    %c0_47 = arith.constant 0 : index
    %c0_48 = arith.constant 0 : index
    %71 = vector.load %arg6[%c1_46, %c0_47, %c0_48] : memref<4x1x8xf32, #tpu.memory_space<vmem>>, vector<1x1x8xf32>
    %72 = vector.shape_cast %71 : vector<1x1x8xf32> to vector<1x8xf32>
    %73 = vector.broadcast %72 : vector<1x8xf32> to vector<16x8xf32>
    %74 = arith.addf %70, %73 : vector<16x8xf32>
    %c1_49 = arith.constant 1 : index
    %c0_50 = arith.constant 0 : index
    %c0_51 = arith.constant 0 : index
    %75 = vector.load %arg7[%c1_49, %c0_50, %c0_51] : memref<4x32x32xbf16, #tpu.memory_space<vmem>>, vector<1x32x32xbf16>
    %76 = vector.shape_cast %75 : vector<1x32x32xbf16> to vector<32x32xbf16>
    %cst_52 = arith.constant dense<0.000000e+00> : vector<16x32xf32>
    %77 = tpu.matmul %7, %76, %cst_52 {dimension_numbers = #tpu.dot_dimension_numbers<[1], [0], [0], [1], [0, 0, 1, 1], [], []>} : vector<16x32xbf16>, vector<32x32xbf16>, vector<16x32xf32> -> vector<16x32xf32>
    %c1_53 = arith.constant 1 : index
    %c0_54 = arith.constant 0 : index
    %c0_55 = arith.constant 0 : index
    %78 = vector.load %arg8[%c1_53, %c0_54, %c0_55] : memref<4x1x32xf32, #tpu.memory_space<vmem>>, vector<1x1x32xf32>
    %79 = vector.shape_cast %78 : vector<1x1x32xf32> to vector<1x32xf32>
    %80 = vector.broadcast %79 : vector<1x32xf32> to vector<16x32xf32>
    %81 = arith.addf %77, %80 : vector<16x32xf32>
    %82 = vector.extract_strided_slice %67 {offsets = [0, 0], sizes = [8, 8], strides = [1, 1]} : vector<16x8xf32> to vector<8x8xf32>
    %cst_56 = arith.constant 0.353553385 : f32
    %83 = vector.broadcast %cst_56 : f32 to vector<8x8xf32>
    %84 = arith.mulf %82, %83 : vector<8x8xf32>
    %85 = vector.extract_strided_slice %74 {offsets = [0, 0], sizes = [8, 8], strides = [1, 1]} : vector<16x8xf32> to vector<8x8xf32>
    %cst_57 = arith.constant dense<0.000000e+00> : vector<8x8xf32>
    %86 = tpu.matmul %84, %85, %cst_57 {dimension_numbers = #tpu.dot_dimension_numbers<[1], [1], [0], [0], [0, 0, 1, 0], [], []>} : vector<8x8xf32>, vector<8x8xf32>, vector<8x8xf32> -> vector<8x8xf32>
    %cst_58 = arith.constant dense<0xFF800000> : vector<8xf32>
    %87 = vector.multi_reduction <maximumf>, %86, %cst_58 [1] : vector<8x8xf32> to vector<8xf32>
    %88 = vector.shape_cast %87 : vector<8xf32> to vector<8x1xf32>
    %89 = vector.broadcast %88 : vector<8x1xf32> to vector<8x8xf32>
    %90 = arith.subf %86, %89 : vector<8x8xf32>
    %91 = math.exp %90 : vector<8x8xf32>
    %cst_59 = arith.constant dense<0.000000e+00> : vector<8xf32>
    %92 = vector.multi_reduction <add>, %91, %cst_59 [1] : vector<8x8xf32> to vector<8xf32>
    %93 = vector.shape_cast %92 : vector<8xf32> to vector<8x1xf32>
    %94 = vector.broadcast %93 : vector<8x1xf32> to vector<8x8xf32>
    %95 = arith.divf %91, %94 : vector<8x8xf32>
    %96 = vector.extract_strided_slice %81 {offsets = [0, 0], sizes = [8, 32], strides = [1, 1]} : vector<16x32xf32> to vector<8x32xf32>
    %cst_60 = arith.constant dense<0.000000e+00> : vector<8x32xf32>
    %97 = tpu.matmul %95, %96, %cst_60 {dimension_numbers = #tpu.dot_dimension_numbers<[1], [0], [0], [1], [0, 0, 1, 1], [], []>} : vector<8x8xf32>, vector<8x32xf32>, vector<8x32xf32> -> vector<8x32xf32>
    %98 = arith.addf %44, %97 : vector<8x32xf32>
    %99 = vector.extract_strided_slice %67 {offsets = [8, 0], sizes = [8, 8], strides = [1, 1]} : vector<16x8xf32> to vector<8x8xf32>
    %cst_61 = arith.constant 0.353553385 : f32
    %100 = vector.broadcast %cst_61 : f32 to vector<8x8xf32>
    %101 = arith.mulf %99, %100 : vector<8x8xf32>
    %102 = vector.extract_strided_slice %74 {offsets = [8, 0], sizes = [8, 8], strides = [1, 1]} : vector<16x8xf32> to vector<8x8xf32>
    %cst_62 = arith.constant dense<0.000000e+00> : vector<8x8xf32>
    %103 = tpu.matmul %101, %102, %cst_62 {dimension_numbers = #tpu.dot_dimension_numbers<[1], [1], [0], [0], [0, 0, 1, 0], [], []>} : vector<8x8xf32>, vector<8x8xf32>, vector<8x8xf32> -> vector<8x8xf32>
    %cst_63 = arith.constant dense<0xFF800000> : vector<8xf32>
    %104 = vector.multi_reduction <maximumf>, %103, %cst_63 [1] : vector<8x8xf32> to vector<8xf32>
    %105 = vector.shape_cast %104 : vector<8xf32> to vector<8x1xf32>
    %106 = vector.broadcast %105 : vector<8x1xf32> to vector<8x8xf32>
    %107 = arith.subf %103, %106 : vector<8x8xf32>
    %108 = math.exp %107 : vector<8x8xf32>
    %cst_64 = arith.constant dense<0.000000e+00> : vector<8xf32>
    %109 = vector.multi_reduction <add>, %108, %cst_64 [1] : vector<8x8xf32> to vector<8xf32>
    %110 = vector.shape_cast %109 : vector<8xf32> to vector<8x1xf32>
    %111 = vector.broadcast %110 : vector<8x1xf32> to vector<8x8xf32>
    %112 = arith.divf %108, %111 : vector<8x8xf32>
    %113 = vector.extract_strided_slice %81 {offsets = [8, 0], sizes = [8, 32], strides = [1, 1]} : vector<16x32xf32> to vector<8x32xf32>
    %cst_65 = arith.constant dense<0.000000e+00> : vector<8x32xf32>
    %114 = tpu.matmul %112, %113, %cst_65 {dimension_numbers = #tpu.dot_dimension_numbers<[1], [0], [0], [1], [0, 0, 1, 1], [], []>} : vector<8x8xf32>, vector<8x32xf32>, vector<8x32xf32> -> vector<8x32xf32>
    %115 = arith.addf %60, %114 : vector<8x32xf32>
    %c2 = arith.constant 2 : index
    %c0_66 = arith.constant 0 : index
    %c0_67 = arith.constant 0 : index
    %116 = vector.load %arg3[%c2, %c0_66, %c0_67] : memref<4x32x8xbf16, #tpu.memory_space<vmem>>, vector<1x32x8xbf16>
    %117 = vector.shape_cast %116 : vector<1x32x8xbf16> to vector<32x8xbf16>
    %cst_68 = arith.constant dense<0.000000e+00> : vector<16x8xf32>
    %118 = tpu.matmul %7, %117, %cst_68 {dimension_numbers = #tpu.dot_dimension_numbers<[1], [0], [0], [1], [0, 0, 1, 1], [], []>} : vector<16x32xbf16>, vector<32x8xbf16>, vector<16x8xf32> -> vector<16x8xf32>
    %c2_69 = arith.constant 2 : index
    %c0_70 = arith.constant 0 : index
    %c0_71 = arith.constant 0 : index
    %119 = vector.load %arg4[%c2_69, %c0_70, %c0_71] : memref<4x1x8xf32, #tpu.memory_space<vmem>>, vector<1x1x8xf32>
    %120 = vector.shape_cast %119 : vector<1x1x8xf32> to vector<1x8xf32>
    %121 = vector.broadcast %120 : vector<1x8xf32> to vector<16x8xf32>
    %122 = arith.addf %118, %121 : vector<16x8xf32>
    %c2_72 = arith.constant 2 : index
    %c0_73 = arith.constant 0 : index
    %c0_74 = arith.constant 0 : index
    %123 = vector.load %arg5[%c2_72, %c0_73, %c0_74] : memref<4x32x8xbf16, #tpu.memory_space<vmem>>, vector<1x32x8xbf16>
    %124 = vector.shape_cast %123 : vector<1x32x8xbf16> to vector<32x8xbf16>
    %cst_75 = arith.constant dense<0.000000e+00> : vector<16x8xf32>
    %125 = tpu.matmul %7, %124, %cst_75 {dimension_numbers = #tpu.dot_dimension_numbers<[1], [0], [0], [1], [0, 0, 1, 1], [], []>} : vector<16x32xbf16>, vector<32x8xbf16>, vector<16x8xf32> -> vector<16x8xf32>
    %c2_76 = arith.constant 2 : index
    %c0_77 = arith.constant 0 : index
    %c0_78 = arith.constant 0 : index
    %126 = vector.load %arg6[%c2_76, %c0_77, %c0_78] : memref<4x1x8xf32, #tpu.memory_space<vmem>>, vector<1x1x8xf32>
    %127 = vector.shape_cast %126 : vector<1x1x8xf32> to vector<1x8xf32>
    %128 = vector.broadcast %127 : vector<1x8xf32> to vector<16x8xf32>
    %129 = arith.addf %125, %128 : vector<16x8xf32>
    %c2_79 = arith.constant 2 : index
    %c0_80 = arith.constant 0 : index
    %c0_81 = arith.constant 0 : index
    %130 = vector.load %arg7[%c2_79, %c0_80, %c0_81] : memref<4x32x32xbf16, #tpu.memory_space<vmem>>, vector<1x32x32xbf16>
    %131 = vector.shape_cast %130 : vector<1x32x32xbf16> to vector<32x32xbf16>
    %cst_82 = arith.constant dense<0.000000e+00> : vector<16x32xf32>
    %132 = tpu.matmul %7, %131, %cst_82 {dimension_numbers = #tpu.dot_dimension_numbers<[1], [0], [0], [1], [0, 0, 1, 1], [], []>} : vector<16x32xbf16>, vector<32x32xbf16>, vector<16x32xf32> -> vector<16x32xf32>
    %c2_83 = arith.constant 2 : index
    %c0_84 = arith.constant 0 : index
    %c0_85 = arith.constant 0 : index
    %133 = vector.load %arg8[%c2_83, %c0_84, %c0_85] : memref<4x1x32xf32, #tpu.memory_space<vmem>>, vector<1x1x32xf32>
    %134 = vector.shape_cast %133 : vector<1x1x32xf32> to vector<1x32xf32>
    %135 = vector.broadcast %134 : vector<1x32xf32> to vector<16x32xf32>
    %136 = arith.addf %132, %135 : vector<16x32xf32>
    %137 = vector.extract_strided_slice %122 {offsets = [0, 0], sizes = [8, 8], strides = [1, 1]} : vector<16x8xf32> to vector<8x8xf32>
    %cst_86 = arith.constant 0.353553385 : f32
    %138 = vector.broadcast %cst_86 : f32 to vector<8x8xf32>
    %139 = arith.mulf %137, %138 : vector<8x8xf32>
    %140 = vector.extract_strided_slice %129 {offsets = [0, 0], sizes = [8, 8], strides = [1, 1]} : vector<16x8xf32> to vector<8x8xf32>
    %cst_87 = arith.constant dense<0.000000e+00> : vector<8x8xf32>
    %141 = tpu.matmul %139, %140, %cst_87 {dimension_numbers = #tpu.dot_dimension_numbers<[1], [1], [0], [0], [0, 0, 1, 0], [], []>} : vector<8x8xf32>, vector<8x8xf32>, vector<8x8xf32> -> vector<8x8xf32>
    %cst_88 = arith.constant dense<0xFF800000> : vector<8xf32>
    %142 = vector.multi_reduction <maximumf>, %141, %cst_88 [1] : vector<8x8xf32> to vector<8xf32>
    %143 = vector.shape_cast %142 : vector<8xf32> to vector<8x1xf32>
    %144 = vector.broadcast %143 : vector<8x1xf32> to vector<8x8xf32>
    %145 = arith.subf %141, %144 : vector<8x8xf32>
    %146 = math.exp %145 : vector<8x8xf32>
    %cst_89 = arith.constant dense<0.000000e+00> : vector<8xf32>
    %147 = vector.multi_reduction <add>, %146, %cst_89 [1] : vector<8x8xf32> to vector<8xf32>
    %148 = vector.shape_cast %147 : vector<8xf32> to vector<8x1xf32>
    %149 = vector.broadcast %148 : vector<8x1xf32> to vector<8x8xf32>
    %150 = arith.divf %146, %149 : vector<8x8xf32>
    %151 = vector.extract_strided_slice %136 {offsets = [0, 0], sizes = [8, 32], strides = [1, 1]} : vector<16x32xf32> to vector<8x32xf32>
    %cst_90 = arith.constant dense<0.000000e+00> : vector<8x32xf32>
    %152 = tpu.matmul %150, %151, %cst_90 {dimension_numbers = #tpu.dot_dimension_numbers<[1], [0], [0], [1], [0, 0, 1, 1], [], []>} : vector<8x8xf32>, vector<8x32xf32>, vector<8x32xf32> -> vector<8x32xf32>
    %153 = arith.addf %98, %152 : vector<8x32xf32>
    %154 = vector.extract_strided_slice %122 {offsets = [8, 0], sizes = [8, 8], strides = [1, 1]} : vector<16x8xf32> to vector<8x8xf32>
    %cst_91 = arith.constant 0.353553385 : f32
    %155 = vector.broadcast %cst_91 : f32 to vector<8x8xf32>
    %156 = arith.mulf %154, %155 : vector<8x8xf32>
    %157 = vector.extract_strided_slice %129 {offsets = [8, 0], sizes = [8, 8], strides = [1, 1]} : vector<16x8xf32> to vector<8x8xf32>
    %cst_92 = arith.constant dense<0.000000e+00> : vector<8x8xf32>
    %158 = tpu.matmul %156, %157, %cst_92 {dimension_numbers = #tpu.dot_dimension_numbers<[1], [1], [0], [0], [0, 0, 1, 0], [], []>} : vector<8x8xf32>, vector<8x8xf32>, vector<8x8xf32> -> vector<8x8xf32>
    %cst_93 = arith.constant dense<0xFF800000> : vector<8xf32>
    %159 = vector.multi_reduction <maximumf>, %158, %cst_93 [1] : vector<8x8xf32> to vector<8xf32>
    %160 = vector.shape_cast %159 : vector<8xf32> to vector<8x1xf32>
    %161 = vector.broadcast %160 : vector<8x1xf32> to vector<8x8xf32>
    %162 = arith.subf %158, %161 : vector<8x8xf32>
    %163 = math.exp %162 : vector<8x8xf32>
    %cst_94 = arith.constant dense<0.000000e+00> : vector<8xf32>
    %164 = vector.multi_reduction <add>, %163, %cst_94 [1] : vector<8x8xf32> to vector<8xf32>
    %165 = vector.shape_cast %164 : vector<8xf32> to vector<8x1xf32>
    %166 = vector.broadcast %165 : vector<8x1xf32> to vector<8x8xf32>
    %167 = arith.divf %163, %166 : vector<8x8xf32>
    %168 = vector.extract_strided_slice %136 {offsets = [8, 0], sizes = [8, 32], strides = [1, 1]} : vector<16x32xf32> to vector<8x32xf32>
    %cst_95 = arith.constant dense<0.000000e+00> : vector<8x32xf32>
    %169 = tpu.matmul %167, %168, %cst_95 {dimension_numbers = #tpu.dot_dimension_numbers<[1], [0], [0], [1], [0, 0, 1, 1], [], []>} : vector<8x8xf32>, vector<8x32xf32>, vector<8x32xf32> -> vector<8x32xf32>
    %170 = arith.addf %115, %169 : vector<8x32xf32>
    %c3 = arith.constant 3 : index
    %c0_96 = arith.constant 0 : index
    %c0_97 = arith.constant 0 : index
    %171 = vector.load %arg3[%c3, %c0_96, %c0_97] : memref<4x32x8xbf16, #tpu.memory_space<vmem>>, vector<1x32x8xbf16>
    %172 = vector.shape_cast %171 : vector<1x32x8xbf16> to vector<32x8xbf16>
    %cst_98 = arith.constant dense<0.000000e+00> : vector<16x8xf32>
    %173 = tpu.matmul %7, %172, %cst_98 {dimension_numbers = #tpu.dot_dimension_numbers<[1], [0], [0], [1], [0, 0, 1, 1], [], []>} : vector<16x32xbf16>, vector<32x8xbf16>, vector<16x8xf32> -> vector<16x8xf32>
    %c3_99 = arith.constant 3 : index
    %c0_100 = arith.constant 0 : index
    %c0_101 = arith.constant 0 : index
    %174 = vector.load %arg4[%c3_99, %c0_100, %c0_101] : memref<4x1x8xf32, #tpu.memory_space<vmem>>, vector<1x1x8xf32>
    %175 = vector.shape_cast %174 : vector<1x1x8xf32> to vector<1x8xf32>
    %176 = vector.broadcast %175 : vector<1x8xf32> to vector<16x8xf32>
    %177 = arith.addf %173, %176 : vector<16x8xf32>
    %c3_102 = arith.constant 3 : index
    %c0_103 = arith.constant 0 : index
    %c0_104 = arith.constant 0 : index
    %178 = vector.load %arg5[%c3_102, %c0_103, %c0_104] : memref<4x32x8xbf16, #tpu.memory_space<vmem>>, vector<1x32x8xbf16>
    %179 = vector.shape_cast %178 : vector<1x32x8xbf16> to vector<32x8xbf16>
    %cst_105 = arith.constant dense<0.000000e+00> : vector<16x8xf32>
    %180 = tpu.matmul %7, %179, %cst_105 {dimension_numbers = #tpu.dot_dimension_numbers<[1], [0], [0], [1], [0, 0, 1, 1], [], []>} : vector<16x32xbf16>, vector<32x8xbf16>, vector<16x8xf32> -> vector<16x8xf32>
    %c3_106 = arith.constant 3 : index
    %c0_107 = arith.constant 0 : index
    %c0_108 = arith.constant 0 : index
    %181 = vector.load %arg6[%c3_106, %c0_107, %c0_108] : memref<4x1x8xf32, #tpu.memory_space<vmem>>, vector<1x1x8xf32>
    %182 = vector.shape_cast %181 : vector<1x1x8xf32> to vector<1x8xf32>
    %183 = vector.broadcast %182 : vector<1x8xf32> to vector<16x8xf32>
    %184 = arith.addf %180, %183 : vector<16x8xf32>
    %c3_109 = arith.constant 3 : index
    %c0_110 = arith.constant 0 : index
    %c0_111 = arith.constant 0 : index
    %185 = vector.load %arg7[%c3_109, %c0_110, %c0_111] : memref<4x32x32xbf16, #tpu.memory_space<vmem>>, vector<1x32x32xbf16>
    %186 = vector.shape_cast %185 : vector<1x32x32xbf16> to vector<32x32xbf16>
    %cst_112 = arith.constant dense<0.000000e+00> : vector<16x32xf32>
    %187 = tpu.matmul %7, %186, %cst_112 {dimension_numbers = #tpu.dot_dimension_numbers<[1], [0], [0], [1], [0, 0, 1, 1], [], []>} : vector<16x32xbf16>, vector<32x32xbf16>, vector<16x32xf32> -> vector<16x32xf32>
    %c3_113 = arith.constant 3 : index
    %c0_114 = arith.constant 0 : index
    %c0_115 = arith.constant 0 : index
    %188 = vector.load %arg8[%c3_113, %c0_114, %c0_115] : memref<4x1x32xf32, #tpu.memory_space<vmem>>, vector<1x1x32xf32>
    %189 = vector.shape_cast %188 : vector<1x1x32xf32> to vector<1x32xf32>
    %190 = vector.broadcast %189 : vector<1x32xf32> to vector<16x32xf32>
    %191 = arith.addf %187, %190 : vector<16x32xf32>
    %192 = vector.extract_strided_slice %177 {offsets = [0, 0], sizes = [8, 8], strides = [1, 1]} : vector<16x8xf32> to vector<8x8xf32>
    %cst_116 = arith.constant 0.353553385 : f32
    %193 = vector.broadcast %cst_116 : f32 to vector<8x8xf32>
    %194 = arith.mulf %192, %193 : vector<8x8xf32>
    %195 = vector.extract_strided_slice %184 {offsets = [0, 0], sizes = [8, 8], strides = [1, 1]} : vector<16x8xf32> to vector<8x8xf32>
    %cst_117 = arith.constant dense<0.000000e+00> : vector<8x8xf32>
    %196 = tpu.matmul %194, %195, %cst_117 {dimension_numbers = #tpu.dot_dimension_numbers<[1], [1], [0], [0], [0, 0, 1, 0], [], []>} : vector<8x8xf32>, vector<8x8xf32>, vector<8x8xf32> -> vector<8x8xf32>
    %cst_118 = arith.constant dense<0xFF800000> : vector<8xf32>
    %197 = vector.multi_reduction <maximumf>, %196, %cst_118 [1] : vector<8x8xf32> to vector<8xf32>
    %198 = vector.shape_cast %197 : vector<8xf32> to vector<8x1xf32>
    %199 = vector.broadcast %198 : vector<8x1xf32> to vector<8x8xf32>
    %200 = arith.subf %196, %199 : vector<8x8xf32>
    %201 = math.exp %200 : vector<8x8xf32>
    %cst_119 = arith.constant dense<0.000000e+00> : vector<8xf32>
    %202 = vector.multi_reduction <add>, %201, %cst_119 [1] : vector<8x8xf32> to vector<8xf32>
    %203 = vector.shape_cast %202 : vector<8xf32> to vector<8x1xf32>
    %204 = vector.broadcast %203 : vector<8x1xf32> to vector<8x8xf32>
    %205 = arith.divf %201, %204 : vector<8x8xf32>
    %206 = vector.extract_strided_slice %191 {offsets = [0, 0], sizes = [8, 32], strides = [1, 1]} : vector<16x32xf32> to vector<8x32xf32>
    %cst_120 = arith.constant dense<0.000000e+00> : vector<8x32xf32>
    %207 = tpu.matmul %205, %206, %cst_120 {dimension_numbers = #tpu.dot_dimension_numbers<[1], [0], [0], [1], [0, 0, 1, 1], [], []>} : vector<8x8xf32>, vector<8x32xf32>, vector<8x32xf32> -> vector<8x32xf32>
    %208 = arith.addf %153, %207 : vector<8x32xf32>
    %209 = vector.extract_strided_slice %177 {offsets = [8, 0], sizes = [8, 8], strides = [1, 1]} : vector<16x8xf32> to vector<8x8xf32>
    %cst_121 = arith.constant 0.353553385 : f32
    %210 = vector.broadcast %cst_121 : f32 to vector<8x8xf32>
    %211 = arith.mulf %209, %210 : vector<8x8xf32>
    %212 = vector.extract_strided_slice %184 {offsets = [8, 0], sizes = [8, 8], strides = [1, 1]} : vector<16x8xf32> to vector<8x8xf32>
    %cst_122 = arith.constant dense<0.000000e+00> : vector<8x8xf32>
    %213 = tpu.matmul %211, %212, %cst_122 {dimension_numbers = #tpu.dot_dimension_numbers<[1], [1], [0], [0], [0, 0, 1, 0], [], []>} : vector<8x8xf32>, vector<8x8xf32>, vector<8x8xf32> -> vector<8x8xf32>
    %cst_123 = arith.constant dense<0xFF800000> : vector<8xf32>
    %214 = vector.multi_reduction <maximumf>, %213, %cst_123 [1] : vector<8x8xf32> to vector<8xf32>
    %215 = vector.shape_cast %214 : vector<8xf32> to vector<8x1xf32>
    %216 = vector.broadcast %215 : vector<8x1xf32> to vector<8x8xf32>
    %217 = arith.subf %213, %216 : vector<8x8xf32>
    %218 = math.exp %217 : vector<8x8xf32>
    %cst_124 = arith.constant dense<0.000000e+00> : vector<8xf32>
    %219 = vector.multi_reduction <add>, %218, %cst_124 [1] : vector<8x8xf32> to vector<8xf32>
    %220 = vector.shape_cast %219 : vector<8xf32> to vector<8x1xf32>
    %221 = vector.broadcast %220 : vector<8x1xf32> to vector<8x8xf32>
    %222 = arith.divf %218, %221 : vector<8x8xf32>
    %223 = vector.extract_strided_slice %191 {offsets = [8, 0], sizes = [8, 32], strides = [1, 1]} : vector<16x32xf32> to vector<8x32xf32>
    %cst_125 = arith.constant dense<0.000000e+00> : vector<8x32xf32>
    %224 = tpu.matmul %222, %223, %cst_125 {dimension_numbers = #tpu.dot_dimension_numbers<[1], [0], [0], [1], [0, 0, 1, 1], [], []>} : vector<8x8xf32>, vector<8x32xf32>, vector<8x32xf32> -> vector<8x32xf32>
    %225 = arith.addf %170, %224 : vector<8x32xf32>
    %226 = tpu.concatenate %208, %225 in 0 : vector<8x32xf32>, vector<8x32xf32> -> vector<16x32xf32>
    %c0_126 = arith.constant 0 : index
    %c0_127 = arith.constant 0 : index
    %227 = vector.load %arg9[%c0_126, %c0_127] : memref<1x32xf32, #tpu.memory_space<vmem>>, vector<1x32xf32>
    %228 = vector.broadcast %227 : vector<1x32xf32> to vector<16x32xf32>
    %229 = arith.addf %226, %228 : vector<16x32xf32>
    %230 = arith.addf %6, %229 : vector<16x32xf32>
    %c0_128 = arith.constant 0 : index
    %c0_129 = arith.constant 0 : index
    %231 = vector.load %arg10[%c0_128, %c0_129] : memref<1x32xf32, #tpu.memory_space<vmem>>, vector<1x32xf32>
    %c0_130 = arith.constant 0 : index
    %c0_131 = arith.constant 0 : index
    %232 = vector.load %arg11[%c0_130, %c0_131] : memref<1x32xf32, #tpu.memory_space<vmem>>, vector<1x32xf32>
    %cst_132 = arith.constant dense<0.000000e+00> : vector<16xf32>
    %233 = vector.multi_reduction <add>, %230, %cst_132 [1] : vector<16x32xf32> to vector<16xf32>
    %234 = vector.shape_cast %233 : vector<16xf32> to vector<16x1xf32>
    %cst_133 = arith.constant 3.200000e+01 : f32
    %235 = vector.broadcast %cst_133 : f32 to vector<16x1xf32>
    %236 = arith.divf %234, %235 : vector<16x1xf32>
    %237 = vector.broadcast %236 : vector<16x1xf32> to vector<16x32xf32>
    %238 = arith.subf %230, %237 : vector<16x32xf32>
    %239 = arith.mulf %238, %238 : vector<16x32xf32>
    %cst_134 = arith.constant dense<0.000000e+00> : vector<16xf32>
    %240 = vector.multi_reduction <add>, %239, %cst_134 [1] : vector<16x32xf32> to vector<16xf32>
    %241 = vector.shape_cast %240 : vector<16xf32> to vector<16x1xf32>
    %cst_135 = arith.constant 3.200000e+01 : f32
    %242 = vector.broadcast %cst_135 : f32 to vector<16x1xf32>
    %243 = arith.divf %241, %242 : vector<16x1xf32>
    %cst_136 = arith.constant 9.99999974E-6 : f32
    %244 = vector.broadcast %cst_136 : f32 to vector<16x1xf32>
    %245 = arith.addf %243, %244 : vector<16x1xf32>
    %246 = math.rsqrt %245 : vector<16x1xf32>
    %247 = vector.broadcast %246 : vector<16x1xf32> to vector<16x32xf32>
    %248 = arith.mulf %238, %247 : vector<16x32xf32>
    %249 = vector.broadcast %231 : vector<1x32xf32> to vector<16x32xf32>
    %250 = arith.mulf %248, %249 : vector<16x32xf32>
    %251 = vector.broadcast %232 : vector<1x32xf32> to vector<16x32xf32>
    %252 = arith.addf %250, %251 : vector<16x32xf32>
    %253 = arith.truncf %252 : vector<16x32xf32> to vector<16x32xbf16>
    %c0_137 = arith.constant 0 : index
    %c0_138 = arith.constant 0 : index
    %254 = vector.load %arg12[%c0_137, %c0_138] : memref<32x64xbf16, #tpu.memory_space<vmem>>, vector<32x64xbf16>
    %cst_139 = arith.constant dense<0.000000e+00> : vector<16x64xf32>
    %255 = tpu.matmul %253, %254, %cst_139 {dimension_numbers = #tpu.dot_dimension_numbers<[1], [0], [0], [1], [0, 0, 1, 1], [], []>} : vector<16x32xbf16>, vector<32x64xbf16>, vector<16x64xf32> -> vector<16x64xf32>
    %c0_140 = arith.constant 0 : index
    %c0_141 = arith.constant 0 : index
    %256 = vector.load %arg13[%c0_140, %c0_141] : memref<1x64xf32, #tpu.memory_space<vmem>>, vector<1x64xf32>
    %257 = vector.broadcast %256 : vector<1x64xf32> to vector<16x64xf32>
    %258 = arith.addf %255, %257 : vector<16x64xf32>
    %cst_142 = arith.constant 0.000000e+00 : f32
    %259 = vector.broadcast %cst_142 : f32 to vector<16x64xf32>
    %260 = arith.maximumf %258, %259 : vector<16x64xf32>
    %261 = arith.truncf %260 : vector<16x64xf32> to vector<16x64xbf16>
    %c0_143 = arith.constant 0 : index
    %c0_144 = arith.constant 0 : index
    %262 = vector.load %arg14[%c0_143, %c0_144] : memref<64x32xbf16, #tpu.memory_space<vmem>>, vector<64x32xbf16>
    %cst_145 = arith.constant dense<0.000000e+00> : vector<16x32xf32>
    %263 = tpu.matmul %261, %262, %cst_145 {dimension_numbers = #tpu.dot_dimension_numbers<[1], [0], [0], [1], [0, 0, 1, 1], [], []>} : vector<16x64xbf16>, vector<64x32xbf16>, vector<16x32xf32> -> vector<16x32xf32>
    %c0_146 = arith.constant 0 : index
    %c0_147 = arith.constant 0 : index
    %264 = vector.load %arg15[%c0_146, %c0_147] : memref<1x32xf32, #tpu.memory_space<vmem>>, vector<1x32xf32>
    %265 = vector.broadcast %264 : vector<1x32xf32> to vector<16x32xf32>
    %266 = arith.addf %263, %265 : vector<16x32xf32>
    %267 = arith.addf %252, %266 : vector<16x32xf32>
    %c0_148 = arith.constant 0 : index
    %c0_149 = arith.constant 0 : index
    %268 = vector.load %arg16[%c0_148, %c0_149] : memref<1x32xf32, #tpu.memory_space<vmem>>, vector<1x32xf32>
    %c0_150 = arith.constant 0 : index
    %c0_151 = arith.constant 0 : index
    %269 = vector.load %arg17[%c0_150, %c0_151] : memref<1x32xf32, #tpu.memory_space<vmem>>, vector<1x32xf32>
    %cst_152 = arith.constant dense<0.000000e+00> : vector<16xf32>
    %270 = vector.multi_reduction <add>, %267, %cst_152 [1] : vector<16x32xf32> to vector<16xf32>
    %271 = vector.shape_cast %270 : vector<16xf32> to vector<16x1xf32>
    %cst_153 = arith.constant 3.200000e+01 : f32
    %272 = vector.broadcast %cst_153 : f32 to vector<16x1xf32>
    %273 = arith.divf %271, %272 : vector<16x1xf32>
    %274 = vector.broadcast %273 : vector<16x1xf32> to vector<16x32xf32>
    %275 = arith.subf %267, %274 : vector<16x32xf32>
    %276 = arith.mulf %275, %275 : vector<16x32xf32>
    %cst_154 = arith.constant dense<0.000000e+00> : vector<16xf32>
    %277 = vector.multi_reduction <add>, %276, %cst_154 [1] : vector<16x32xf32> to vector<16xf32>
    %278 = vector.shape_cast %277 : vector<16xf32> to vector<16x1xf32>
    %cst_155 = arith.constant 3.200000e+01 : f32
    %279 = vector.broadcast %cst_155 : f32 to vector<16x1xf32>
    %280 = arith.divf %278, %279 : vector<16x1xf32>
    %cst_156 = arith.constant 9.99999974E-6 : f32
    %281 = vector.broadcast %cst_156 : f32 to vector<16x1xf32>
    %282 = arith.addf %280, %281 : vector<16x1xf32>
    %283 = math.rsqrt %282 : vector<16x1xf32>
    %284 = vector.broadcast %283 : vector<16x1xf32> to vector<16x32xf32>
    %285 = arith.mulf %275, %284 : vector<16x32xf32>
    %286 = vector.broadcast %268 : vector<1x32xf32> to vector<16x32xf32>
    %287 = arith.mulf %285, %286 : vector<16x32xf32>
    %288 = vector.broadcast %269 : vector<1x32xf32> to vector<16x32xf32>
    %289 = arith.addf %287, %288 : vector<16x32xf32>
    %290 = arith.truncf %289 : vector<16x32xf32> to vector<16x32xbf16>
    %c0_157 = arith.constant 0 : index
    %c0_158 = arith.constant 0 : index
    %c0_159 = arith.constant 0 : index
    %291 = vector.load %arg18[%c0_157, %c0_158, %c0_159] : memref<4x32x8xbf16, #tpu.memory_space<vmem>>, vector<1x32x8xbf16>
    %292 = vector.shape_cast %291 : vector<1x32x8xbf16> to vector<32x8xbf16>
    %cst_160 = arith.constant dense<0.000000e+00> : vector<16x8xf32>
    %293 = tpu.matmul %290, %292, %cst_160 {dimension_numbers = #tpu.dot_dimension_numbers<[1], [0], [0], [1], [0, 0, 1, 1], [], []>} : vector<16x32xbf16>, vector<32x8xbf16>, vector<16x8xf32> -> vector<16x8xf32>
    %c0_161 = arith.constant 0 : index
    %c0_162 = arith.constant 0 : index
    %c0_163 = arith.constant 0 : index
    %294 = vector.load %arg19[%c0_161, %c0_162, %c0_163] : memref<4x1x8xf32, #tpu.memory_space<vmem>>, vector<1x1x8xf32>
    %295 = vector.shape_cast %294 : vector<1x1x8xf32> to vector<1x8xf32>
    %296 = vector.broadcast %295 : vector<1x8xf32> to vector<16x8xf32>
    %297 = arith.addf %293, %296 : vector<16x8xf32>
    %c0_164 = arith.constant 0 : index
    %c0_165 = arith.constant 0 : index
    %c0_166 = arith.constant 0 : index
    %298 = vector.load %arg20[%c0_164, %c0_165, %c0_166] : memref<4x32x8xbf16, #tpu.memory_space<vmem>>, vector<1x32x8xbf16>
    %299 = vector.shape_cast %298 : vector<1x32x8xbf16> to vector<32x8xbf16>
    %cst_167 = arith.constant dense<0.000000e+00> : vector<16x8xf32>
    %300 = tpu.matmul %290, %299, %cst_167 {dimension_numbers = #tpu.dot_dimension_numbers<[1], [0], [0], [1], [0, 0, 1, 1], [], []>} : vector<16x32xbf16>, vector<32x8xbf16>, vector<16x8xf32> -> vector<16x8xf32>
    %c0_168 = arith.constant 0 : index
    %c0_169 = arith.constant 0 : index
    %c0_170 = arith.constant 0 : index
    %301 = vector.load %arg21[%c0_168, %c0_169, %c0_170] : memref<4x1x8xf32, #tpu.memory_space<vmem>>, vector<1x1x8xf32>
    %302 = vector.shape_cast %301 : vector<1x1x8xf32> to vector<1x8xf32>
    %303 = vector.broadcast %302 : vector<1x8xf32> to vector<16x8xf32>
    %304 = arith.addf %300, %303 : vector<16x8xf32>
    %c0_171 = arith.constant 0 : index
    %c0_172 = arith.constant 0 : index
    %c0_173 = arith.constant 0 : index
    %305 = vector.load %arg22[%c0_171, %c0_172, %c0_173] : memref<4x32x32xbf16, #tpu.memory_space<vmem>>, vector<1x32x32xbf16>
    %306 = vector.shape_cast %305 : vector<1x32x32xbf16> to vector<32x32xbf16>
    %cst_174 = arith.constant dense<0.000000e+00> : vector<16x32xf32>
    %307 = tpu.matmul %290, %306, %cst_174 {dimension_numbers = #tpu.dot_dimension_numbers<[1], [0], [0], [1], [0, 0, 1, 1], [], []>} : vector<16x32xbf16>, vector<32x32xbf16>, vector<16x32xf32> -> vector<16x32xf32>
    %c0_175 = arith.constant 0 : index
    %c0_176 = arith.constant 0 : index
    %c0_177 = arith.constant 0 : index
    %308 = vector.load %arg23[%c0_175, %c0_176, %c0_177] : memref<4x1x32xf32, #tpu.memory_space<vmem>>, vector<1x1x32xf32>
    %309 = vector.shape_cast %308 : vector<1x1x32xf32> to vector<1x32xf32>
    %310 = vector.broadcast %309 : vector<1x32xf32> to vector<16x32xf32>
    %311 = arith.addf %307, %310 : vector<16x32xf32>
    %312 = vector.extract_strided_slice %297 {offsets = [0, 0], sizes = [8, 8], strides = [1, 1]} : vector<16x8xf32> to vector<8x8xf32>
    %cst_178 = arith.constant 0.353553385 : f32
    %313 = vector.broadcast %cst_178 : f32 to vector<8x8xf32>
    %314 = arith.mulf %312, %313 : vector<8x8xf32>
    %315 = vector.extract_strided_slice %304 {offsets = [0, 0], sizes = [8, 8], strides = [1, 1]} : vector<16x8xf32> to vector<8x8xf32>
    %cst_179 = arith.constant dense<0.000000e+00> : vector<8x8xf32>
    %316 = tpu.matmul %314, %315, %cst_179 {dimension_numbers = #tpu.dot_dimension_numbers<[1], [1], [0], [0], [0, 0, 1, 0], [], []>} : vector<8x8xf32>, vector<8x8xf32>, vector<8x8xf32> -> vector<8x8xf32>
    %cst_180 = arith.constant dense<0xFF800000> : vector<8xf32>
    %317 = vector.multi_reduction <maximumf>, %316, %cst_180 [1] : vector<8x8xf32> to vector<8xf32>
    %318 = vector.shape_cast %317 : vector<8xf32> to vector<8x1xf32>
    %319 = vector.broadcast %318 : vector<8x1xf32> to vector<8x8xf32>
    %320 = arith.subf %316, %319 : vector<8x8xf32>
    %321 = math.exp %320 : vector<8x8xf32>
    %cst_181 = arith.constant dense<0.000000e+00> : vector<8xf32>
    %322 = vector.multi_reduction <add>, %321, %cst_181 [1] : vector<8x8xf32> to vector<8xf32>
    %323 = vector.shape_cast %322 : vector<8xf32> to vector<8x1xf32>
    %324 = vector.broadcast %323 : vector<8x1xf32> to vector<8x8xf32>
    %325 = arith.divf %321, %324 : vector<8x8xf32>
    %326 = vector.extract_strided_slice %311 {offsets = [0, 0], sizes = [8, 32], strides = [1, 1]} : vector<16x32xf32> to vector<8x32xf32>
    %cst_182 = arith.constant dense<0.000000e+00> : vector<8x32xf32>
    %327 = tpu.matmul %325, %326, %cst_182 {dimension_numbers = #tpu.dot_dimension_numbers<[1], [0], [0], [1], [0, 0, 1, 1], [], []>} : vector<8x8xf32>, vector<8x32xf32>, vector<8x32xf32> -> vector<8x32xf32>
    %328 = vector.extract_strided_slice %297 {offsets = [8, 0], sizes = [8, 8], strides = [1, 1]} : vector<16x8xf32> to vector<8x8xf32>
    %cst_183 = arith.constant 0.353553385 : f32
    %329 = vector.broadcast %cst_183 : f32 to vector<8x8xf32>
    %330 = arith.mulf %328, %329 : vector<8x8xf32>
    %331 = vector.extract_strided_slice %304 {offsets = [8, 0], sizes = [8, 8], strides = [1, 1]} : vector<16x8xf32> to vector<8x8xf32>
    %cst_184 = arith.constant dense<0.000000e+00> : vector<8x8xf32>
    %332 = tpu.matmul %330, %331, %cst_184 {dimension_numbers = #tpu.dot_dimension_numbers<[1], [1], [0], [0], [0, 0, 1, 0], [], []>} : vector<8x8xf32>, vector<8x8xf32>, vector<8x8xf32> -> vector<8x8xf32>
    %cst_185 = arith.constant dense<0xFF800000> : vector<8xf32>
    %333 = vector.multi_reduction <maximumf>, %332, %cst_185 [1] : vector<8x8xf32> to vector<8xf32>
    %334 = vector.shape_cast %333 : vector<8xf32> to vector<8x1xf32>
    %335 = vector.broadcast %334 : vector<8x1xf32> to vector<8x8xf32>
    %336 = arith.subf %332, %335 : vector<8x8xf32>
    %337 = math.exp %336 : vector<8x8xf32>
    %cst_186 = arith.constant dense<0.000000e+00> : vector<8xf32>
    %338 = vector.multi_reduction <add>, %337, %cst_186 [1] : vector<8x8xf32> to vector<8xf32>
    %339 = vector.shape_cast %338 : vector<8xf32> to vector<8x1xf32>
    %340 = vector.broadcast %339 : vector<8x1xf32> to vector<8x8xf32>
    %341 = arith.divf %337, %340 : vector<8x8xf32>
    %342 = vector.extract_strided_slice %311 {offsets = [8, 0], sizes = [8, 32], strides = [1, 1]} : vector<16x32xf32> to vector<8x32xf32>
    %cst_187 = arith.constant dense<0.000000e+00> : vector<8x32xf32>
    %343 = tpu.matmul %341, %342, %cst_187 {dimension_numbers = #tpu.dot_dimension_numbers<[1], [0], [0], [1], [0, 0, 1, 1], [], []>} : vector<8x8xf32>, vector<8x32xf32>, vector<8x32xf32> -> vector<8x32xf32>
    %c1_188 = arith.constant 1 : index
    %c0_189 = arith.constant 0 : index
    %c0_190 = arith.constant 0 : index
    %344 = vector.load %arg18[%c1_188, %c0_189, %c0_190] : memref<4x32x8xbf16, #tpu.memory_space<vmem>>, vector<1x32x8xbf16>
    %345 = vector.shape_cast %344 : vector<1x32x8xbf16> to vector<32x8xbf16>
    %cst_191 = arith.constant dense<0.000000e+00> : vector<16x8xf32>
    %346 = tpu.matmul %290, %345, %cst_191 {dimension_numbers = #tpu.dot_dimension_numbers<[1], [0], [0], [1], [0, 0, 1, 1], [], []>} : vector<16x32xbf16>, vector<32x8xbf16>, vector<16x8xf32> -> vector<16x8xf32>
    %c1_192 = arith.constant 1 : index
    %c0_193 = arith.constant 0 : index
    %c0_194 = arith.constant 0 : index
    %347 = vector.load %arg19[%c1_192, %c0_193, %c0_194] : memref<4x1x8xf32, #tpu.memory_space<vmem>>, vector<1x1x8xf32>
    %348 = vector.shape_cast %347 : vector<1x1x8xf32> to vector<1x8xf32>
    %349 = vector.broadcast %348 : vector<1x8xf32> to vector<16x8xf32>
    %350 = arith.addf %346, %349 : vector<16x8xf32>
    %c1_195 = arith.constant 1 : index
    %c0_196 = arith.constant 0 : index
    %c0_197 = arith.constant 0 : index
    %351 = vector.load %arg20[%c1_195, %c0_196, %c0_197] : memref<4x32x8xbf16, #tpu.memory_space<vmem>>, vector<1x32x8xbf16>
    %352 = vector.shape_cast %351 : vector<1x32x8xbf16> to vector<32x8xbf16>
    %cst_198 = arith.constant dense<0.000000e+00> : vector<16x8xf32>
    %353 = tpu.matmul %290, %352, %cst_198 {dimension_numbers = #tpu.dot_dimension_numbers<[1], [0], [0], [1], [0, 0, 1, 1], [], []>} : vector<16x32xbf16>, vector<32x8xbf16>, vector<16x8xf32> -> vector<16x8xf32>
    %c1_199 = arith.constant 1 : index
    %c0_200 = arith.constant 0 : index
    %c0_201 = arith.constant 0 : index
    %354 = vector.load %arg21[%c1_199, %c0_200, %c0_201] : memref<4x1x8xf32, #tpu.memory_space<vmem>>, vector<1x1x8xf32>
    %355 = vector.shape_cast %354 : vector<1x1x8xf32> to vector<1x8xf32>
    %356 = vector.broadcast %355 : vector<1x8xf32> to vector<16x8xf32>
    %357 = arith.addf %353, %356 : vector<16x8xf32>
    %c1_202 = arith.constant 1 : index
    %c0_203 = arith.constant 0 : index
    %c0_204 = arith.constant 0 : index
    %358 = vector.load %arg22[%c1_202, %c0_203, %c0_204] : memref<4x32x32xbf16, #tpu.memory_space<vmem>>, vector<1x32x32xbf16>
    %359 = vector.shape_cast %358 : vector<1x32x32xbf16> to vector<32x32xbf16>
    %cst_205 = arith.constant dense<0.000000e+00> : vector<16x32xf32>
    %360 = tpu.matmul %290, %359, %cst_205 {dimension_numbers = #tpu.dot_dimension_numbers<[1], [0], [0], [1], [0, 0, 1, 1], [], []>} : vector<16x32xbf16>, vector<32x32xbf16>, vector<16x32xf32> -> vector<16x32xf32>
    %c1_206 = arith.constant 1 : index
    %c0_207 = arith.constant 0 : index
    %c0_208 = arith.constant 0 : index
    %361 = vector.load %arg23[%c1_206, %c0_207, %c0_208] : memref<4x1x32xf32, #tpu.memory_space<vmem>>, vector<1x1x32xf32>
    %362 = vector.shape_cast %361 : vector<1x1x32xf32> to vector<1x32xf32>
    %363 = vector.broadcast %362 : vector<1x32xf32> to vector<16x32xf32>
    %364 = arith.addf %360, %363 : vector<16x32xf32>
    %365 = vector.extract_strided_slice %350 {offsets = [0, 0], sizes = [8, 8], strides = [1, 1]} : vector<16x8xf32> to vector<8x8xf32>
    %cst_209 = arith.constant 0.353553385 : f32
    %366 = vector.broadcast %cst_209 : f32 to vector<8x8xf32>
    %367 = arith.mulf %365, %366 : vector<8x8xf32>
    %368 = vector.extract_strided_slice %357 {offsets = [0, 0], sizes = [8, 8], strides = [1, 1]} : vector<16x8xf32> to vector<8x8xf32>
    %cst_210 = arith.constant dense<0.000000e+00> : vector<8x8xf32>
    %369 = tpu.matmul %367, %368, %cst_210 {dimension_numbers = #tpu.dot_dimension_numbers<[1], [1], [0], [0], [0, 0, 1, 0], [], []>} : vector<8x8xf32>, vector<8x8xf32>, vector<8x8xf32> -> vector<8x8xf32>
    %cst_211 = arith.constant dense<0xFF800000> : vector<8xf32>
    %370 = vector.multi_reduction <maximumf>, %369, %cst_211 [1] : vector<8x8xf32> to vector<8xf32>
    %371 = vector.shape_cast %370 : vector<8xf32> to vector<8x1xf32>
    %372 = vector.broadcast %371 : vector<8x1xf32> to vector<8x8xf32>
    %373 = arith.subf %369, %372 : vector<8x8xf32>
    %374 = math.exp %373 : vector<8x8xf32>
    %cst_212 = arith.constant dense<0.000000e+00> : vector<8xf32>
    %375 = vector.multi_reduction <add>, %374, %cst_212 [1] : vector<8x8xf32> to vector<8xf32>
    %376 = vector.shape_cast %375 : vector<8xf32> to vector<8x1xf32>
    %377 = vector.broadcast %376 : vector<8x1xf32> to vector<8x8xf32>
    %378 = arith.divf %374, %377 : vector<8x8xf32>
    %379 = vector.extract_strided_slice %364 {offsets = [0, 0], sizes = [8, 32], strides = [1, 1]} : vector<16x32xf32> to vector<8x32xf32>
    %cst_213 = arith.constant dense<0.000000e+00> : vector<8x32xf32>
    %380 = tpu.matmul %378, %379, %cst_213 {dimension_numbers = #tpu.dot_dimension_numbers<[1], [0], [0], [1], [0, 0, 1, 1], [], []>} : vector<8x8xf32>, vector<8x32xf32>, vector<8x32xf32> -> vector<8x32xf32>
    %381 = arith.addf %327, %380 : vector<8x32xf32>
    %382 = vector.extract_strided_slice %350 {offsets = [8, 0], sizes = [8, 8], strides = [1, 1]} : vector<16x8xf32> to vector<8x8xf32>
    %cst_214 = arith.constant 0.353553385 : f32
    %383 = vector.broadcast %cst_214 : f32 to vector<8x8xf32>
    %384 = arith.mulf %382, %383 : vector<8x8xf32>
    %385 = vector.extract_strided_slice %357 {offsets = [8, 0], sizes = [8, 8], strides = [1, 1]} : vector<16x8xf32> to vector<8x8xf32>
    %cst_215 = arith.constant dense<0.000000e+00> : vector<8x8xf32>
    %386 = tpu.matmul %384, %385, %cst_215 {dimension_numbers = #tpu.dot_dimension_numbers<[1], [1], [0], [0], [0, 0, 1, 0], [], []>} : vector<8x8xf32>, vector<8x8xf32>, vector<8x8xf32> -> vector<8x8xf32>
    %cst_216 = arith.constant dense<0xFF800000> : vector<8xf32>
    %387 = vector.multi_reduction <maximumf>, %386, %cst_216 [1] : vector<8x8xf32> to vector<8xf32>
    %388 = vector.shape_cast %387 : vector<8xf32> to vector<8x1xf32>
    %389 = vector.broadcast %388 : vector<8x1xf32> to vector<8x8xf32>
    %390 = arith.subf %386, %389 : vector<8x8xf32>
    %391 = math.exp %390 : vector<8x8xf32>
    %cst_217 = arith.constant dense<0.000000e+00> : vector<8xf32>
    %392 = vector.multi_reduction <add>, %391, %cst_217 [1] : vector<8x8xf32> to vector<8xf32>
    %393 = vector.shape_cast %392 : vector<8xf32> to vector<8x1xf32>
    %394 = vector.broadcast %393 : vector<8x1xf32> to vector<8x8xf32>
    %395 = arith.divf %391, %394 : vector<8x8xf32>
    %396 = vector.extract_strided_slice %364 {offsets = [8, 0], sizes = [8, 32], strides = [1, 1]} : vector<16x32xf32> to vector<8x32xf32>
    %cst_218 = arith.constant dense<0.000000e+00> : vector<8x32xf32>
    %397 = tpu.matmul %395, %396, %cst_218 {dimension_numbers = #tpu.dot_dimension_numbers<[1], [0], [0], [1], [0, 0, 1, 1], [], []>} : vector<8x8xf32>, vector<8x32xf32>, vector<8x32xf32> -> vector<8x32xf32>
    %398 = arith.addf %343, %397 : vector<8x32xf32>
    %c2_219 = arith.constant 2 : index
    %c0_220 = arith.constant 0 : index
    %c0_221 = arith.constant 0 : index
    %399 = vector.load %arg18[%c2_219, %c0_220, %c0_221] : memref<4x32x8xbf16, #tpu.memory_space<vmem>>, vector<1x32x8xbf16>
    %400 = vector.shape_cast %399 : vector<1x32x8xbf16> to vector<32x8xbf16>
    %cst_222 = arith.constant dense<0.000000e+00> : vector<16x8xf32>
    %401 = tpu.matmul %290, %400, %cst_222 {dimension_numbers = #tpu.dot_dimension_numbers<[1], [0], [0], [1], [0, 0, 1, 1], [], []>} : vector<16x32xbf16>, vector<32x8xbf16>, vector<16x8xf32> -> vector<16x8xf32>
    %c2_223 = arith.constant 2 : index
    %c0_224 = arith.constant 0 : index
    %c0_225 = arith.constant 0 : index
    %402 = vector.load %arg19[%c2_223, %c0_224, %c0_225] : memref<4x1x8xf32, #tpu.memory_space<vmem>>, vector<1x1x8xf32>
    %403 = vector.shape_cast %402 : vector<1x1x8xf32> to vector<1x8xf32>
    %404 = vector.broadcast %403 : vector<1x8xf32> to vector<16x8xf32>
    %405 = arith.addf %401, %404 : vector<16x8xf32>
    %c2_226 = arith.constant 2 : index
    %c0_227 = arith.constant 0 : index
    %c0_228 = arith.constant 0 : index
    %406 = vector.load %arg20[%c2_226, %c0_227, %c0_228] : memref<4x32x8xbf16, #tpu.memory_space<vmem>>, vector<1x32x8xbf16>
    %407 = vector.shape_cast %406 : vector<1x32x8xbf16> to vector<32x8xbf16>
    %cst_229 = arith.constant dense<0.000000e+00> : vector<16x8xf32>
    %408 = tpu.matmul %290, %407, %cst_229 {dimension_numbers = #tpu.dot_dimension_numbers<[1], [0], [0], [1], [0, 0, 1, 1], [], []>} : vector<16x32xbf16>, vector<32x8xbf16>, vector<16x8xf32> -> vector<16x8xf32>
    %c2_230 = arith.constant 2 : index
    %c0_231 = arith.constant 0 : index
    %c0_232 = arith.constant 0 : index
    %409 = vector.load %arg21[%c2_230, %c0_231, %c0_232] : memref<4x1x8xf32, #tpu.memory_space<vmem>>, vector<1x1x8xf32>
    %410 = vector.shape_cast %409 : vector<1x1x8xf32> to vector<1x8xf32>
    %411 = vector.broadcast %410 : vector<1x8xf32> to vector<16x8xf32>
    %412 = arith.addf %408, %411 : vector<16x8xf32>
    %c2_233 = arith.constant 2 : index
    %c0_234 = arith.constant 0 : index
    %c0_235 = arith.constant 0 : index
    %413 = vector.load %arg22[%c2_233, %c0_234, %c0_235] : memref<4x32x32xbf16, #tpu.memory_space<vmem>>, vector<1x32x32xbf16>
    %414 = vector.shape_cast %413 : vector<1x32x32xbf16> to vector<32x32xbf16>
    %cst_236 = arith.constant dense<0.000000e+00> : vector<16x32xf32>
    %415 = tpu.matmul %290, %414, %cst_236 {dimension_numbers = #tpu.dot_dimension_numbers<[1], [0], [0], [1], [0, 0, 1, 1], [], []>} : vector<16x32xbf16>, vector<32x32xbf16>, vector<16x32xf32> -> vector<16x32xf32>
    %c2_237 = arith.constant 2 : index
    %c0_238 = arith.constant 0 : index
    %c0_239 = arith.constant 0 : index
    %416 = vector.load %arg23[%c2_237, %c0_238, %c0_239] : memref<4x1x32xf32, #tpu.memory_space<vmem>>, vector<1x1x32xf32>
    %417 = vector.shape_cast %416 : vector<1x1x32xf32> to vector<1x32xf32>
    %418 = vector.broadcast %417 : vector<1x32xf32> to vector<16x32xf32>
    %419 = arith.addf %415, %418 : vector<16x32xf32>
    %420 = vector.extract_strided_slice %405 {offsets = [0, 0], sizes = [8, 8], strides = [1, 1]} : vector<16x8xf32> to vector<8x8xf32>
    %cst_240 = arith.constant 0.353553385 : f32
    %421 = vector.broadcast %cst_240 : f32 to vector<8x8xf32>
    %422 = arith.mulf %420, %421 : vector<8x8xf32>
    %423 = vector.extract_strided_slice %412 {offsets = [0, 0], sizes = [8, 8], strides = [1, 1]} : vector<16x8xf32> to vector<8x8xf32>
    %cst_241 = arith.constant dense<0.000000e+00> : vector<8x8xf32>
    %424 = tpu.matmul %422, %423, %cst_241 {dimension_numbers = #tpu.dot_dimension_numbers<[1], [1], [0], [0], [0, 0, 1, 0], [], []>} : vector<8x8xf32>, vector<8x8xf32>, vector<8x8xf32> -> vector<8x8xf32>
    %cst_242 = arith.constant dense<0xFF800000> : vector<8xf32>
    %425 = vector.multi_reduction <maximumf>, %424, %cst_242 [1] : vector<8x8xf32> to vector<8xf32>
    %426 = vector.shape_cast %425 : vector<8xf32> to vector<8x1xf32>
    %427 = vector.broadcast %426 : vector<8x1xf32> to vector<8x8xf32>
    %428 = arith.subf %424, %427 : vector<8x8xf32>
    %429 = math.exp %428 : vector<8x8xf32>
    %cst_243 = arith.constant dense<0.000000e+00> : vector<8xf32>
    %430 = vector.multi_reduction <add>, %429, %cst_243 [1] : vector<8x8xf32> to vector<8xf32>
    %431 = vector.shape_cast %430 : vector<8xf32> to vector<8x1xf32>
    %432 = vector.broadcast %431 : vector<8x1xf32> to vector<8x8xf32>
    %433 = arith.divf %429, %432 : vector<8x8xf32>
    %434 = vector.extract_strided_slice %419 {offsets = [0, 0], sizes = [8, 32], strides = [1, 1]} : vector<16x32xf32> to vector<8x32xf32>
    %cst_244 = arith.constant dense<0.000000e+00> : vector<8x32xf32>
    %435 = tpu.matmul %433, %434, %cst_244 {dimension_numbers = #tpu.dot_dimension_numbers<[1], [0], [0], [1], [0, 0, 1, 1], [], []>} : vector<8x8xf32>, vector<8x32xf32>, vector<8x32xf32> -> vector<8x32xf32>
    %436 = arith.addf %381, %435 : vector<8x32xf32>
    %437 = vector.extract_strided_slice %405 {offsets = [8, 0], sizes = [8, 8], strides = [1, 1]} : vector<16x8xf32> to vector<8x8xf32>
    %cst_245 = arith.constant 0.353553385 : f32
    %438 = vector.broadcast %cst_245 : f32 to vector<8x8xf32>
    %439 = arith.mulf %437, %438 : vector<8x8xf32>
    %440 = vector.extract_strided_slice %412 {offsets = [8, 0], sizes = [8, 8], strides = [1, 1]} : vector<16x8xf32> to vector<8x8xf32>
    %cst_246 = arith.constant dense<0.000000e+00> : vector<8x8xf32>
    %441 = tpu.matmul %439, %440, %cst_246 {dimension_numbers = #tpu.dot_dimension_numbers<[1], [1], [0], [0], [0, 0, 1, 0], [], []>} : vector<8x8xf32>, vector<8x8xf32>, vector<8x8xf32> -> vector<8x8xf32>
    %cst_247 = arith.constant dense<0xFF800000> : vector<8xf32>
    %442 = vector.multi_reduction <maximumf>, %441, %cst_247 [1] : vector<8x8xf32> to vector<8xf32>
    %443 = vector.shape_cast %442 : vector<8xf32> to vector<8x1xf32>
    %444 = vector.broadcast %443 : vector<8x1xf32> to vector<8x8xf32>
    %445 = arith.subf %441, %444 : vector<8x8xf32>
    %446 = math.exp %445 : vector<8x8xf32>
    %cst_248 = arith.constant dense<0.000000e+00> : vector<8xf32>
    %447 = vector.multi_reduction <add>, %446, %cst_248 [1] : vector<8x8xf32> to vector<8xf32>
    %448 = vector.shape_cast %447 : vector<8xf32> to vector<8x1xf32>
    %449 = vector.broadcast %448 : vector<8x1xf32> to vector<8x8xf32>
    %450 = arith.divf %446, %449 : vector<8x8xf32>
    %451 = vector.extract_strided_slice %419 {offsets = [8, 0], sizes = [8, 32], strides = [1, 1]} : vector<16x32xf32> to vector<8x32xf32>
    %cst_249 = arith.constant dense<0.000000e+00> : vector<8x32xf32>
    %452 = tpu.matmul %450, %451, %cst_249 {dimension_numbers = #tpu.dot_dimension_numbers<[1], [0], [0], [1], [0, 0, 1, 1], [], []>} : vector<8x8xf32>, vector<8x32xf32>, vector<8x32xf32> -> vector<8x32xf32>
    %453 = arith.addf %398, %452 : vector<8x32xf32>
    %c3_250 = arith.constant 3 : index
    %c0_251 = arith.constant 0 : index
    %c0_252 = arith.constant 0 : index
    %454 = vector.load %arg18[%c3_250, %c0_251, %c0_252] : memref<4x32x8xbf16, #tpu.memory_space<vmem>>, vector<1x32x8xbf16>
    %455 = vector.shape_cast %454 : vector<1x32x8xbf16> to vector<32x8xbf16>
    %cst_253 = arith.constant dense<0.000000e+00> : vector<16x8xf32>
    %456 = tpu.matmul %290, %455, %cst_253 {dimension_numbers = #tpu.dot_dimension_numbers<[1], [0], [0], [1], [0, 0, 1, 1], [], []>} : vector<16x32xbf16>, vector<32x8xbf16>, vector<16x8xf32> -> vector<16x8xf32>
    %c3_254 = arith.constant 3 : index
    %c0_255 = arith.constant 0 : index
    %c0_256 = arith.constant 0 : index
    %457 = vector.load %arg19[%c3_254, %c0_255, %c0_256] : memref<4x1x8xf32, #tpu.memory_space<vmem>>, vector<1x1x8xf32>
    %458 = vector.shape_cast %457 : vector<1x1x8xf32> to vector<1x8xf32>
    %459 = vector.broadcast %458 : vector<1x8xf32> to vector<16x8xf32>
    %460 = arith.addf %456, %459 : vector<16x8xf32>
    %c3_257 = arith.constant 3 : index
    %c0_258 = arith.constant 0 : index
    %c0_259 = arith.constant 0 : index
    %461 = vector.load %arg20[%c3_257, %c0_258, %c0_259] : memref<4x32x8xbf16, #tpu.memory_space<vmem>>, vector<1x32x8xbf16>
    %462 = vector.shape_cast %461 : vector<1x32x8xbf16> to vector<32x8xbf16>
    %cst_260 = arith.constant dense<0.000000e+00> : vector<16x8xf32>
    %463 = tpu.matmul %290, %462, %cst_260 {dimension_numbers = #tpu.dot_dimension_numbers<[1], [0], [0], [1], [0, 0, 1, 1], [], []>} : vector<16x32xbf16>, vector<32x8xbf16>, vector<16x8xf32> -> vector<16x8xf32>
    %c3_261 = arith.constant 3 : index
    %c0_262 = arith.constant 0 : index
    %c0_263 = arith.constant 0 : index
    %464 = vector.load %arg21[%c3_261, %c0_262, %c0_263] : memref<4x1x8xf32, #tpu.memory_space<vmem>>, vector<1x1x8xf32>
    %465 = vector.shape_cast %464 : vector<1x1x8xf32> to vector<1x8xf32>
    %466 = vector.broadcast %465 : vector<1x8xf32> to vector<16x8xf32>
    %467 = arith.addf %463, %466 : vector<16x8xf32>
    %c3_264 = arith.constant 3 : index
    %c0_265 = arith.constant 0 : index
    %c0_266 = arith.constant 0 : index
    %468 = vector.load %arg22[%c3_264, %c0_265, %c0_266] : memref<4x32x32xbf16, #tpu.memory_space<vmem>>, vector<1x32x32xbf16>
    %469 = vector.shape_cast %468 : vector<1x32x32xbf16> to vector<32x32xbf16>
    %cst_267 = arith.constant dense<0.000000e+00> : vector<16x32xf32>
    %470 = tpu.matmul %290, %469, %cst_267 {dimension_numbers = #tpu.dot_dimension_numbers<[1], [0], [0], [1], [0, 0, 1, 1], [], []>} : vector<16x32xbf16>, vector<32x32xbf16>, vector<16x32xf32> -> vector<16x32xf32>
    %c3_268 = arith.constant 3 : index
    %c0_269 = arith.constant 0 : index
    %c0_270 = arith.constant 0 : index
    %471 = vector.load %arg23[%c3_268, %c0_269, %c0_270] : memref<4x1x32xf32, #tpu.memory_space<vmem>>, vector<1x1x32xf32>
    %472 = vector.shape_cast %471 : vector<1x1x32xf32> to vector<1x32xf32>
    %473 = vector.broadcast %472 : vector<1x32xf32> to vector<16x32xf32>
    %474 = arith.addf %470, %473 : vector<16x32xf32>
    %475 = vector.extract_strided_slice %460 {offsets = [0, 0], sizes = [8, 8], strides = [1, 1]} : vector<16x8xf32> to vector<8x8xf32>
    %cst_271 = arith.constant 0.353553385 : f32
    %476 = vector.broadcast %cst_271 : f32 to vector<8x8xf32>
    %477 = arith.mulf %475, %476 : vector<8x8xf32>
    %478 = vector.extract_strided_slice %467 {offsets = [0, 0], sizes = [8, 8], strides = [1, 1]} : vector<16x8xf32> to vector<8x8xf32>
    %cst_272 = arith.constant dense<0.000000e+00> : vector<8x8xf32>
    %479 = tpu.matmul %477, %478, %cst_272 {dimension_numbers = #tpu.dot_dimension_numbers<[1], [1], [0], [0], [0, 0, 1, 0], [], []>} : vector<8x8xf32>, vector<8x8xf32>, vector<8x8xf32> -> vector<8x8xf32>
    %cst_273 = arith.constant dense<0xFF800000> : vector<8xf32>
    %480 = vector.multi_reduction <maximumf>, %479, %cst_273 [1] : vector<8x8xf32> to vector<8xf32>
    %481 = vector.shape_cast %480 : vector<8xf32> to vector<8x1xf32>
    %482 = vector.broadcast %481 : vector<8x1xf32> to vector<8x8xf32>
    %483 = arith.subf %479, %482 : vector<8x8xf32>
    %484 = math.exp %483 : vector<8x8xf32>
    %cst_274 = arith.constant dense<0.000000e+00> : vector<8xf32>
    %485 = vector.multi_reduction <add>, %484, %cst_274 [1] : vector<8x8xf32> to vector<8xf32>
    %486 = vector.shape_cast %485 : vector<8xf32> to vector<8x1xf32>
    %487 = vector.broadcast %486 : vector<8x1xf32> to vector<8x8xf32>
    %488 = arith.divf %484, %487 : vector<8x8xf32>
    %489 = vector.extract_strided_slice %474 {offsets = [0, 0], sizes = [8, 32], strides = [1, 1]} : vector<16x32xf32> to vector<8x32xf32>
    %cst_275 = arith.constant dense<0.000000e+00> : vector<8x32xf32>
    %490 = tpu.matmul %488, %489, %cst_275 {dimension_numbers = #tpu.dot_dimension_numbers<[1], [0], [0], [1], [0, 0, 1, 1], [], []>} : vector<8x8xf32>, vector<8x32xf32>, vector<8x32xf32> -> vector<8x32xf32>
    %491 = arith.addf %436, %490 : vector<8x32xf32>
    %492 = vector.extract_strided_slice %460 {offsets = [8, 0], sizes = [8, 8], strides = [1, 1]} : vector<16x8xf32> to vector<8x8xf32>
    %cst_276 = arith.constant 0.353553385 : f32
    %493 = vector.broadcast %cst_276 : f32 to vector<8x8xf32>
    %494 = arith.mulf %492, %493 : vector<8x8xf32>
    %495 = vector.extract_strided_slice %467 {offsets = [8, 0], sizes = [8, 8], strides = [1, 1]} : vector<16x8xf32> to vector<8x8xf32>
    %cst_277 = arith.constant dense<0.000000e+00> : vector<8x8xf32>
    %496 = tpu.matmul %494, %495, %cst_277 {dimension_numbers = #tpu.dot_dimension_numbers<[1], [1], [0], [0], [0, 0, 1, 0], [], []>} : vector<8x8xf32>, vector<8x8xf32>, vector<8x8xf32> -> vector<8x8xf32>
    %cst_278 = arith.constant dense<0xFF800000> : vector<8xf32>
    %497 = vector.multi_reduction <maximumf>, %496, %cst_278 [1] : vector<8x8xf32> to vector<8xf32>
    %498 = vector.shape_cast %497 : vector<8xf32> to vector<8x1xf32>
    %499 = vector.broadcast %498 : vector<8x1xf32> to vector<8x8xf32>
    %500 = arith.subf %496, %499 : vector<8x8xf32>
    %501 = math.exp %500 : vector<8x8xf32>
    %cst_279 = arith.constant dense<0.000000e+00> : vector<8xf32>
    %502 = vector.multi_reduction <add>, %501, %cst_279 [1] : vector<8x8xf32> to vector<8xf32>
    %503 = vector.shape_cast %502 : vector<8xf32> to vector<8x1xf32>
    %504 = vector.broadcast %503 : vector<8x1xf32> to vector<8x8xf32>
    %505 = arith.divf %501, %504 : vector<8x8xf32>
    %506 = vector.extract_strided_slice %474 {offsets = [8, 0], sizes = [8, 32], strides = [1, 1]} : vector<16x32xf32> to vector<8x32xf32>
    %cst_280 = arith.constant dense<0.000000e+00> : vector<8x32xf32>
    %507 = tpu.matmul %505, %506, %cst_280 {dimension_numbers = #tpu.dot_dimension_numbers<[1], [0], [0], [1], [0, 0, 1, 1], [], []>} : vector<8x8xf32>, vector<8x32xf32>, vector<8x32xf32> -> vector<8x32xf32>
    %508 = arith.addf %453, %507 : vector<8x32xf32>
    %509 = tpu.concatenate %491, %508 in 0 : vector<8x32xf32>, vector<8x32xf32> -> vector<16x32xf32>
    %c0_281 = arith.constant 0 : index
    %c0_282 = arith.constant 0 : index
    %510 = vector.load %arg24[%c0_281, %c0_282] : memref<1x32xf32, #tpu.memory_space<vmem>>, vector<1x32xf32>
    %511 = vector.broadcast %510 : vector<1x32xf32> to vector<16x32xf32>
    %512 = arith.addf %509, %511 : vector<16x32xf32>
    %513 = arith.addf %289, %512 : vector<16x32xf32>
    %c0_283 = arith.constant 0 : index
    %c0_284 = arith.constant 0 : index
    %514 = vector.load %arg25[%c0_283, %c0_284] : memref<1x32xf32, #tpu.memory_space<vmem>>, vector<1x32xf32>
    %c0_285 = arith.constant 0 : index
    %c0_286 = arith.constant 0 : index
    %515 = vector.load %arg26[%c0_285, %c0_286] : memref<1x32xf32, #tpu.memory_space<vmem>>, vector<1x32xf32>
    %cst_287 = arith.constant dense<0.000000e+00> : vector<16xf32>
    %516 = vector.multi_reduction <add>, %513, %cst_287 [1] : vector<16x32xf32> to vector<16xf32>
    %517 = vector.shape_cast %516 : vector<16xf32> to vector<16x1xf32>
    %cst_288 = arith.constant 3.200000e+01 : f32
    %518 = vector.broadcast %cst_288 : f32 to vector<16x1xf32>
    %519 = arith.divf %517, %518 : vector<16x1xf32>
    %520 = vector.broadcast %519 : vector<16x1xf32> to vector<16x32xf32>
    %521 = arith.subf %513, %520 : vector<16x32xf32>
    %522 = arith.mulf %521, %521 : vector<16x32xf32>
    %cst_289 = arith.constant dense<0.000000e+00> : vector<16xf32>
    %523 = vector.multi_reduction <add>, %522, %cst_289 [1] : vector<16x32xf32> to vector<16xf32>
    %524 = vector.shape_cast %523 : vector<16xf32> to vector<16x1xf32>
    %cst_290 = arith.constant 3.200000e+01 : f32
    %525 = vector.broadcast %cst_290 : f32 to vector<16x1xf32>
    %526 = arith.divf %524, %525 : vector<16x1xf32>
    %cst_291 = arith.constant 9.99999974E-6 : f32
    %527 = vector.broadcast %cst_291 : f32 to vector<16x1xf32>
    %528 = arith.addf %526, %527 : vector<16x1xf32>
    %529 = math.rsqrt %528 : vector<16x1xf32>
    %530 = vector.broadcast %529 : vector<16x1xf32> to vector<16x32xf32>
    %531 = arith.mulf %521, %530 : vector<16x32xf32>
    %532 = vector.broadcast %514 : vector<1x32xf32> to vector<16x32xf32>
    %533 = arith.mulf %531, %532 : vector<16x32xf32>
    %534 = vector.broadcast %515 : vector<1x32xf32> to vector<16x32xf32>
    %535 = arith.addf %533, %534 : vector<16x32xf32>
    %536 = arith.truncf %535 : vector<16x32xf32> to vector<16x32xbf16>
    %c0_292 = arith.constant 0 : index
    %c0_293 = arith.constant 0 : index
    %537 = vector.load %arg27[%c0_292, %c0_293] : memref<32x64xbf16, #tpu.memory_space<vmem>>, vector<32x64xbf16>
    %cst_294 = arith.constant dense<0.000000e+00> : vector<16x64xf32>
    %538 = tpu.matmul %536, %537, %cst_294 {dimension_numbers = #tpu.dot_dimension_numbers<[1], [0], [0], [1], [0, 0, 1, 1], [], []>} : vector<16x32xbf16>, vector<32x64xbf16>, vector<16x64xf32> -> vector<16x64xf32>
    %c0_295 = arith.constant 0 : index
    %c0_296 = arith.constant 0 : index
    %539 = vector.load %arg28[%c0_295, %c0_296] : memref<1x64xf32, #tpu.memory_space<vmem>>, vector<1x64xf32>
    %540 = vector.broadcast %539 : vector<1x64xf32> to vector<16x64xf32>
    %541 = arith.addf %538, %540 : vector<16x64xf32>
    %cst_297 = arith.constant 0.000000e+00 : f32
    %542 = vector.broadcast %cst_297 : f32 to vector<16x64xf32>
    %543 = arith.maximumf %541, %542 : vector<16x64xf32>
    %544 = arith.truncf %543 : vector<16x64xf32> to vector<16x64xbf16>
    %c0_298 = arith.constant 0 : index
    %c0_299 = arith.constant 0 : index
    %545 = vector.load %arg29[%c0_298, %c0_299] : memref<64x32xbf16, #tpu.memory_space<vmem>>, vector<64x32xbf16>
    %cst_300 = arith.constant dense<0.000000e+00> : vector<16x32xf32>
    %546 = tpu.matmul %544, %545, %cst_300 {dimension_numbers = #tpu.dot_dimension_numbers<[1], [0], [0], [1], [0, 0, 1, 1], [], []>} : vector<16x64xbf16>, vector<64x32xbf16>, vector<16x32xf32> -> vector<16x32xf32>
    %c0_301 = arith.constant 0 : index
    %c0_302 = arith.constant 0 : index
    %547 = vector.load %arg30[%c0_301, %c0_302] : memref<1x32xf32, #tpu.memory_space<vmem>>, vector<1x32xf32>
    %548 = vector.broadcast %547 : vector<1x32xf32> to vector<16x32xf32>
    %549 = arith.addf %546, %548 : vector<16x32xf32>
    %550 = arith.addf %535, %549 : vector<16x32xf32>
    %c0_303 = arith.constant 0 : index
    %c0_304 = arith.constant 0 : index
    %551 = vector.load %arg31[%c0_303, %c0_304] : memref<1x32xf32, #tpu.memory_space<vmem>>, vector<1x32xf32>
    %c0_305 = arith.constant 0 : index
    %c0_306 = arith.constant 0 : index
    %552 = vector.load %arg32[%c0_305, %c0_306] : memref<1x32xf32, #tpu.memory_space<vmem>>, vector<1x32xf32>
    %cst_307 = arith.constant dense<0.000000e+00> : vector<16xf32>
    %553 = vector.multi_reduction <add>, %550, %cst_307 [1] : vector<16x32xf32> to vector<16xf32>
    %554 = vector.shape_cast %553 : vector<16xf32> to vector<16x1xf32>
    %cst_308 = arith.constant 3.200000e+01 : f32
    %555 = vector.broadcast %cst_308 : f32 to vector<16x1xf32>
    %556 = arith.divf %554, %555 : vector<16x1xf32>
    %557 = vector.broadcast %556 : vector<16x1xf32> to vector<16x32xf32>
    %558 = arith.subf %550, %557 : vector<16x32xf32>
    %559 = arith.mulf %558, %558 : vector<16x32xf32>
    %cst_309 = arith.constant dense<0.000000e+00> : vector<16xf32>
    %560 = vector.multi_reduction <add>, %559, %cst_309 [1] : vector<16x32xf32> to vector<16xf32>
    %561 = vector.shape_cast %560 : vector<16xf32> to vector<16x1xf32>
    %cst_310 = arith.constant 3.200000e+01 : f32
    %562 = vector.broadcast %cst_310 : f32 to vector<16x1xf32>
    %563 = arith.divf %561, %562 : vector<16x1xf32>
    %cst_311 = arith.constant 9.99999974E-6 : f32
    %564 = vector.broadcast %cst_311 : f32 to vector<16x1xf32>
    %565 = arith.addf %563, %564 : vector<16x1xf32>
    %566 = math.rsqrt %565 : vector<16x1xf32>
    %567 = vector.broadcast %566 : vector<16x1xf32> to vector<16x32xf32>
    %568 = arith.mulf %558, %567 : vector<16x32xf32>
    %569 = vector.broadcast %551 : vector<1x32xf32> to vector<16x32xf32>
    %570 = arith.mulf %568, %569 : vector<16x32xf32>
    %571 = vector.broadcast %552 : vector<1x32xf32> to vector<16x32xf32>
    %572 = arith.addf %570, %571 : vector<16x32xf32>
    %573 = arith.truncf %572 : vector<16x32xf32> to vector<16x32xbf16>
    %c0_312 = arith.constant 0 : index
    %c0_313 = arith.constant 0 : index
    %574 = vector.load %arg33[%c0_312, %c0_313] : memref<32x8xbf16, #tpu.memory_space<vmem>>, vector<32x8xbf16>
    %cst_314 = arith.constant dense<0.000000e+00> : vector<16x8xf32>
    %575 = tpu.matmul %573, %574, %cst_314 {dimension_numbers = #tpu.dot_dimension_numbers<[1], [0], [0], [1], [0, 0, 1, 1], [], []>} : vector<16x32xbf16>, vector<32x8xbf16>, vector<16x8xf32> -> vector<16x8xf32>
    %c0_315 = arith.constant 0 : index
    %c0_316 = arith.constant 0 : index
    %576 = vector.load %arg34[%c0_315, %c0_316] : memref<1x8xf32, #tpu.memory_space<vmem>>, vector<1x8xf32>
    %577 = vector.broadcast %576 : vector<1x8xf32> to vector<16x8xf32>
    %578 = arith.addf %575, %577 : vector<16x8xf32>
    %579 = vector.extract_strided_slice %578 {offsets = [7, 0], sizes = [1, 8], strides = [1, 1]} : vector<16x8xf32> to vector<1x8xf32>
    %c0_317 = arith.constant 0 : index
    %c0_318 = arith.constant 0 : index
    %580 = vector.load %arg35[%c0_317, %c0_318] : memref<2x8xf32, #tpu.memory_space<vmem>>, vector<1x8xf32>
    tpu.vector_store %arg35[%c0_317, %c0_318], %579 {strides = array<i32>} : memref<2x8xf32, #tpu.memory_space<vmem>>, vector<1x8xf32>,
    %581 = vector.extract_strided_slice %578 {offsets = [15, 0], sizes = [1, 8], strides = [1, 1]} : vector<16x8xf32> to vector<1x8xf32>
    %c1_319 = arith.constant 1 : index
    %c0_320 = arith.constant 0 : index
    %582 = vector.load %arg35[%c1_319, %c0_320] : memref<2x8xf32, #tpu.memory_space<vmem>>, vector<1x8xf32>
    tpu.vector_store %arg35[%c1_319, %c0_320], %581 {strides = array<i32>} : memref<2x8xf32, #tpu.memory_space<vmem>>, vector<1x8xf32>,
    return
  }
}

</mosaic_0001>

<llo_original>
// kernel: attention_transformer_forward.1
$region0: #{attention_transformer_forward.1}
  #allocation0 [shape = 'u32[]', space=smem, size = 0x4, offset = 0x4, fixed_abs, tag = 'smem constant byte address 0x4 - core index']
  #allocation1 [shape = 'u32[144,128]{1,0:T(1,128)}', space=vmem, size = 0x12000, scoped, tag = 'internal scratch']
  %s0 = inlined_call_operand.smem [shape: u32[36], index: -1, kind: input, shape index: {}]
  %s1 = sld [smem:[%s0]]
  %s2 = scalar_lea.smem %s0, 1
  %s3 = sld [smem:[%s2]]
  %s4 = scalar_lea.smem %s0, 2
  %s5 = sld [smem:[%s4]]
  %s6 = scalar_lea.smem %s0, 3
  %s7 = sld [smem:[%s6]]
  %s8 = scalar_lea.smem %s0, 4
  %s9 = sld [smem:[%s8]]
  %s10 = scalar_lea.smem %s0, 5
  %s11 = sld [smem:[%s10]]
  %s12 = scalar_lea.smem %s0, 6
  %s13 = sld [smem:[%s12]]
  %s14 = scalar_lea.smem %s0, 7
  %s15 = sld [smem:[%s14]]
  %s16 = scalar_lea.smem %s0, 8
  %s17 = sld [smem:[%s16]]
  %s18 = scalar_lea.smem %s0, 9
  %s19 = sld [smem:[%s18]]
  %s20 = scalar_lea.smem %s0, 10
  %s21 = sld [smem:[%s20]]
  %s22 = scalar_lea.smem %s0, 11
  %s23 = sld [smem:[%s22]]
  %s24 = scalar_lea.smem %s0, 12
  %s25 = sld [smem:[%s24]]
  %s26 = scalar_lea.smem %s0, 13
  %s27 = sld [smem:[%s26]]
  %s28 = scalar_lea.smem %s0, 14
  %s29 = sld [smem:[%s28]]
  %s30 = scalar_lea.smem %s0, 15
  %s31 = sld [smem:[%s30]]
  %s32 = scalar_lea.smem %s0, 16
  %s33 = sld [smem:[%s32]]
  %s34 = scalar_lea.smem %s0, 17
  %s35 = sld [smem:[%s34]]
  %s36 = scalar_lea.smem %s0, 18
  %s37 = sld [smem:[%s36]]
  %s38 = scalar_lea.smem %s0, 19
  %s39 = sld [smem:[%s38]]
  %s40 = scalar_lea.smem %s0, 20
  %s41 = sld [smem:[%s40]]
  %s42 = scalar_lea.smem %s0, 21
  %s43 = sld [smem:[%s42]]
  %s44 = scalar_lea.smem %s0, 22
  %s45 = sld [smem:[%s44]]
  %s46 = scalar_lea.smem %s0, 23
  %s47 = sld [smem:[%s46]]
  %s48 = scalar_lea.smem %s0, 24
  %s49 = sld [smem:[%s48]]
  %s50 = scalar_lea.smem %s0, 25
  %s51 = sld [smem:[%s50]]
  %s52 = scalar_lea.smem %s0, 26
  %s53 = sld [smem:[%s52]]
  %s54 = scalar_lea.smem %s0, 27
  %s55 = sld [smem:[%s54]]
  %s56 = scalar_lea.smem %s0, 28
  %s57 = sld [smem:[%s56]]
  %s58 = scalar_lea.smem %s0, 29
  %s59 = sld [smem:[%s58]]
  %s60 = scalar_lea.smem %s0, 30
  %s61 = sld [smem:[%s60]]
  %s62 = scalar_lea.smem %s0, 31
  %s63 = sld [smem:[%s62]]
  %s64 = scalar_lea.smem %s0, 32
  %s65 = sld [smem:[%s64]]
  %s66 = scalar_lea.smem %s0, 33
  %s67 = sld [smem:[%s66]]
  %s68 = scalar_lea.smem %s0, 34
  %s69 = sld [smem:[%s68]]
  %s70 = scalar_lea.smem %s0, 35
  %s71 = sld [smem:[%s70]]
  %s72 = sld [smem:[#allocation0]]
  $region150: #{attention_transformer_forward.1} parent=0
    _
  %s74 = ssub.s32 1, %s72
  %s75 = scalar_select 0, %s74, %s72
  $region1: #{attention_transformer_forward.1} parent=0
    #allocation2 [shape = 'u8[1024]{0}', space=vmem, size = 0x400, scoped, tag = 'output window, operand 0, single buffered']
    #allocation3 [shape = 's32[1]{0}', space=sflag, size = 0x4, scoped, tag = 'scoped memory for attention_transformer_forward.1']
    %76 = vsyncpa [#allocation3], 0
    // Predicated region
    $region2: #{attention_transformer_forward.1} parent=1 // pred_check
      _
    $region3: #{attention_transformer_forward.1} parent=1 // pred_check_branch
      %78 = sbr.rel (0) target = $region5
    $region4: #{attention_transformer_forward.1} parent=1 // pred_region
      _
    $region5: #{attention_transformer_forward.1} parent=1 // pred_fallthru
      _
    // Predicated region
    $region6: #{attention_transformer_forward.1} parent=1 // pred_check
      _
    $region7: #{attention_transformer_forward.1} parent=1 // pred_check_branch
      %80 = sbr.rel (0) target = $region9
    $region8: #{attention_transformer_forward.1} parent=1 // pred_region
      _
    $region9: #{attention_transformer_forward.1} parent=1 // pred_fallthru
      _
    // Predicated region
    $region10: #{attention_transformer_forward.1} parent=1 // pred_check
      _
    $region11: #{attention_transformer_forward.1} parent=1 // pred_check_branch
      %82 = sbr.rel (0) target = $region13
    $region12: #{attention_transformer_forward.1} parent=1 // pred_region
      _
    $region13: #{attention_transformer_forward.1} parent=1 // pred_fallthru
      _
    // Predicated region
    $region14: #{attention_transformer_forward.1} parent=1 // pred_check
      _
    $region15: #{attention_transformer_forward.1} parent=1 // pred_check_branch
      %84 = sbr.rel (0) target = $region17
    $region16: #{attention_transformer_forward.1} parent=1 // pred_region
      _
    $region17: #{attention_transformer_forward.1} parent=1 // pred_fallthru
      _
    // Predicated region
    $region18: #{attention_transformer_forward.1} parent=1 // pred_check
      _
    $region19: #{attention_transformer_forward.1} parent=1 // pred_check_branch
      %86 = sbr.rel (0) target = $region21
    $region20: #{attention_transformer_forward.1} parent=1 // pred_region
      _
    $region21: #{attention_transformer_forward.1} parent=1 // pred_fallthru
      _
    // Predicated region
    $region22: #{attention_transformer_forward.1} parent=1 // pred_check
      _
    $region23: #{attention_transformer_forward.1} parent=1 // pred_check_branch
      %88 = sbr.rel (0) target = $region25
    $region24: #{attention_transformer_forward.1} parent=1 // pred_region
      _
    $region25: #{attention_transformer_forward.1} parent=1 // pred_fallthru
      _
    // Predicated region
    $region26: #{attention_transformer_forward.1} parent=1 // pred_check
      _
    $region27: #{attention_transformer_forward.1} parent=1 // pred_check_branch
      %90 = sbr.rel (0) target = $region29
    $region28: #{attention_transformer_forward.1} parent=1 // pred_region
      _
    $region29: #{attention_transformer_forward.1} parent=1 // pred_fallthru
      _
    // Predicated region
    $region30: #{attention_transformer_forward.1} parent=1 // pred_check
      _
    $region31: #{attention_transformer_forward.1} parent=1 // pred_check_branch
      %92 = sbr.rel (0) target = $region33
    $region32: #{attention_transformer_forward.1} parent=1 // pred_region
      _
    $region33: #{attention_transformer_forward.1} parent=1 // pred_fallthru
      _
    // Predicated region
    $region34: #{attention_transformer_forward.1} parent=1 // pred_check
      _
    $region35: #{attention_transformer_forward.1} parent=1 // pred_check_branch
      %94 = sbr.rel (0) target = $region37
    $region36: #{attention_transformer_forward.1} parent=1 // pred_region
      _
    $region37: #{attention_transformer_forward.1} parent=1 // pred_fallthru
      _
    // Predicated region
    $region38: #{attention_transformer_forward.1} parent=1 // pred_check
      _
    $region39: #{attention_transformer_forward.1} parent=1 // pred_check_branch
      %96 = sbr.rel (0) target = $region41
    $region40: #{attention_transformer_forward.1} parent=1 // pred_region
      _
    $region41: #{attention_transformer_forward.1} parent=1 // pred_fallthru
      _
    // Predicated region
    $region42: #{attention_transformer_forward.1} parent=1 // pred_check
      _
    $region43: #{attention_transformer_forward.1} parent=1 // pred_check_branch
      %98 = sbr.rel (0) target = $region45
    $region44: #{attention_transformer_forward.1} parent=1 // pred_region
      _
    $region45: #{attention_transformer_forward.1} parent=1 // pred_fallthru
      _
    // Predicated region
    $region46: #{attention_transformer_forward.1} parent=1 // pred_check
      _
    $region47: #{attention_transformer_forward.1} parent=1 // pred_check_branch
      %100 = sbr.rel (0) target = $region49
    $region48: #{attention_transformer_forward.1} parent=1 // pred_region
      _
    $region49: #{attention_transformer_forward.1} parent=1 // pred_fallthru
      _
    // Predicated region
    $region50: #{attention_transformer_forward.1} parent=1 // pred_check
      _
    $region51: #{attention_transformer_forward.1} parent=1 // pred_check_branch
      %102 = sbr.rel (0) target = $region53
    $region52: #{attention_transformer_forward.1} parent=1 // pred_region
      _
    $region53: #{attention_transformer_forward.1} parent=1 // pred_fallthru
      _
    // Predicated region
    $region54: #{attention_transformer_forward.1} parent=1 // pred_check
      _
    $region55: #{attention_transformer_forward.1} parent=1 // pred_check_branch
      %104 = sbr.rel (0) target = $region57
    $region56: #{attention_transformer_forward.1} parent=1 // pred_region
      _
    $region57: #{attention_transformer_forward.1} parent=1 // pred_fallthru
      _
    // Predicated region
    $region58: #{attention_transformer_forward.1} parent=1 // pred_check
      _
    $region59: #{attention_transformer_forward.1} parent=1 // pred_check_branch
      %106 = sbr.rel (0) target = $region61
    $region60: #{attention_transformer_forward.1} parent=1 // pred_region
      _
    $region61: #{attention_transformer_forward.1} parent=1 // pred_fallthru
      _
    // Predicated region
    $region62: #{attention_transformer_forward.1} parent=1 // pred_check
      _
    $region63: #{attention_transformer_forward.1} parent=1 // pred_check_branch
      %108 = sbr.rel (0) target = $region65
    $region64: #{attention_transformer_forward.1} parent=1 // pred_region
      _
    $region65: #{attention_transformer_forward.1} parent=1 // pred_fallthru
      _
    // Predicated region
    $region66: #{attention_transformer_forward.1} parent=1 // pred_check
      _
    $region67: #{attention_transformer_forward.1} parent=1 // pred_check_branch
      %110 = sbr.rel (0) target = $region69
    $region68: #{attention_transformer_forward.1} parent=1 // pred_region
      _
    $region69: #{attention_transformer_forward.1} parent=1 // pred_fallthru
      _
    // Predicated region
    $region70: #{attention_transformer_forward.1} parent=1 // pred_check
      _
    $region71: #{attention_transformer_forward.1} parent=1 // pred_check_branch
      %112 = sbr.rel (0) target = $region73
    $region72: #{attention_transformer_forward.1} parent=1 // pred_region
      _
    $region73: #{attention_transformer_forward.1} parent=1 // pred_fallthru
      _
    // Predicated region
    $region74: #{attention_transformer_forward.1} parent=1 // pred_check
      _
    $region75: #{attention_transformer_forward.1} parent=1 // pred_check_branch
      %114 = sbr.rel (0) target = $region77
    $region76: #{attention_transformer_forward.1} parent=1 // pred_region
      _
    $region77: #{attention_transformer_forward.1} parent=1 // pred_fallthru
      _
    // Predicated region
    $region78: #{attention_transformer_forward.1} parent=1 // pred_check
      _
    $region79: #{attention_transformer_forward.1} parent=1 // pred_check_branch
      %116 = sbr.rel (0) target = $region81
    $region80: #{attention_transformer_forward.1} parent=1 // pred_region
      _
    $region81: #{attention_transformer_forward.1} parent=1 // pred_fallthru
      _
    // Predicated region
    $region82: #{attention_transformer_forward.1} parent=1 // pred_check
      _
    $region83: #{attention_transformer_forward.1} parent=1 // pred_check_branch
      %118 = sbr.rel (0) target = $region85
    $region84: #{attention_transformer_forward.1} parent=1 // pred_region
      _
    $region85: #{attention_transformer_forward.1} parent=1 // pred_fallthru
      _
    // Predicated region
    $region86: #{attention_transformer_forward.1} parent=1 // pred_check
      _
    $region87: #{attention_transformer_forward.1} parent=1 // pred_check_branch
      %120 = sbr.rel (0) target = $region89
    $region88: #{attention_transformer_forward.1} parent=1 // pred_region
      _
    $region89: #{attention_transformer_forward.1} parent=1 // pred_fallthru
      _
    // Predicated region
    $region90: #{attention_transformer_forward.1} parent=1 // pred_check
      _
    $region91: #{attention_transformer_forward.1} parent=1 // pred_check_branch
      %122 = sbr.rel (0) target = $region93
    $region92: #{attention_transformer_forward.1} parent=1 // pred_region
      _
    $region93: #{attention_transformer_forward.1} parent=1 // pred_fallthru
      _
    // Predicated region
    $region94: #{attention_transformer_forward.1} parent=1 // pred_check
      _
    $region95: #{attention_transformer_forward.1} parent=1 // pred_check_branch
      %124 = sbr.rel (0) target = $region97
    $region96: #{attention_transformer_forward.1} parent=1 // pred_region
      _
    $region97: #{attention_transformer_forward.1} parent=1 // pred_fallthru
      _
    // Predicated region
    $region98: #{attention_transformer_forward.1} parent=1 // pred_check
      _
    $region99: #{attention_transformer_forward.1} parent=1 // pred_check_branch
      %126 = sbr.rel (0) target = $region101
    $region100: #{attention_transformer_forward.1} parent=1 // pred_region
      _
    $region101: #{attention_transformer_forward.1} parent=1 // pred_fallthru
      _
    // Predicated region
    $region102: #{attention_transformer_forward.1} parent=1 // pred_check
      _
    $region103: #{attention_transformer_forward.1} parent=1 // pred_check_branch
      %128 = sbr.rel (0) target = $region105
    $region104: #{attention_transformer_forward.1} parent=1 // pred_region
      _
    $region105: #{attention_transformer_forward.1} parent=1 // pred_fallthru
      _
    // Predicated region
    $region106: #{attention_transformer_forward.1} parent=1 // pred_check
      _
    $region107: #{attention_transformer_forward.1} parent=1 // pred_check_branch
      %130 = sbr.rel (0) target = $region109
    $region108: #{attention_transformer_forward.1} parent=1 // pred_region
      _
    $region109: #{attention_transformer_forward.1} parent=1 // pred_fallthru
      _
    // Predicated region
    $region110: #{attention_transformer_forward.1} parent=1 // pred_check
      _
    $region111: #{attention_transformer_forward.1} parent=1 // pred_check_branch
      %132 = sbr.rel (0) target = $region113
    $region112: #{attention_transformer_forward.1} parent=1 // pred_region
      _
    $region113: #{attention_transformer_forward.1} parent=1 // pred_fallthru
      _
    // Predicated region
    $region114: #{attention_transformer_forward.1} parent=1 // pred_check
      _
    $region115: #{attention_transformer_forward.1} parent=1 // pred_check_branch
      %134 = sbr.rel (0) target = $region117
    $region116: #{attention_transformer_forward.1} parent=1 // pred_region
      _
    $region117: #{attention_transformer_forward.1} parent=1 // pred_fallthru
      _
    // Predicated region
    $region118: #{attention_transformer_forward.1} parent=1 // pred_check
      _
    $region119: #{attention_transformer_forward.1} parent=1 // pred_check_branch
      %136 = sbr.rel (0) target = $region121
    $region120: #{attention_transformer_forward.1} parent=1 // pred_region
      _
    $region121: #{attention_transformer_forward.1} parent=1 // pred_fallthru
      _
    // Predicated region
    $region122: #{attention_transformer_forward.1} parent=1 // pred_check
      _
    $region123: #{attention_transformer_forward.1} parent=1 // pred_check_branch
      %138 = sbr.rel (0) target = $region125
    $region124: #{attention_transformer_forward.1} parent=1 // pred_region
      _
    $region125: #{attention_transformer_forward.1} parent=1 // pred_fallthru
      _
    // Predicated region
    $region126: #{attention_transformer_forward.1} parent=1 // pred_check
      _
    $region127: #{attention_transformer_forward.1} parent=1 // pred_check_branch
      %140 = sbr.rel (0) target = $region129
    $region128: #{attention_transformer_forward.1} parent=1 // pred_region
      _
    $region129: #{attention_transformer_forward.1} parent=1 // pred_fallthru
      _
    // Predicated region
    $region130: #{attention_transformer_forward.1} parent=1 // pred_check
      _
    $region131: #{attention_transformer_forward.1} parent=1 // pred_check_branch
      %142 = sbr.rel (0) target = $region133
    $region132: #{attention_transformer_forward.1} parent=1 // pred_region
      _
    $region133: #{attention_transformer_forward.1} parent=1 // pred_fallthru
      _
    // Predicated region
    $region134: #{attention_transformer_forward.1} parent=1 // pred_check
      _
    $region135: #{attention_transformer_forward.1} parent=1 // pred_check_branch
      %144 = sbr.rel (0) target = $region137
    $region136: #{attention_transformer_forward.1} parent=1 // pred_region
      _
    $region137: #{attention_transformer_forward.1} parent=1 // pred_fallthru
      _
    // Predicated region
    $region138: #{attention_transformer_forward.1} parent=1 // pred_check
      _
    $region139: #{attention_transformer_forward.1} parent=1 // pred_check_branch
      %146 = sbr.rel (0) target = $region141
    $region140: #{attention_transformer_forward.1} parent=1 // pred_region
      _
    $region141: #{attention_transformer_forward.1} parent=1 // pred_fallthru
      _
    %v148 = vld [vmem:[%s1] sm:$0xff]
    %v149 = vld [vmem:[%s1 + $0x8] sm:$0xff]
    %v150 = vpack.c.bf16 %v149, %v148
    %v151 = vld [vmem:[%s3] sm:$0xf]
    %v152 = vld [vmem:[%s3 + $0x4] sm:$0xf]
    %v153 = vld [vmem:[%s5] sm:$0x1]
    %v155 = vlaneseq
    %v156 = vshrl.u32 %v155, 7
    %v157 = vsub.s32 0, %v156
    %v158 = vrot.slane %v153, %v157
    %v162 = vunpack.c.l.b16 %v151
    %v163 = vunpack.c.l.b16 %v152
    %v164 = vpack.c.b16 %v163, %v162
    %vm166 = vcmask 130048
    %v168 = vsel %vm166, %v150, 0
    %170 = vmatprep.subr.bf16.mxu0 0
    %171 = vmatpush1.bf16.msra.mxu0 %v164
    %172 = vmatprep.subr.bf16.mxu0 0
    %173 = vmatpush1.bf16.msra.mxu0 0
    %174 = vmatprep.subr.bf16.mxu0 0
    %175 = vmatpush1.bf16.msra.mxu0 0
    %176 = vmatprep.subr.bf16.mxu0 0
    %177 = vmatpush1.bf16.msra.mxu0 0
    %178 = vmatprep.subr.bf16.mxu0 0
    %179 = vmatpush1.bf16.msra.mxu0 0
    %180 = vmatprep.subr.bf16.mxu0 0
    %181 = vmatpush1.bf16.msra.mxu0 0
    %182 = vmatprep.subr.bf16.mxu0 0
    %183 = vmatpush1.bf16.msra.mxu0 0
    %184 = vmatprep.subr.bf16.mxu0 0
    %185 = vmatpush1.bf16.msra.mxu0 0
    %186 = vmatprep.subr.bf16.mxu0 0
    %187 = vmatpush1.bf16.msra.mxu0 0
    %188 = vmatprep.subr.bf16.mxu0 0
    %189 = vmatpush1.bf16.msra.mxu0 0
    %190 = vmatprep.subr.bf16.mxu0 0
    %191 = vmatpush1.bf16.msra.mxu0 0
    %192 = vmatprep.subr.bf16.mxu0 0
    %193 = vmatpush1.bf16.msra.mxu0 0
    %194 = vmatprep.subr.bf16.mxu0 0
    %195 = vmatpush1.bf16.msra.mxu0 0
    %196 = vmatprep.subr.bf16.mxu0 0
    %197 = vmatpush1.bf16.msra.mxu0 0
    %198 = vmatprep.subr.bf16.mxu0 0
    %199 = vmatpush1.bf16.msra.mxu0 0
    %200 = vmatprep.subr.bf16.mxu0 0
    %201 = vmatpush1.bf16.msra.mxu0 0
    %202 = vmatprep.mubr.bf16.mxu0 0
    %203 = vmatmul.mubr.bf16.gmra.mrb[0].mxu0 %v168
    %v204 = vpop.f32.mrb[0].mxu0
    %v205 = vadd.f32 %v158, %v204
    %v206 = vpop.f32.mrb[0].mxu0
    %v207 = vpop.f32.mrb[0].mxu0
    %v208 = vadd.f32 %v158, %v207
    %v209 = vpop.f32.mrb[0].mxu0
    %210 = vdwg.mxu0
    %v211 = vpack.c.bf16 %v208, %v205
    %v212 = vld [vmem:[%s7] sm:$0xf]
    %v213 = vld [vmem:[%s7 + $0x4] sm:$0xf]
    %v214 = vld [vmem:[%s7 + $0x8] sm:$0xf]
    %v215 = vld [vmem:[%s7 + $0xc] sm:$0xf]
    %v216 = vld [vmem:[%s9] sm:$0x1]
    %v218 = vlaneseq
    %v219 = vshrl.u32 %v218, 7
    %v220 = vsub.s32 0, %v219
    %v221 = vrot.slane %v216, %v220
    %v227 = vunpack.c.l.b16 %v212
    %v228 = vunpack.c.l.b16 %v213
    %v229 = vunpack.c.l.b16 %v214
    %v230 = vunpack.c.l.b16 %v215
    %v231 = vpack.c.b16 %v228, %v227
    %v232 = vpack.c.b16 %v230, %v229
    %vm235 = vcmask 261120
    %v237 = vsel %vm235, %v211, 0
    %239 = vmatprep.subr.bf16.mxu0 0
    %240 = vmatpush1.bf16.msra.mxu0 %v231
    %241 = vmatprep.subr.bf16.mxu0 0
    %242 = vmatpush1.bf16.msra.mxu0 %v232
    %243 = vmatprep.subr.bf16.mxu0 0
    %244 = vmatpush1.bf16.msra.mxu0 0
    %245 = vmatprep.subr.bf16.mxu0 0
    %246 = vmatpush1.bf16.msra.mxu0 0
    %247 = vmatprep.subr.bf16.mxu0 0
    %248 = vmatpush1.bf16.msra.mxu0 0
    %249 = vmatprep.subr.bf16.mxu0 0
    %250 = vmatpush1.bf16.msra.mxu0 0
    %251 = vmatprep.subr.bf16.mxu0 0
    %252 = vmatpush1.bf16.msra.mxu0 0
    %253 = vmatprep.subr.bf16.mxu0 0
    %254 = vmatpush1.bf16.msra.mxu0 0
    %255 = vmatprep.subr.bf16.mxu0 0
    %256 = vmatpush1.bf16.msra.mxu0 0
    %257 = vmatprep.subr.bf16.mxu0 0
    %258 = vmatpush1.bf16.msra.mxu0 0
    %259 = vmatprep.subr.bf16.mxu0 0
    %260 = vmatpush1.bf16.msra.mxu0 0
    %261 = vmatprep.subr.bf16.mxu0 0
    %262 = vmatpush1.bf16.msra.mxu0 0
    %263 = vmatprep.subr.bf16.mxu0 0
    %264 = vmatpush1.bf16.msra.mxu0 0
    %265 = vmatprep.subr.bf16.mxu0 0
    %266 = vmatpush1.bf16.msra.mxu0 0
    %267 = vmatprep.subr.bf16.mxu0 0
    %268 = vmatpush1.bf16.msra.mxu0 0
    %269 = vmatprep.subr.bf16.mxu0 0
    %270 = vmatpush1.bf16.msra.mxu0 0
    %271 = vmatprep.mubr.bf16.mxu0 0
    %272 = vmatmul.mubr.bf16.gmra.mrb[0].mxu0 %v237
    %v273 = vpop.f32.mrb[0].mxu0
    %v274 = vadd.f32 %v221, %v273
    %v275 = vpop.f32.mrb[0].mxu0
    %v276 = vpop.f32.mrb[0].mxu0
    %v277 = vadd.f32 %v221, %v276
    %v278 = vpop.f32.mrb[0].mxu0
    %279 = vdwg.mxu0
    %v280 = vld [vmem:[%s11] sm:$0xf]
    %v281 = vld [vmem:[%s11 + $0x4] sm:$0xf]
    %v282 = vld [vmem:[%s11 + $0x8] sm:$0xf]
    %v283 = vld [vmem:[%s11 + $0xc] sm:$0xf]
    %v284 = vld [vmem:[%s13] sm:$0x1]
    %v286 = vlaneseq
    %v287 = vshrl.u32 %v286, 7
    %v288 = vsub.s32 0, %v287
    %v289 = vrot.slane %v284, %v288
    %v295 = vunpack.c.l.b16 %v280
    %v296 = vunpack.c.l.b16 %v281
    %v297 = vunpack.c.l.b16 %v282
    %v298 = vunpack.c.l.b16 %v283
    %v299 = vpack.c.b16 %v296, %v295
    %v300 = vpack.c.b16 %v298, %v297
    %303 = vmatprep.subr.bf16.mxu0 0
    %304 = vmatpush1.bf16.msra.mxu0 %v299
    %305 = vmatprep.subr.bf16.mxu0 0
    %306 = vmatpush1.bf16.msra.mxu0 %v300
    %307 = vmatprep.subr.bf16.mxu0 0
    %308 = vmatpush1.bf16.msra.mxu0 0
    %309 = vmatprep.subr.bf16.mxu0 0
    %310 = vmatpush1.bf16.msra.mxu0 0
    %311 = vmatprep.subr.bf16.mxu0 0
    %312 = vmatpush1.bf16.msra.mxu0 0
    %313 = vmatprep.subr.bf16.mxu0 0
    %314 = vmatpush1.bf16.msra.mxu0 0
    %315 = vmatprep.subr.bf16.mxu0 0
    %316 = vmatpush1.bf16.msra.mxu0 0
    %317 = vmatprep.subr.bf16.mxu0 0
    %318 = vmatpush1.bf16.msra.mxu0 0
    %319 = vmatprep.subr.bf16.mxu0 0
    %320 = vmatpush1.bf16.msra.mxu0 0
    %321 = vmatprep.subr.bf16.mxu0 0
    %322 = vmatpush1.bf16.msra.mxu0 0
    %323 = vmatprep.subr.bf16.mxu0 0
    %324 = vmatpush1.bf16.msra.mxu0 0
    %325 = vmatprep.subr.bf16.mxu0 0
    %326 = vmatpush1.bf16.msra.mxu0 0
    %327 = vmatprep.subr.bf16.mxu0 0
    %328 = vmatpush1.bf16.msra.mxu0 0
    %329 = vmatprep.subr.bf16.mxu0 0
    %330 = vmatpush1.bf16.msra.mxu0 0
    %331 = vmatprep.subr.bf16.mxu0 0
    %332 = vmatpush1.bf16.msra.mxu0 0
    %333 = vmatprep.subr.bf16.mxu0 0
    %334 = vmatpush1.bf16.msra.mxu0 0
    %335 = vmatprep.mubr.bf16.mxu0 0
    %336 = vmatmul.mubr.bf16.gmra.mrb[0].mxu0 %v237
    %v337 = vpop.f32.mrb[0].mxu0
    %v338 = vadd.f32 %v289, %v337
    %v339 = vpop.f32.mrb[0].mxu0
    %v340 = vpop.f32.mrb[0].mxu0
    %v341 = vadd.f32 %v289, %v340
    %v342 = vpop.f32.mrb[0].mxu0
    %343 = vdwg.mxu0
    %v344 = vld [vmem:[%s15] sm:$0xf]
    %v345 = vld [vmem:[%s15 + $0x4] sm:$0xf]
    %v346 = vld [vmem:[%s15 + $0x8] sm:$0xf]
    %v347 = vld [vmem:[%s15 + $0xc] sm:$0xf]
    %v348 = vld [vmem:[%s17] sm:$0x1]
    %v350 = vlaneseq
    %v351 = vshrl.u32 %v350, 7
    %v352 = vsub.s32 0, %v351
    %v353 = vrot.slane %v348, %v352
    %v359 = vunpack.c.l.b16 %v344
    %v360 = vunpack.c.l.b16 %v345
    %v361 = vunpack.c.l.b16 %v346
    %v362 = vunpack.c.l.b16 %v347
    %v363 = vpack.c.b16 %v360, %v359
    %v364 = vpack.c.b16 %v362, %v361
    %367 = vmatprep.subr.bf16.mxu0 0
    %368 = vmatpush1.bf16.msra.mxu0 %v363
    %369 = vmatprep.subr.bf16.mxu0 0
    %370 = vmatpush1.bf16.msra.mxu0 %v364
    %371 = vmatprep.subr.bf16.mxu0 0
    %372 = vmatpush1.bf16.msra.mxu0 0
    %373 = vmatprep.subr.bf16.mxu0 0
    %374 = vmatpush1.bf16.msra.mxu0 0
    %375 = vmatprep.subr.bf16.mxu0 0
    %376 = vmatpush1.bf16.msra.mxu0 0
    %377 = vmatprep.subr.bf16.mxu0 0
    %378 = vmatpush1.bf16.msra.mxu0 0
    %379 = vmatprep.subr.bf16.mxu0 0
    %380 = vmatpush1.bf16.msra.mxu0 0
    %381 = vmatprep.subr.bf16.mxu0 0
    %382 = vmatpush1.bf16.msra.mxu0 0
    %383 = vmatprep.subr.bf16.mxu0 0
    %384 = vmatpush1.bf16.msra.mxu0 0
    %385 = vmatprep.subr.bf16.mxu0 0
    %386 = vmatpush1.bf16.msra.mxu0 0
    %387 = vmatprep.subr.bf16.mxu0 0
    %388 = vmatpush1.bf16.msra.mxu0 0
    %389 = vmatprep.subr.bf16.mxu0 0
    %390 = vmatpush1.bf16.msra.mxu0 0
    %391 = vmatprep.subr.bf16.mxu0 0
    %392 = vmatpush1.bf16.msra.mxu0 0
    %393 = vmatprep.subr.bf16.mxu0 0
    %394 = vmatpush1.bf16.msra.mxu0 0
    %395 = vmatprep.subr.bf16.mxu0 0
    %396 = vmatpush1.bf16.msra.mxu0 0
    %397 = vmatprep.subr.bf16.mxu0 0
    %398 = vmatpush1.bf16.msra.mxu0 0
    %399 = vmatprep.mubr.bf16.mxu0 0
    %400 = vmatmul.mubr.bf16.gmra.mrb[0].mxu0 %v237
    %v401 = vpop.f32.mrb[0].mxu0
    %v402 = vadd.f32 %v353, %v401
    %v403 = vpop.f32.mrb[0].mxu0
    %v404 = vpop.f32.mrb[0].mxu0
    %v405 = vadd.f32 %v353, %v404
    %v406 = vpop.f32.mrb[0].mxu0
    %407 = vdwg.mxu0
    %v408 = vmul.f32 %v274, 0.35355338
    %vm409 = vcmask 64512
    %v411 = vsel %vm409, %v408, 0
    %v414 = vsel %vm409, %v338, 0
    %416 = vmatprep.subr.mxu0 0.0
    %417 = vmatpush1.xpose.msra.mxu0 %v414
    %418 = vmatprep.subr.mxu0 0.0
    %419 = vmatpush1.xpose.msra.mxu0 0.0
    %420 = vmatprep.subr.mxu0 0.0
    %421 = vmatpush1.xpose.msra.mxu0 0.0
    %422 = vmatprep.subr.mxu0 0.0
    %423 = vmatpush1.xpose.msra.mxu0 0.0
    %424 = vmatprep.subr.mxu0 0.0
    %425 = vmatpush1.xpose.msra.mxu0 0.0
    %426 = vmatprep.subr.mxu0 0.0
    %427 = vmatpush1.xpose.msra.mxu0 0.0
    %428 = vmatprep.subr.mxu0 0.0
    %429 = vmatpush1.xpose.msra.mxu0 0.0
    %430 = vmatprep.subr.mxu0 0.0
    %431 = vmatpush1.xpose.msra.mxu0 0.0
    %432 = vmatprep.subr.mxu0 0.0
    %433 = vmatpush1.xpose.msra.mxu0 0.0
    %434 = vmatprep.subr.mxu0 0.0
    %435 = vmatpush1.xpose.msra.mxu0 0.0
    %436 = vmatprep.subr.mxu0 0.0
    %437 = vmatpush1.xpose.msra.mxu0 0.0
    %438 = vmatprep.subr.mxu0 0.0
    %439 = vmatpush1.xpose.msra.mxu0 0.0
    %440 = vmatprep.subr.mxu0 0.0
    %441 = vmatpush1.xpose.msra.mxu0 0.0
    %442 = vmatprep.subr.mxu0 0.0
    %443 = vmatpush1.xpose.msra.mxu0 0.0
    %444 = vmatprep.subr.mxu0 0.0
    %445 = vmatpush1.xpose.msra.mxu0 0.0
    %446 = vmatprep.subr.mxu0 0.0
    %447 = vmatpush1.xpose.msra.mxu0 0.0
    %448 = vmatprep.subr.mxu0 0.0
    %449 = vmatpush1.xpose.msra.mxu0 0.0
    %450 = vmatprep.subr.mxu0 0.0
    %451 = vmatpush1.xpose.msra.mxu0 0.0
    %452 = vmatprep.subr.mxu0 0.0
    %453 = vmatpush1.xpose.msra.mxu0 0.0
    %454 = vmatprep.subr.mxu0 0.0
    %455 = vmatpush1.xpose.msra.mxu0 0.0
    %456 = vmatprep.subr.mxu0 0.0
    %457 = vmatpush1.xpose.msra.mxu0 0.0
    %458 = vmatprep.subr.mxu0 0.0
    %459 = vmatpush1.xpose.msra.mxu0 0.0
    %460 = vmatprep.subr.mxu0 0.0
    %461 = vmatpush1.xpose.msra.mxu0 0.0
    %462 = vmatprep.subr.mxu0 0.0
    %463 = vmatpush1.xpose.msra.mxu0 0.0
    %464 = vmatprep.subr.mxu0 0.0
    %465 = vmatpush1.xpose.msra.mxu0 0.0
    %466 = vmatprep.subr.mxu0 0.0
    %467 = vmatpush1.xpose.msra.mxu0 0.0
    %468 = vmatprep.subr.mxu0 0.0
    %469 = vmatpush1.xpose.msra.mxu0 0.0
    %470 = vmatprep.subr.mxu0 0.0
    %471 = vmatpush1.xpose.msra.mxu0 0.0
    %472 = vmatprep.subr.mxu0 0.0
    %473 = vmatpush1.xpose.msra.mxu0 0.0
    %474 = vmatprep.subr.mxu0 0.0
    %475 = vmatpush1.xpose.msra.mxu0 0.0
    %476 = vmatprep.subr.mxu0 0.0
    %477 = vmatpush1.xpose.msra.mxu0 0.0
    %478 = vmatprep.subr.mxu0 0.0
    %479 = vmatpush1.xpose.msra.mxu0 0.0
    %480 = vmatprep.mubr.f32.mxu0 0.0
    %481 = vmatmul.mubr.f32.gmra.mrb[0].mxu0 %v411
    %v482 = vpop.f32.mrb[0].mxu0
    %v483 = vadd.f32 0.0, %v482
    %v484 = vpop.f32.mrb[0].mxu0
    %485 = vdwg.mxu0
    %v486 = vsel %vm409, %v483, -inf
    %487 = vmax.xlane.f32.xlu0 %v486
    %v488 = vpop.xlane.xlu0 %487
    %v489 = vsub.f32 %v483, %v488
    %v490 = vmul.f32 %v489, 1.442695
    %v491 = vpow.pop %v490
    %v492 = vsel %vm409, %v491, 0.0
    %493 = vadd.xlane.f32.xlu0 %v492
    %v494 = vpop.xlane.xlu0 %493
    %v495 = vrcp.pop %v494
    %v496 = vmul.f32 %v491, %v495
    %v497 = vmul.f32 %v277, 0.35355338
    %v499 = vsel %vm409, %v497, 0
    %v502 = vsel %vm409, %v341, 0
    %504 = vmatprep.subr.mxu0 0.0
    %505 = vmatpush1.xpose.msra.mxu0 %v502
    %506 = vmatprep.subr.mxu0 0.0
    %507 = vmatpush1.xpose.msra.mxu0 0.0
    %508 = vmatprep.subr.mxu0 0.0
    %509 = vmatpush1.xpose.msra.mxu0 0.0
    %510 = vmatprep.subr.mxu0 0.0
    %511 = vmatpush1.xpose.msra.mxu0 0.0
    %512 = vmatprep.subr.mxu0 0.0
    %513 = vmatpush1.xpose.msra.mxu0 0.0
    %514 = vmatprep.subr.mxu0 0.0
    %515 = vmatpush1.xpose.msra.mxu0 0.0
    %516 = vmatprep.subr.mxu0 0.0
    %517 = vmatpush1.xpose.msra.mxu0 0.0
    %518 = vmatprep.subr.mxu0 0.0
    %519 = vmatpush1.xpose.msra.mxu0 0.0
    %520 = vmatprep.subr.mxu0 0.0
    %521 = vmatpush1.xpose.msra.mxu0 0.0
    %522 = vmatprep.subr.mxu0 0.0
    %523 = vmatpush1.xpose.msra.mxu0 0.0
    %524 = vmatprep.subr.mxu0 0.0
    %525 = vmatpush1.xpose.msra.mxu0 0.0
    %526 = vmatprep.subr.mxu0 0.0
    %527 = vmatpush1.xpose.msra.mxu0 0.0
    %528 = vmatprep.subr.mxu0 0.0
    %529 = vmatpush1.xpose.msra.mxu0 0.0
    %530 = vmatprep.subr.mxu0 0.0
    %531 = vmatpush1.xpose.msra.mxu0 0.0
    %532 = vmatprep.subr.mxu0 0.0
    %533 = vmatpush1.xpose.msra.mxu0 0.0
    %534 = vmatprep.subr.mxu0 0.0
    %535 = vmatpush1.xpose.msra.mxu0 0.0
    %536 = vmatprep.subr.mxu0 0.0
    %537 = vmatpush1.xpose.msra.mxu0 0.0
    %538 = vmatprep.subr.mxu0 0.0
    %539 = vmatpush1.xpose.msra.mxu0 0.0
    %540 = vmatprep.subr.mxu0 0.0
    %541 = vmatpush1.xpose.msra.mxu0 0.0
    %542 = vmatprep.subr.mxu0 0.0
    %543 = vmatpush1.xpose.msra.mxu0 0.0
    %544 = vmatprep.subr.mxu0 0.0
    %545 = vmatpush1.xpose.msra.mxu0 0.0
    %546 = vmatprep.subr.mxu0 0.0
    %547 = vmatpush1.xpose.msra.mxu0 0.0
    %548 = vmatprep.subr.mxu0 0.0
    %549 = vmatpush1.xpose.msra.mxu0 0.0
    %550 = vmatprep.subr.mxu0 0.0
    %551 = vmatpush1.xpose.msra.mxu0 0.0
    %552 = vmatprep.subr.mxu0 0.0
    %553 = vmatpush1.xpose.msra.mxu0 0.0
    %554 = vmatprep.subr.mxu0 0.0
    %555 = vmatpush1.xpose.msra.mxu0 0.0
    %556 = vmatprep.subr.mxu0 0.0
    %557 = vmatpush1.xpose.msra.mxu0 0.0
    %558 = vmatprep.subr.mxu0 0.0
    %559 = vmatpush1.xpose.msra.mxu0 0.0
    %560 = vmatprep.subr.mxu0 0.0
    %561 = vmatpush1.xpose.msra.mxu0 0.0
    %562 = vmatprep.subr.mxu0 0.0
    %563 = vmatpush1.xpose.msra.mxu0 0.0
    %564 = vmatprep.subr.mxu0 0.0
    %565 = vmatpush1.xpose.msra.mxu0 0.0
    %566 = vmatprep.subr.mxu0 0.0
    %567 = vmatpush1.xpose.msra.mxu0 0.0
    %568 = vmatprep.mubr.f32.mxu0 0.0
    %569 = vmatmul.mubr.f32.gmra.mrb[0].mxu0 %v499
    %v570 = vpop.f32.mrb[0].mxu0
    %v571 = vadd.f32 0.0, %v570
    %v572 = vpop.f32.mrb[0].mxu0
    %573 = vdwg.mxu0
    %v574 = vsel %vm409, %v571, -inf
    %575 = vmax.xlane.f32.xlu0 %v574
    %v576 = vpop.xlane.xlu0 %575
    %v577 = vsub.f32 %v571, %v576
    %v578 = vmul.f32 %v577, 1.442695
    %v579 = vpow.pop %v578
    %v580 = vsel %vm409, %v579, 0.0
    %581 = vadd.xlane.f32.xlu0 %v580
    %v582 = vpop.xlane.xlu0 %581
    %v583 = vrcp.pop %v582
    %v584 = vmul.f32 %v579, %v583
    %s585 = scalar_lea.vmem %s7, 16
    %v586 = vld [vmem:[%s585] sm:$0xf]
    %v587 = vld [vmem:[%s585 + $0x4] sm:$0xf]
    %v588 = vld [vmem:[%s585 + $0x8] sm:$0xf]
    %v589 = vld [vmem:[%s585 + $0xc] sm:$0xf]
    %s590 = scalar_lea.vmem %s9, 1
    %v591 = vld [vmem:[%s590] sm:$0x1]
    %v593 = vlaneseq
    %v594 = vshrl.u32 %v593, 7
    %v595 = vsub.s32 0, %v594
    %v596 = vrot.slane %v591, %v595
    %v602 = vunpack.c.l.b16 %v586
    %v603 = vunpack.c.l.b16 %v587
    %v604 = vunpack.c.l.b16 %v588
    %v605 = vunpack.c.l.b16 %v589
    %v606 = vpack.c.b16 %v603, %v602
    %v607 = vpack.c.b16 %v605, %v604
    %610 = vmatprep.subr.bf16.mxu0 0
    %611 = vmatpush1.bf16.msra.mxu0 %v606
    %612 = vmatprep.subr.bf16.mxu0 0
    %613 = vmatpush1.bf16.msra.mxu0 %v607
    %614 = vmatprep.subr.bf16.mxu0 0
    %615 = vmatpush1.bf16.msra.mxu0 0
    %616 = vmatprep.subr.bf16.mxu0 0
    %617 = vmatpush1.bf16.msra.mxu0 0
    %618 = vmatprep.subr.bf16.mxu0 0
    %619 = vmatpush1.bf16.msra.mxu0 0
    %620 = vmatprep.subr.bf16.mxu0 0
    %621 = vmatpush1.bf16.msra.mxu0 0
    %622 = vmatprep.subr.bf16.mxu0 0
    %623 = vmatpush1.bf16.msra.mxu0 0
    %624 = vmatprep.subr.bf16.mxu0 0
    %625 = vmatpush1.bf16.msra.mxu0 0
    %626 = vmatprep.subr.bf16.mxu0 0
    %627 = vmatpush1.bf16.msra.mxu0 0
    %628 = vmatprep.subr.bf16.mxu0 0
    %629 = vmatpush1.bf16.msra.mxu0 0
    %630 = vmatprep.subr.bf16.mxu0 0
    %631 = vmatpush1.bf16.msra.mxu0 0
    %632 = vmatprep.subr.bf16.mxu0 0
    %633 = vmatpush1.bf16.msra.mxu0 0
    %634 = vmatprep.subr.bf16.mxu0 0
    %635 = vmatpush1.bf16.msra.mxu0 0
    %636 = vmatprep.subr.bf16.mxu0 0
    %637 = vmatpush1.bf16.msra.mxu0 0
    %638 = vmatprep.subr.bf16.mxu0 0
    %639 = vmatpush1.bf16.msra.mxu0 0
    %640 = vmatprep.subr.bf16.mxu0 0
    %641 = vmatpush1.bf16.msra.mxu0 0
    %642 = vmatprep.mubr.bf16.mxu0 0
    %643 = vmatmul.mubr.bf16.gmra.mrb[0].mxu0 %v237
    %v644 = vpop.f32.mrb[0].mxu0
    %v645 = vadd.f32 %v596, %v644
    %v646 = vpop.f32.mrb[0].mxu0
    %v647 = vpop.f32.mrb[0].mxu0
    %v648 = vadd.f32 %v596, %v647
    %v649 = vpop.f32.mrb[0].mxu0
    %650 = vdwg.mxu0
    %s651 = scalar_lea.vmem %s11, 16
    %v652 = vld [vmem:[%s651] sm:$0xf]
    %v653 = vld [vmem:[%s651 + $0x4] sm:$0xf]
    %v654 = vld [vmem:[%s651 + $0x8] sm:$0xf]
    %v655 = vld [vmem:[%s651 + $0xc] sm:$0xf]
    %s656 = scalar_lea.vmem %s13, 1
    %v657 = vld [vmem:[%s656] sm:$0x1]
    %v659 = vlaneseq
    %v660 = vshrl.u32 %v659, 7
    %v661 = vsub.s32 0, %v660
    %v662 = vrot.slane %v657, %v661
    %v668 = vunpack.c.l.b16 %v652
    %v669 = vunpack.c.l.b16 %v653
    %v670 = vunpack.c.l.b16 %v654
    %v671 = vunpack.c.l.b16 %v655
    %v672 = vpack.c.b16 %v669, %v668
    %v673 = vpack.c.b16 %v671, %v670
    %676 = vmatprep.subr.bf16.mxu0 0
    %677 = vmatpush1.bf16.msra.mxu0 %v672
    %678 = vmatprep.subr.bf16.mxu0 0
    %679 = vmatpush1.bf16.msra.mxu0 %v673
    %680 = vmatprep.subr.bf16.mxu0 0
    %681 = vmatpush1.bf16.msra.mxu0 0
    %682 = vmatprep.subr.bf16.mxu0 0
    %683 = vmatpush1.bf16.msra.mxu0 0
    %684 = vmatprep.subr.bf16.mxu0 0
    %685 = vmatpush1.bf16.msra.mxu0 0
    %686 = vmatprep.subr.bf16.mxu0 0
    %687 = vmatpush1.bf16.msra.mxu0 0
    %688 = vmatprep.subr.bf16.mxu0 0
    %689 = vmatpush1.bf16.msra.mxu0 0
    %690 = vmatprep.subr.bf16.mxu0 0
    %691 = vmatpush1.bf16.msra.mxu0 0
    %692 = vmatprep.subr.bf16.mxu0 0
    %693 = vmatpush1.bf16.msra.mxu0 0
    %694 = vmatprep.subr.bf16.mxu0 0
    %695 = vmatpush1.bf16.msra.mxu0 0
    %696 = vmatprep.subr.bf16.mxu0 0
    %697 = vmatpush1.bf16.msra.mxu0 0
    %698 = vmatprep.subr.bf16.mxu0 0
    %699 = vmatpush1.bf16.msra.mxu0 0
    %700 = vmatprep.subr.bf16.mxu0 0
    %701 = vmatpush1.bf16.msra.mxu0 0
    %702 = vmatprep.subr.bf16.mxu0 0
    %703 = vmatpush1.bf16.msra.mxu0 0
    %704 = vmatprep.subr.bf16.mxu0 0
    %705 = vmatpush1.bf16.msra.mxu0 0
    %706 = vmatprep.subr.bf16.mxu0 0
    %707 = vmatpush1.bf16.msra.mxu0 0
    %708 = vmatprep.mubr.bf16.mxu0 0
    %709 = vmatmul.mubr.bf16.gmra.mrb[0].mxu0 %v237
    %v710 = vpop.f32.mrb[0].mxu0
    %v711 = vadd.f32 %v662, %v710
    %v712 = vpop.f32.mrb[0].mxu0
    %v713 = vpop.f32.mrb[0].mxu0
    %v714 = vadd.f32 %v662, %v713
    %v715 = vpop.f32.mrb[0].mxu0
    %716 = vdwg.mxu0
    %s717 = scalar_lea.vmem %s15, 16
    %v718 = vld [vmem:[%s717] sm:$0xf]
    %v719 = vld [vmem:[%s717 + $0x4] sm:$0xf]
    %v720 = vld [vmem:[%s717 + $0x8] sm:$0xf]
    %v721 = vld [vmem:[%s717 + $0xc] sm:$0xf]
    %s722 = scalar_lea.vmem %s17, 1
    %v723 = vld [vmem:[%s722] sm:$0x1]
    %v725 = vlaneseq
    %v726 = vshrl.u32 %v725, 7
    %v727 = vsub.s32 0, %v726
    %v728 = vrot.slane %v723, %v727
    %v734 = vunpack.c.l.b16 %v718
    %v735 = vunpack.c.l.b16 %v719
    %v736 = vunpack.c.l.b16 %v720
    %v737 = vunpack.c.l.b16 %v721
    %v738 = vpack.c.b16 %v735, %v734
    %v739 = vpack.c.b16 %v737, %v736
    %742 = vmatprep.subr.bf16.mxu0 0
    %743 = vmatpush1.bf16.msra.mxu0 %v738
    %744 = vmatprep.subr.bf16.mxu0 0
    %745 = vmatpush1.bf16.msra.mxu0 %v739
    %746 = vmatprep.subr.bf16.mxu0 0
    %747 = vmatpush1.bf16.msra.mxu0 0
    %748 = vmatprep.subr.bf16.mxu0 0
    %749 = vmatpush1.bf16.msra.mxu0 0
    %750 = vmatprep.subr.bf16.mxu0 0
    %751 = vmatpush1.bf16.msra.mxu0 0
    %752 = vmatprep.subr.bf16.mxu0 0
    %753 = vmatpush1.bf16.msra.mxu0 0
    %754 = vmatprep.subr.bf16.mxu0 0
    %755 = vmatpush1.bf16.msra.mxu0 0
    %756 = vmatprep.subr.bf16.mxu0 0
    %757 = vmatpush1.bf16.msra.mxu0 0
    %758 = vmatprep.subr.bf16.mxu0 0
    %759 = vmatpush1.bf16.msra.mxu0 0
    %760 = vmatprep.subr.bf16.mxu0 0
    %761 = vmatpush1.bf16.msra.mxu0 0
    %762 = vmatprep.subr.bf16.mxu0 0
    %763 = vmatpush1.bf16.msra.mxu0 0
    %764 = vmatprep.subr.bf16.mxu0 0
    %765 = vmatpush1.bf16.msra.mxu0 0
    %766 = vmatprep.subr.bf16.mxu0 0
    %767 = vmatpush1.bf16.msra.mxu0 0
    %768 = vmatprep.subr.bf16.mxu0 0
    %769 = vmatpush1.bf16.msra.mxu0 0
    %770 = vmatprep.subr.bf16.mxu0 0
    %771 = vmatpush1.bf16.msra.mxu0 0
    %772 = vmatprep.subr.bf16.mxu0 0
    %773 = vmatpush1.bf16.msra.mxu0 0
    %774 = vmatprep.mubr.bf16.mxu0 0
    %775 = vmatmul.mubr.bf16.gmra.mrb[0].mxu0 %v237
    %v776 = vpop.f32.mrb[0].mxu0
    %v777 = vadd.f32 %v728, %v776
    %v778 = vpop.f32.mrb[0].mxu0
    %v779 = vpop.f32.mrb[0].mxu0
    %v780 = vadd.f32 %v728, %v779
    %v781 = vpop.f32.mrb[0].mxu0
    %782 = vdwg.mxu0
    %v783 = vmul.f32 %v645, 0.35355338
    %v785 = vsel %vm409, %v783, 0
    %v788 = vsel %vm409, %v711, 0
    %790 = vmatprep.subr.mxu0 0.0
    %791 = vmatpush1.xpose.msra.mxu0 %v788
    %792 = vmatprep.subr.mxu0 0.0
    %793 = vmatpush1.xpose.msra.mxu0 0.0
    %794 = vmatprep.subr.mxu0 0.0
    %795 = vmatpush1.xpose.msra.mxu0 0.0
    %796 = vmatprep.subr.mxu0 0.0
    %797 = vmatpush1.xpose.msra.mxu0 0.0
    %798 = vmatprep.subr.mxu0 0.0
    %799 = vmatpush1.xpose.msra.mxu0 0.0
    %800 = vmatprep.subr.mxu0 0.0
    %801 = vmatpush1.xpose.msra.mxu0 0.0
    %802 = vmatprep.subr.mxu0 0.0
    %803 = vmatpush1.xpose.msra.mxu0 0.0
    %804 = vmatprep.subr.mxu0 0.0
    %805 = vmatpush1.xpose.msra.mxu0 0.0
    %806 = vmatprep.subr.mxu0 0.0
    %807 = vmatpush1.xpose.msra.mxu0 0.0
    %808 = vmatprep.subr.mxu0 0.0
    %809 = vmatpush1.xpose.msra.mxu0 0.0
    %810 = vmatprep.subr.mxu0 0.0
    %811 = vmatpush1.xpose.msra.mxu0 0.0
    %812 = vmatprep.subr.mxu0 0.0
    %813 = vmatpush1.xpose.msra.mxu0 0.0
    %814 = vmatprep.subr.mxu0 0.0
    %815 = vmatpush1.xpose.msra.mxu0 0.0
    %816 = vmatprep.subr.mxu0 0.0
    %817 = vmatpush1.xpose.msra.mxu0 0.0
    %818 = vmatprep.subr.mxu0 0.0
    %819 = vmatpush1.xpose.msra.mxu0 0.0
    %820 = vmatprep.subr.mxu0 0.0
    %821 = vmatpush1.xpose.msra.mxu0 0.0
    %822 = vmatprep.subr.mxu0 0.0
    %823 = vmatpush1.xpose.msra.mxu0 0.0
    %824 = vmatprep.subr.mxu0 0.0
    %825 = vmatpush1.xpose.msra.mxu0 0.0
    %826 = vmatprep.subr.mxu0 0.0
    %827 = vmatpush1.xpose.msra.mxu0 0.0
    %828 = vmatprep.subr.mxu0 0.0
    %829 = vmatpush1.xpose.msra.mxu0 0.0
    %830 = vmatprep.subr.mxu0 0.0
    %831 = vmatpush1.xpose.msra.mxu0 0.0
    %832 = vmatprep.subr.mxu0 0.0
    %833 = vmatpush1.xpose.msra.mxu0 0.0
    %834 = vmatprep.subr.mxu0 0.0
    %835 = vmatpush1.xpose.msra.mxu0 0.0
    %836 = vmatprep.subr.mxu0 0.0
    %837 = vmatpush1.xpose.msra.mxu0 0.0
    %838 = vmatprep.subr.mxu0 0.0
    %839 = vmatpush1.xpose.msra.mxu0 0.0
    %840 = vmatprep.subr.mxu0 0.0
    %841 = vmatpush1.xpose.msra.mxu0 0.0
    %842 = vmatprep.subr.mxu0 0.0
    %843 = vmatpush1.xpose.msra.mxu0 0.0
    %844 = vmatprep.subr.mxu0 0.0
    %845 = vmatpush1.xpose.msra.mxu0 0.0
    %846 = vmatprep.subr.mxu0 0.0
    %847 = vmatpush1.xpose.msra.mxu0 0.0
    %848 = vmatprep.subr.mxu0 0.0
    %849 = vmatpush1.xpose.msra.mxu0 0.0
    %850 = vmatprep.subr.mxu0 0.0
    %851 = vmatpush1.xpose.msra.mxu0 0.0
    %852 = vmatprep.subr.mxu0 0.0
    %853 = vmatpush1.xpose.msra.mxu0 0.0
    %854 = vmatprep.mubr.f32.mxu0 0.0
    %855 = vmatmul.mubr.f32.gmra.mrb[0].mxu0 %v785
    %v856 = vpop.f32.mrb[0].mxu0
    %v857 = vadd.f32 0.0, %v856
    %v858 = vpop.f32.mrb[0].mxu0
    %859 = vdwg.mxu0
    %v860 = vsel %vm409, %v857, -inf
    %861 = vmax.xlane.f32.xlu0 %v860
    %v862 = vpop.xlane.xlu0 %861
    %v863 = vsub.f32 %v857, %v862
    %v864 = vmul.f32 %v863, 1.442695
    %v865 = vpow.pop %v864
    %v866 = vsel %vm409, %v865, 0.0
    %867 = vadd.xlane.f32.xlu0 %v866
    %v868 = vpop.xlane.xlu0 %867
    %v869 = vrcp.pop %v868
    %v870 = vmul.f32 %v865, %v869
    %v872 = vsel %vm409, %v870, 0
    %874 = vmatprep.subr.mxu0 0.0
    %875 = vmatpush1.msra.mxu0 %v777
    %876 = vmatprep.subr.mxu0 0.0
    %877 = vmatpush1.msra.mxu0 0.0
    %878 = vmatprep.subr.mxu0 0.0
    %879 = vmatpush1.msra.mxu0 0.0
    %880 = vmatprep.subr.mxu0 0.0
    %881 = vmatpush1.msra.mxu0 0.0
    %882 = vmatprep.subr.mxu0 0.0
    %883 = vmatpush1.msra.mxu0 0.0
    %884 = vmatprep.subr.mxu0 0.0
    %885 = vmatpush1.msra.mxu0 0.0
    %886 = vmatprep.subr.mxu0 0.0
    %887 = vmatpush1.msra.mxu0 0.0
    %888 = vmatprep.subr.mxu0 0.0
    %889 = vmatpush1.msra.mxu0 0.0
    %890 = vmatprep.subr.mxu0 0.0
    %891 = vmatpush1.msra.mxu0 0.0
    %892 = vmatprep.subr.mxu0 0.0
    %893 = vmatpush1.msra.mxu0 0.0
    %894 = vmatprep.subr.mxu0 0.0
    %895 = vmatpush1.msra.mxu0 0.0
    %896 = vmatprep.subr.mxu0 0.0
    %897 = vmatpush1.msra.mxu0 0.0
    %898 = vmatprep.subr.mxu0 0.0
    %899 = vmatpush1.msra.mxu0 0.0
    %900 = vmatprep.subr.mxu0 0.0
    %901 = vmatpush1.msra.mxu0 0.0
    %902 = vmatprep.subr.mxu0 0.0
    %903 = vmatpush1.msra.mxu0 0.0
    %904 = vmatprep.subr.mxu0 0.0
    %905 = vmatpush1.msra.mxu0 0.0
    %906 = vmatprep.subr.mxu0 0.0
    %907 = vmatpush1.msra.mxu0 0.0
    %908 = vmatprep.subr.mxu0 0.0
    %909 = vmatpush1.msra.mxu0 0.0
    %910 = vmatprep.subr.mxu0 0.0
    %911 = vmatpush1.msra.mxu0 0.0
    %912 = vmatprep.subr.mxu0 0.0
    %913 = vmatpush1.msra.mxu0 0.0
    %914 = vmatprep.subr.mxu0 0.0
    %915 = vmatpush1.msra.mxu0 0.0
    %916 = vmatprep.subr.mxu0 0.0
    %917 = vmatpush1.msra.mxu0 0.0
    %918 = vmatprep.subr.mxu0 0.0
    %919 = vmatpush1.msra.mxu0 0.0
    %920 = vmatprep.subr.mxu0 0.0
    %921 = vmatpush1.msra.mxu0 0.0
    %922 = vmatprep.subr.mxu0 0.0
    %923 = vmatpush1.msra.mxu0 0.0
    %924 = vmatprep.subr.mxu0 0.0
    %925 = vmatpush1.msra.mxu0 0.0
    %926 = vmatprep.subr.mxu0 0.0
    %927 = vmatpush1.msra.mxu0 0.0
    %928 = vmatprep.subr.mxu0 0.0
    %929 = vmatpush1.msra.mxu0 0.0
    %930 = vmatprep.subr.mxu0 0.0
    %931 = vmatpush1.msra.mxu0 0.0
    %932 = vmatprep.subr.mxu0 0.0
    %933 = vmatpush1.msra.mxu0 0.0
    %934 = vmatprep.subr.mxu0 0.0
    %935 = vmatpush1.msra.mxu0 0.0
    %936 = vmatprep.subr.mxu0 0.0
    %937 = vmatpush1.msra.mxu0 0.0
    %938 = vmatprep.mubr.f32.mxu0 0.0
    %939 = vmatmul.mubr.f32.gmra.mrb[0].mxu0 %v872
    %v940 = vpop.f32.mrb[0].mxu0
    %v941 = vadd.f32 0.0, %v940
    %v942 = vpop.f32.mrb[0].mxu0
    %943 = vdwg.mxu0
    %v945 = vsel %vm409, %v496, 0
    %947 = vmatprep.subr.mxu0 0.0
    %948 = vmatpush1.msra.mxu0 %v402
    %949 = vmatprep.subr.mxu0 0.0
    %950 = vmatpush1.msra.mxu0 0.0
    %951 = vmatprep.subr.mxu0 0.0
    %952 = vmatpush1.msra.mxu0 0.0
    %953 = vmatprep.subr.mxu0 0.0
    %954 = vmatpush1.msra.mxu0 0.0
    %955 = vmatprep.subr.mxu0 0.0
    %956 = vmatpush1.msra.mxu0 0.0
    %957 = vmatprep.subr.mxu0 0.0
    %958 = vmatpush1.msra.mxu0 0.0
    %959 = vmatprep.subr.mxu0 0.0
    %960 = vmatpush1.msra.mxu0 0.0
    %961 = vmatprep.subr.mxu0 0.0
    %962 = vmatpush1.msra.mxu0 0.0
    %963 = vmatprep.subr.mxu0 0.0
    %964 = vmatpush1.msra.mxu0 0.0
    %965 = vmatprep.subr.mxu0 0.0
    %966 = vmatpush1.msra.mxu0 0.0
    %967 = vmatprep.subr.mxu0 0.0
    %968 = vmatpush1.msra.mxu0 0.0
    %969 = vmatprep.subr.mxu0 0.0
    %970 = vmatpush1.msra.mxu0 0.0
    %971 = vmatprep.subr.mxu0 0.0
    %972 = vmatpush1.msra.mxu0 0.0
    %973 = vmatprep.subr.mxu0 0.0
    %974 = vmatpush1.msra.mxu0 0.0
    %975 = vmatprep.subr.mxu0 0.0
    %976 = vmatpush1.msra.mxu0 0.0
    %977 = vmatprep.subr.mxu0 0.0
    %978 = vmatpush1.msra.mxu0 0.0
    %979 = vmatprep.subr.mxu0 0.0
    %980 = vmatpush1.msra.mxu0 0.0
    %981 = vmatprep.subr.mxu0 0.0
    %982 = vmatpush1.msra.mxu0 0.0
    %983 = vmatprep.subr.mxu0 0.0
    %984 = vmatpush1.msra.mxu0 0.0
    %985 = vmatprep.subr.mxu0 0.0
    %986 = vmatpush1.msra.mxu0 0.0
    %987 = vmatprep.subr.mxu0 0.0
    %988 = vmatpush1.msra.mxu0 0.0
    %989 = vmatprep.subr.mxu0 0.0
    %990 = vmatpush1.msra.mxu0 0.0
    %991 = vmatprep.subr.mxu0 0.0
    %992 = vmatpush1.msra.mxu0 0.0
    %993 = vmatprep.subr.mxu0 0.0
    %994 = vmatpush1.msra.mxu0 0.0
    %995 = vmatprep.subr.mxu0 0.0
    %996 = vmatpush1.msra.mxu0 0.0
    %997 = vmatprep.subr.mxu0 0.0
    %998 = vmatpush1.msra.mxu0 0.0
    %999 = vmatprep.subr.mxu0 0.0
    %1000 = vmatpush1.msra.mxu0 0.0
    %1001 = vmatprep.subr.mxu0 0.0
    %1002 = vmatpush1.msra.mxu0 0.0
    %1003 = vmatprep.subr.mxu0 0.0
    %1004 = vmatpush1.msra.mxu0 0.0
    %1005 = vmatprep.subr.mxu0 0.0
    %1006 = vmatpush1.msra.mxu0 0.0
    %1007 = vmatprep.subr.mxu0 0.0
    %1008 = vmatpush1.msra.mxu0 0.0
    %1009 = vmatprep.subr.mxu0 0.0
    %1010 = vmatpush1.msra.mxu0 0.0
    %1011 = vmatprep.mubr.f32.mxu0 0.0
    %1012 = vmatmul.mubr.f32.gmra.mrb[0].mxu0 %v945
    %v1013 = vpop.f32.mrb[0].mxu0
    %v1014 = vadd.f32 %v941, %v1013
    %v1015 = vpop.f32.mrb[0].mxu0
    %1016 = vdwg.mxu0
    %v1017 = vmul.f32 %v648, 0.35355338
    %v1019 = vsel %vm409, %v1017, 0
    %v1022 = vsel %vm409, %v714, 0
    %1024 = vmatprep.subr.mxu0 0.0
    %1025 = vmatpush1.xpose.msra.mxu0 %v1022
    %1026 = vmatprep.subr.mxu0 0.0
    %1027 = vmatpush1.xpose.msra.mxu0 0.0
    %1028 = vmatprep.subr.mxu0 0.0
    %1029 = vmatpush1.xpose.msra.mxu0 0.0
    %1030 = vmatprep.subr.mxu0 0.0
    %1031 = vmatpush1.xpose.msra.mxu0 0.0
    %1032 = vmatprep.subr.mxu0 0.0
    %1033 = vmatpush1.xpose.msra.mxu0 0.0
    %1034 = vmatprep.subr.mxu0 0.0
    %1035 = vmatpush1.xpose.msra.mxu0 0.0
    %1036 = vmatprep.subr.mxu0 0.0
    %1037 = vmatpush1.xpose.msra.mxu0 0.0
    %1038 = vmatprep.subr.mxu0 0.0
    %1039 = vmatpush1.xpose.msra.mxu0 0.0
    %1040 = vmatprep.subr.mxu0 0.0
    %1041 = vmatpush1.xpose.msra.mxu0 0.0
    %1042 = vmatprep.subr.mxu0 0.0
    %1043 = vmatpush1.xpose.msra.mxu0 0.0
    %1044 = vmatprep.subr.mxu0 0.0
    %1045 = vmatpush1.xpose.msra.mxu0 0.0
    %1046 = vmatprep.subr.mxu0 0.0
    %1047 = vmatpush1.xpose.msra.mxu0 0.0
    %1048 = vmatprep.subr.mxu0 0.0
    %1049 = vmatpush1.xpose.msra.mxu0 0.0
    %1050 = vmatprep.subr.mxu0 0.0
    %1051 = vmatpush1.xpose.msra.mxu0 0.0
    %1052 = vmatprep.subr.mxu0 0.0
    %1053 = vmatpush1.xpose.msra.mxu0 0.0
    %1054 = vmatprep.subr.mxu0 0.0
    %1055 = vmatpush1.xpose.msra.mxu0 0.0
    %1056 = vmatprep.subr.mxu0 0.0
    %1057 = vmatpush1.xpose.msra.mxu0 0.0
    %1058 = vmatprep.subr.mxu0 0.0
    %1059 = vmatpush1.xpose.msra.mxu0 0.0
    %1060 = vmatprep.subr.mxu0 0.0
    %1061 = vmatpush1.xpose.msra.mxu0 0.0
    %1062 = vmatprep.subr.mxu0 0.0
    %1063 = vmatpush1.xpose.msra.mxu0 0.0
    %1064 = vmatprep.subr.mxu0 0.0
    %1065 = vmatpush1.xpose.msra.mxu0 0.0
    %1066 = vmatprep.subr.mxu0 0.0
    %1067 = vmatpush1.xpose.msra.mxu0 0.0
    %1068 = vmatprep.subr.mxu0 0.0
    %1069 = vmatpush1.xpose.msra.mxu0 0.0
    %1070 = vmatprep.subr.mxu0 0.0
    %1071 = vmatpush1.xpose.msra.mxu0 0.0
    %1072 = vmatprep.subr.mxu0 0.0
    %1073 = vmatpush1.xpose.msra.mxu0 0.0
    %1074 = vmatprep.subr.mxu0 0.0
    %1075 = vmatpush1.xpose.msra.mxu0 0.0
    %1076 = vmatprep.subr.mxu0 0.0
    %1077 = vmatpush1.xpose.msra.mxu0 0.0
    %1078 = vmatprep.subr.mxu0 0.0
    %1079 = vmatpush1.xpose.msra.mxu0 0.0
    %1080 = vmatprep.subr.mxu0 0.0
    %1081 = vmatpush1.xpose.msra.mxu0 0.0
    %1082 = vmatprep.subr.mxu0 0.0
    %1083 = vmatpush1.xpose.msra.mxu0 0.0
    %1084 = vmatprep.subr.mxu0 0.0
    %1085 = vmatpush1.xpose.msra.mxu0 0.0
    %1086 = vmatprep.subr.mxu0 0.0
    %1087 = vmatpush1.xpose.msra.mxu0 0.0
    %1088 = vmatprep.mubr.f32.mxu0 0.0
    %1089 = vmatmul.mubr.f32.gmra.mrb[0].mxu0 %v1019
    %v1090 = vpop.f32.mrb[0].mxu0
    %v1091 = vadd.f32 0.0, %v1090
    %v1092 = vpop.f32.mrb[0].mxu0
    %1093 = vdwg.mxu0
    %v1094 = vsel %vm409, %v1091, -inf
    %1095 = vmax.xlane.f32.xlu0 %v1094
    %v1096 = vpop.xlane.xlu0 %1095
    %v1097 = vsub.f32 %v1091, %v1096
    %v1098 = vmul.f32 %v1097, 1.442695
    %v1099 = vpow.pop %v1098
    %v1100 = vsel %vm409, %v1099, 0.0
    %1101 = vadd.xlane.f32.xlu0 %v1100
    %v1102 = vpop.xlane.xlu0 %1101
    %v1103 = vrcp.pop %v1102
    %v1104 = vmul.f32 %v1099, %v1103
    %v1106 = vsel %vm409, %v1104, 0
    %1108 = vmatprep.subr.mxu0 0.0
    %1109 = vmatpush1.msra.mxu0 %v780
    %1110 = vmatprep.subr.mxu0 0.0
    %1111 = vmatpush1.msra.mxu0 0.0
    %1112 = vmatprep.subr.mxu0 0.0
    %1113 = vmatpush1.msra.mxu0 0.0
    %1114 = vmatprep.subr.mxu0 0.0
    %1115 = vmatpush1.msra.mxu0 0.0
    %1116 = vmatprep.subr.mxu0 0.0
    %1117 = vmatpush1.msra.mxu0 0.0
    %1118 = vmatprep.subr.mxu0 0.0
    %1119 = vmatpush1.msra.mxu0 0.0
    %1120 = vmatprep.subr.mxu0 0.0
    %1121 = vmatpush1.msra.mxu0 0.0
    %1122 = vmatprep.subr.mxu0 0.0
    %1123 = vmatpush1.msra.mxu0 0.0
    %1124 = vmatprep.subr.mxu0 0.0
    %1125 = vmatpush1.msra.mxu0 0.0
    %1126 = vmatprep.subr.mxu0 0.0
    %1127 = vmatpush1.msra.mxu0 0.0
    %1128 = vmatprep.subr.mxu0 0.0
    %1129 = vmatpush1.msra.mxu0 0.0
    %1130 = vmatprep.subr.mxu0 0.0
    %1131 = vmatpush1.msra.mxu0 0.0
    %1132 = vmatprep.subr.mxu0 0.0
    %1133 = vmatpush1.msra.mxu0 0.0
    %1134 = vmatprep.subr.mxu0 0.0
    %1135 = vmatpush1.msra.mxu0 0.0
    %1136 = vmatprep.subr.mxu0 0.0
    %1137 = vmatpush1.msra.mxu0 0.0
    %1138 = vmatprep.subr.mxu0 0.0
    %1139 = vmatpush1.msra.mxu0 0.0
    %1140 = vmatprep.subr.mxu0 0.0
    %1141 = vmatpush1.msra.mxu0 0.0
    %1142 = vmatprep.subr.mxu0 0.0
    %1143 = vmatpush1.msra.mxu0 0.0
    %1144 = vmatprep.subr.mxu0 0.0
    %1145 = vmatpush1.msra.mxu0 0.0
    %1146 = vmatprep.subr.mxu0 0.0
    %1147 = vmatpush1.msra.mxu0 0.0
    %1148 = vmatprep.subr.mxu0 0.0
    %1149 = vmatpush1.msra.mxu0 0.0
    %1150 = vmatprep.subr.mxu0 0.0
    %1151 = vmatpush1.msra.mxu0 0.0
    %1152 = vmatprep.subr.mxu0 0.0
    %1153 = vmatpush1.msra.mxu0 0.0
    %1154 = vmatprep.subr.mxu0 0.0
    %1155 = vmatpush1.msra.mxu0 0.0
    %1156 = vmatprep.subr.mxu0 0.0
    %1157 = vmatpush1.msra.mxu0 0.0
    %1158 = vmatprep.subr.mxu0 0.0
    %1159 = vmatpush1.msra.mxu0 0.0
    %1160 = vmatprep.subr.mxu0 0.0
    %1161 = vmatpush1.msra.mxu0 0.0
    %1162 = vmatprep.subr.mxu0 0.0
    %1163 = vmatpush1.msra.mxu0 0.0
    %1164 = vmatprep.subr.mxu0 0.0
    %1165 = vmatpush1.msra.mxu0 0.0
    %1166 = vmatprep.subr.mxu0 0.0
    %1167 = vmatpush1.msra.mxu0 0.0
    %1168 = vmatprep.subr.mxu0 0.0
    %1169 = vmatpush1.msra.mxu0 0.0
    %1170 = vmatprep.subr.mxu0 0.0
    %1171 = vmatpush1.msra.mxu0 0.0
    %1172 = vmatprep.mubr.f32.mxu0 0.0
    %1173 = vmatmul.mubr.f32.gmra.mrb[0].mxu0 %v1106
    %v1174 = vpop.f32.mrb[0].mxu0
    %v1175 = vadd.f32 0.0, %v1174
    %v1176 = vpop.f32.mrb[0].mxu0
    %1177 = vdwg.mxu0
    %v1179 = vsel %vm409, %v584, 0
    %1181 = vmatprep.subr.mxu0 0.0
    %1182 = vmatpush1.msra.mxu0 %v405
    %1183 = vmatprep.subr.mxu0 0.0
    %1184 = vmatpush1.msra.mxu0 0.0
    %1185 = vmatprep.subr.mxu0 0.0
    %1186 = vmatpush1.msra.mxu0 0.0
    %1187 = vmatprep.subr.mxu0 0.0
    %1188 = vmatpush1.msra.mxu0 0.0
    %1189 = vmatprep.subr.mxu0 0.0
    %1190 = vmatpush1.msra.mxu0 0.0
    %1191 = vmatprep.subr.mxu0 0.0
    %1192 = vmatpush1.msra.mxu0 0.0
    %1193 = vmatprep.subr.mxu0 0.0
    %1194 = vmatpush1.msra.mxu0 0.0
    %1195 = vmatprep.subr.mxu0 0.0
    %1196 = vmatpush1.msra.mxu0 0.0
    %1197 = vmatprep.subr.mxu0 0.0
    %1198 = vmatpush1.msra.mxu0 0.0
    %1199 = vmatprep.subr.mxu0 0.0
    %1200 = vmatpush1.msra.mxu0 0.0
    %1201 = vmatprep.subr.mxu0 0.0
    %1202 = vmatpush1.msra.mxu0 0.0
    %1203 = vmatprep.subr.mxu0 0.0
    %1204 = vmatpush1.msra.mxu0 0.0
    %1205 = vmatprep.subr.mxu0 0.0
    %1206 = vmatpush1.msra.mxu0 0.0
    %1207 = vmatprep.subr.mxu0 0.0
    %1208 = vmatpush1.msra.mxu0 0.0
    %1209 = vmatprep.subr.mxu0 0.0
    %1210 = vmatpush1.msra.mxu0 0.0
    %1211 = vmatprep.subr.mxu0 0.0
    %1212 = vmatpush1.msra.mxu0 0.0
    %1213 = vmatprep.subr.mxu0 0.0
    %1214 = vmatpush1.msra.mxu0 0.0
    %1215 = vmatprep.subr.mxu0 0.0
    %1216 = vmatpush1.msra.mxu0 0.0
    %1217 = vmatprep.subr.mxu0 0.0
    %1218 = vmatpush1.msra.mxu0 0.0
    %1219 = vmatprep.subr.mxu0 0.0
    %1220 = vmatpush1.msra.mxu0 0.0
    %1221 = vmatprep.subr.mxu0 0.0
    %1222 = vmatpush1.msra.mxu0 0.0
    %1223 = vmatprep.subr.mxu0 0.0
    %1224 = vmatpush1.msra.mxu0 0.0
    %1225 = vmatprep.subr.mxu0 0.0
    %1226 = vmatpush1.msra.mxu0 0.0
    %1227 = vmatprep.subr.mxu0 0.0
    %1228 = vmatpush1.msra.mxu0 0.0
    %1229 = vmatprep.subr.mxu0 0.0
    %1230 = vmatpush1.msra.mxu0 0.0
    %1231 = vmatprep.subr.mxu0 0.0
    %1232 = vmatpush1.msra.mxu0 0.0
    %1233 = vmatprep.subr.mxu0 0.0
    %1234 = vmatpush1.msra.mxu0 0.0
    %1235 = vmatprep.subr.mxu0 0.0
    %1236 = vmatpush1.msra.mxu0 0.0
    %1237 = vmatprep.subr.mxu0 0.0
    %1238 = vmatpush1.msra.mxu0 0.0
    %1239 = vmatprep.subr.mxu0 0.0
    %1240 = vmatpush1.msra.mxu0 0.0
    %1241 = vmatprep.subr.mxu0 0.0
    %1242 = vmatpush1.msra.mxu0 0.0
    %1243 = vmatprep.subr.mxu0 0.0
    %1244 = vmatpush1.msra.mxu0 0.0
    %1245 = vmatprep.mubr.f32.mxu0 0.0
    %1246 = vmatmul.mubr.f32.gmra.mrb[0].mxu0 %v1179
    %v1247 = vpop.f32.mrb[0].mxu0
    %v1248 = vadd.f32 %v1175, %v1247
    %v1249 = vpop.f32.mrb[0].mxu0
    %1250 = vdwg.mxu0
    %s1251 = scalar_lea.vmem %s7, 32
    %v1252 = vld [vmem:[%s1251] sm:$0xf]
    %v1253 = vld [vmem:[%s1251 + $0x4] sm:$0xf]
    %v1254 = vld [vmem:[%s1251 + $0x8] sm:$0xf]
    %v1255 = vld [vmem:[%s1251 + $0xc] sm:$0xf]
    %s1256 = scalar_lea.vmem %s9, 2
    %v1257 = vld [vmem:[%s1256] sm:$0x1]
    %v1259 = vlaneseq
    %v1260 = vshrl.u32 %v1259, 7
    %v1261 = vsub.s32 0, %v1260
    %v1262 = vrot.slane %v1257, %v1261
    %v1268 = vunpack.c.l.b16 %v1252
    %v1269 = vunpack.c.l.b16 %v1253
    %v1270 = vunpack.c.l.b16 %v1254
    %v1271 = vunpack.c.l.b16 %v1255
    %v1272 = vpack.c.b16 %v1269, %v1268
    %v1273 = vpack.c.b16 %v1271, %v1270
    %1276 = vmatprep.subr.bf16.mxu0 0
    %1277 = vmatpush1.bf16.msra.mxu0 %v1272
    %1278 = vmatprep.subr.bf16.mxu0 0
    %1279 = vmatpush1.bf16.msra.mxu0 %v1273
    %1280 = vmatprep.subr.bf16.mxu0 0
    %1281 = vmatpush1.bf16.msra.mxu0 0
    %1282 = vmatprep.subr.bf16.mxu0 0
    %1283 = vmatpush1.bf16.msra.mxu0 0
    %1284 = vmatprep.subr.bf16.mxu0 0
    %1285 = vmatpush1.bf16.msra.mxu0 0
    %1286 = vmatprep.subr.bf16.mxu0 0
    %1287 = vmatpush1.bf16.msra.mxu0 0
    %1288 = vmatprep.subr.bf16.mxu0 0
    %1289 = vmatpush1.bf16.msra.mxu0 0
    %1290 = vmatprep.subr.bf16.mxu0 0
    %1291 = vmatpush1.bf16.msra.mxu0 0
    %1292 = vmatprep.subr.bf16.mxu0 0
    %1293 = vmatpush1.bf16.msra.mxu0 0
    %1294 = vmatprep.subr.bf16.mxu0 0
    %1295 = vmatpush1.bf16.msra.mxu0 0
    %1296 = vmatprep.subr.bf16.mxu0 0
    %1297 = vmatpush1.bf16.msra.mxu0 0
    %1298 = vmatprep.subr.bf16.mxu0 0
    %1299 = vmatpush1.bf16.msra.mxu0 0
    %1300 = vmatprep.subr.bf16.mxu0 0
    %1301 = vmatpush1.bf16.msra.mxu0 0
    %1302 = vmatprep.subr.bf16.mxu0 0
    %1303 = vmatpush1.bf16.msra.mxu0 0
    %1304 = vmatprep.subr.bf16.mxu0 0
    %1305 = vmatpush1.bf16.msra.mxu0 0
    %1306 = vmatprep.subr.bf16.mxu0 0
    %1307 = vmatpush1.bf16.msra.mxu0 0
    %1308 = vmatprep.mubr.bf16.mxu0 0
    %1309 = vmatmul.mubr.bf16.gmra.mrb[0].mxu0 %v237
    %v1310 = vpop.f32.mrb[0].mxu0
    %v1311 = vadd.f32 %v1262, %v1310
    %v1312 = vpop.f32.mrb[0].mxu0
    %v1313 = vpop.f32.mrb[0].mxu0
    %v1314 = vadd.f32 %v1262, %v1313
    %v1315 = vpop.f32.mrb[0].mxu0
    %1316 = vdwg.mxu0
    %s1317 = scalar_lea.vmem %s11, 32
    %v1318 = vld [vmem:[%s1317] sm:$0xf]
    %v1319 = vld [vmem:[%s1317 + $0x4] sm:$0xf]
    %v1320 = vld [vmem:[%s1317 + $0x8] sm:$0xf]
    %v1321 = vld [vmem:[%s1317 + $0xc] sm:$0xf]
    %s1322 = scalar_lea.vmem %s13, 2
    %v1323 = vld [vmem:[%s1322] sm:$0x1]
    %v1325 = vlaneseq
    %v1326 = vshrl.u32 %v1325, 7
    %v1327 = vsub.s32 0, %v1326
    %v1328 = vrot.slane %v1323, %v1327
    %v1334 = vunpack.c.l.b16 %v1318
    %v1335 = vunpack.c.l.b16 %v1319
    %v1336 = vunpack.c.l.b16 %v1320
    %v1337 = vunpack.c.l.b16 %v1321
    %v1338 = vpack.c.b16 %v1335, %v1334
    %v1339 = vpack.c.b16 %v1337, %v1336
    %1342 = vmatprep.subr.bf16.mxu0 0
    %1343 = vmatpush1.bf16.msra.mxu0 %v1338
    %1344 = vmatprep.subr.bf16.mxu0 0
    %1345 = vmatpush1.bf16.msra.mxu0 %v1339
    %1346 = vmatprep.subr.bf16.mxu0 0
    %1347 = vmatpush1.bf16.msra.mxu0 0
    %1348 = vmatprep.subr.bf16.mxu0 0
    %1349 = vmatpush1.bf16.msra.mxu0 0
    %1350 = vmatprep.subr.bf16.mxu0 0
    %1351 = vmatpush1.bf16.msra.mxu0 0
    %1352 = vmatprep.subr.bf16.mxu0 0
    %1353 = vmatpush1.bf16.msra.mxu0 0
    %1354 = vmatprep.subr.bf16.mxu0 0
    %1355 = vmatpush1.bf16.msra.mxu0 0
    %1356 = vmatprep.subr.bf16.mxu0 0
    %1357 = vmatpush1.bf16.msra.mxu0 0
    %1358 = vmatprep.subr.bf16.mxu0 0
    %1359 = vmatpush1.bf16.msra.mxu0 0
    %1360 = vmatprep.subr.bf16.mxu0 0
    %1361 = vmatpush1.bf16.msra.mxu0 0
    %1362 = vmatprep.subr.bf16.mxu0 0
    %1363 = vmatpush1.bf16.msra.mxu0 0
    %1364 = vmatprep.subr.bf16.mxu0 0
    %1365 = vmatpush1.bf16.msra.mxu0 0
    %1366 = vmatprep.subr.bf16.mxu0 0
    %1367 = vmatpush1.bf16.msra.mxu0 0
    %1368 = vmatprep.subr.bf16.mxu0 0
    %1369 = vmatpush1.bf16.msra.mxu0 0
    %1370 = vmatprep.subr.bf16.mxu0 0
    %1371 = vmatpush1.bf16.msra.mxu0 0
    %1372 = vmatprep.subr.bf16.mxu0 0
    %1373 = vmatpush1.bf16.msra.mxu0 0
    %1374 = vmatprep.mubr.bf16.mxu0 0
    %1375 = vmatmul.mubr.bf16.gmra.mrb[0].mxu0 %v237
    %v1376 = vpop.f32.mrb[0].mxu0
    %v1377 = vadd.f32 %v1328, %v1376
    %v1378 = vpop.f32.mrb[0].mxu0
    %v1379 = vpop.f32.mrb[0].mxu0
    %v1380 = vadd.f32 %v1328, %v1379
    %v1381 = vpop.f32.mrb[0].mxu0
    %1382 = vdwg.mxu0
    %s1383 = scalar_lea.vmem %s15, 32
    %v1384 = vld [vmem:[%s1383] sm:$0xf]
    %v1385 = vld [vmem:[%s1383 + $0x4] sm:$0xf]
    %v1386 = vld [vmem:[%s1383 + $0x8] sm:$0xf]
    %v1387 = vld [vmem:[%s1383 + $0xc] sm:$0xf]
    %s1388 = scalar_lea.vmem %s17, 2
    %v1389 = vld [vmem:[%s1388] sm:$0x1]
    %v1391 = vlaneseq
    %v1392 = vshrl.u32 %v1391, 7
    %v1393 = vsub.s32 0, %v1392
    %v1394 = vrot.slane %v1389, %v1393
    %v1400 = vunpack.c.l.b16 %v1384
    %v1401 = vunpack.c.l.b16 %v1385
    %v1402 = vunpack.c.l.b16 %v1386
    %v1403 = vunpack.c.l.b16 %v1387
    %v1404 = vpack.c.b16 %v1401, %v1400
    %v1405 = vpack.c.b16 %v1403, %v1402
    %1408 = vmatprep.subr.bf16.mxu0 0
    %1409 = vmatpush1.bf16.msra.mxu0 %v1404
    %1410 = vmatprep.subr.bf16.mxu0 0
    %1411 = vmatpush1.bf16.msra.mxu0 %v1405
    %1412 = vmatprep.subr.bf16.mxu0 0
    %1413 = vmatpush1.bf16.msra.mxu0 0
    %1414 = vmatprep.subr.bf16.mxu0 0
    %1415 = vmatpush1.bf16.msra.mxu0 0
    %1416 = vmatprep.subr.bf16.mxu0 0
    %1417 = vmatpush1.bf16.msra.mxu0 0
    %1418 = vmatprep.subr.bf16.mxu0 0
    %1419 = vmatpush1.bf16.msra.mxu0 0
    %1420 = vmatprep.subr.bf16.mxu0 0
    %1421 = vmatpush1.bf16.msra.mxu0 0
    %1422 = vmatprep.subr.bf16.mxu0 0
    %1423 = vmatpush1.bf16.msra.mxu0 0
    %1424 = vmatprep.subr.bf16.mxu0 0
    %1425 = vmatpush1.bf16.msra.mxu0 0
    %1426 = vmatprep.subr.bf16.mxu0 0
    %1427 = vmatpush1.bf16.msra.mxu0 0
    %1428 = vmatprep.subr.bf16.mxu0 0
    %1429 = vmatpush1.bf16.msra.mxu0 0
    %1430 = vmatprep.subr.bf16.mxu0 0
    %1431 = vmatpush1.bf16.msra.mxu0 0
    %1432 = vmatprep.subr.bf16.mxu0 0
    %1433 = vmatpush1.bf16.msra.mxu0 0
    %1434 = vmatprep.subr.bf16.mxu0 0
    %1435 = vmatpush1.bf16.msra.mxu0 0
    %1436 = vmatprep.subr.bf16.mxu0 0
    %1437 = vmatpush1.bf16.msra.mxu0 0
    %1438 = vmatprep.subr.bf16.mxu0 0
    %1439 = vmatpush1.bf16.msra.mxu0 0
    %1440 = vmatprep.mubr.bf16.mxu0 0
    %1441 = vmatmul.mubr.bf16.gmra.mrb[0].mxu0 %v237
    %v1442 = vpop.f32.mrb[0].mxu0
    %v1443 = vadd.f32 %v1394, %v1442
    %v1444 = vpop.f32.mrb[0].mxu0
    %v1445 = vpop.f32.mrb[0].mxu0
    %v1446 = vadd.f32 %v1394, %v1445
    %v1447 = vpop.f32.mrb[0].mxu0
    %1448 = vdwg.mxu0
    %v1449 = vmul.f32 %v1311, 0.35355338
    %v1451 = vsel %vm409, %v1449, 0
    %v1454 = vsel %vm409, %v1377, 0
    %1456 = vmatprep.subr.mxu0 0.0
    %1457 = vmatpush1.xpose.msra.mxu0 %v1454
    %1458 = vmatprep.subr.mxu0 0.0
    %1459 = vmatpush1.xpose.msra.mxu0 0.0
    %1460 = vmatprep.subr.mxu0 0.0
    %1461 = vmatpush1.xpose.msra.mxu0 0.0
    %1462 = vmatprep.subr.mxu0 0.0
    %1463 = vmatpush1.xpose.msra.mxu0 0.0
    %1464 = vmatprep.subr.mxu0 0.0
    %1465 = vmatpush1.xpose.msra.mxu0 0.0
    %1466 = vmatprep.subr.mxu0 0.0
    %1467 = vmatpush1.xpose.msra.mxu0 0.0
    %1468 = vmatprep.subr.mxu0 0.0
    %1469 = vmatpush1.xpose.msra.mxu0 0.0
    %1470 = vmatprep.subr.mxu0 0.0
    %1471 = vmatpush1.xpose.msra.mxu0 0.0
    %1472 = vmatprep.subr.mxu0 0.0
    %1473 = vmatpush1.xpose.msra.mxu0 0.0
    %1474 = vmatprep.subr.mxu0 0.0
    %1475 = vmatpush1.xpose.msra.mxu0 0.0
    %1476 = vmatprep.subr.mxu0 0.0
    %1477 = vmatpush1.xpose.msra.mxu0 0.0
    %1478 = vmatprep.subr.mxu0 0.0
    %1479 = vmatpush1.xpose.msra.mxu0 0.0
    %1480 = vmatprep.subr.mxu0 0.0
    %1481 = vmatpush1.xpose.msra.mxu0 0.0
    %1482 = vmatprep.subr.mxu0 0.0
    %1483 = vmatpush1.xpose.msra.mxu0 0.0
    %1484 = vmatprep.subr.mxu0 0.0
    %1485 = vmatpush1.xpose.msra.mxu0 0.0
    %1486 = vmatprep.subr.mxu0 0.0
    %1487 = vmatpush1.xpose.msra.mxu0 0.0
    %1488 = vmatprep.subr.mxu0 0.0
    %1489 = vmatpush1.xpose.msra.mxu0 0.0
    %1490 = vmatprep.subr.mxu0 0.0
    %1491 = vmatpush1.xpose.msra.mxu0 0.0
    %1492 = vmatprep.subr.mxu0 0.0
    %1493 = vmatpush1.xpose.msra.mxu0 0.0
    %1494 = vmatprep.subr.mxu0 0.0
    %1495 = vmatpush1.xpose.msra.mxu0 0.0
    %1496 = vmatprep.subr.mxu0 0.0
    %1497 = vmatpush1.xpose.msra.mxu0 0.0
    %1498 = vmatprep.subr.mxu0 0.0
    %1499 = vmatpush1.xpose.msra.mxu0 0.0
    %1500 = vmatprep.subr.mxu0 0.0
    %1501 = vmatpush1.xpose.msra.mxu0 0.0
    %1502 = vmatprep.subr.mxu0 0.0
    %1503 = vmatpush1.xpose.msra.mxu0 0.0
    %1504 = vmatprep.subr.mxu0 0.0
    %1505 = vmatpush1.xpose.msra.mxu0 0.0
    %1506 = vmatprep.subr.mxu0 0.0
    %1507 = vmatpush1.xpose.msra.mxu0 0.0
    %1508 = vmatprep.subr.mxu0 0.0
    %1509 = vmatpush1.xpose.msra.mxu0 0.0
    %1510 = vmatprep.subr.mxu0 0.0
    %1511 = vmatpush1.xpose.msra.mxu0 0.0
    %1512 = vmatprep.subr.mxu0 0.0
    %1513 = vmatpush1.xpose.msra.mxu0 0.0
    %1514 = vmatprep.subr.mxu0 0.0
    %1515 = vmatpush1.xpose.msra.mxu0 0.0
    %1516 = vmatprep.subr.mxu0 0.0
    %1517 = vmatpush1.xpose.msra.mxu0 0.0
    %1518 = vmatprep.subr.mxu0 0.0
    %1519 = vmatpush1.xpose.msra.mxu0 0.0
    %1520 = vmatprep.mubr.f32.mxu0 0.0
    %1521 = vmatmul.mubr.f32.gmra.mrb[0].mxu0 %v1451
    %v1522 = vpop.f32.mrb[0].mxu0
    %v1523 = vadd.f32 0.0, %v1522
    %v1524 = vpop.f32.mrb[0].mxu0
    %1525 = vdwg.mxu0
    %v1526 = vsel %vm409, %v1523, -inf
    %1527 = vmax.xlane.f32.xlu0 %v1526
    %v1528 = vpop.xlane.xlu0 %1527
    %v1529 = vsub.f32 %v1523, %v1528
    %v1530 = vmul.f32 %v1529, 1.442695
    %v1531 = vpow.pop %v1530
    %v1532 = vsel %vm409, %v1531, 0.0
    %1533 = vadd.xlane.f32.xlu0 %v1532
    %v1534 = vpop.xlane.xlu0 %1533
    %v1535 = vrcp.pop %v1534
    %v1536 = vmul.f32 %v1531, %v1535
    %v1538 = vsel %vm409, %v1536, 0
    %1540 = vmatprep.subr.mxu0 0.0
    %1541 = vmatpush1.msra.mxu0 %v1443
    %1542 = vmatprep.subr.mxu0 0.0
    %1543 = vmatpush1.msra.mxu0 0.0
    %1544 = vmatprep.subr.mxu0 0.0
    %1545 = vmatpush1.msra.mxu0 0.0
    %1546 = vmatprep.subr.mxu0 0.0
    %1547 = vmatpush1.msra.mxu0 0.0
    %1548 = vmatprep.subr.mxu0 0.0
    %1549 = vmatpush1.msra.mxu0 0.0
    %1550 = vmatprep.subr.mxu0 0.0
    %1551 = vmatpush1.msra.mxu0 0.0
    %1552 = vmatprep.subr.mxu0 0.0
    %1553 = vmatpush1.msra.mxu0 0.0
    %1554 = vmatprep.subr.mxu0 0.0
    %1555 = vmatpush1.msra.mxu0 0.0
    %1556 = vmatprep.subr.mxu0 0.0
    %1557 = vmatpush1.msra.mxu0 0.0
    %1558 = vmatprep.subr.mxu0 0.0
    %1559 = vmatpush1.msra.mxu0 0.0
    %1560 = vmatprep.subr.mxu0 0.0
    %1561 = vmatpush1.msra.mxu0 0.0
    %1562 = vmatprep.subr.mxu0 0.0
    %1563 = vmatpush1.msra.mxu0 0.0
    %1564 = vmatprep.subr.mxu0 0.0
    %1565 = vmatpush1.msra.mxu0 0.0
    %1566 = vmatprep.subr.mxu0 0.0
    %1567 = vmatpush1.msra.mxu0 0.0
    %1568 = vmatprep.subr.mxu0 0.0
    %1569 = vmatpush1.msra.mxu0 0.0
    %1570 = vmatprep.subr.mxu0 0.0
    %1571 = vmatpush1.msra.mxu0 0.0
    %1572 = vmatprep.subr.mxu0 0.0
    %1573 = vmatpush1.msra.mxu0 0.0
    %1574 = vmatprep.subr.mxu0 0.0
    %1575 = vmatpush1.msra.mxu0 0.0
    %1576 = vmatprep.subr.mxu0 0.0
    %1577 = vmatpush1.msra.mxu0 0.0
    %1578 = vmatprep.subr.mxu0 0.0
    %1579 = vmatpush1.msra.mxu0 0.0
    %1580 = vmatprep.subr.mxu0 0.0
    %1581 = vmatpush1.msra.mxu0 0.0
    %1582 = vmatprep.subr.mxu0 0.0
    %1583 = vmatpush1.msra.mxu0 0.0
    %1584 = vmatprep.subr.mxu0 0.0
    %1585 = vmatpush1.msra.mxu0 0.0
    %1586 = vmatprep.subr.mxu0 0.0
    %1587 = vmatpush1.msra.mxu0 0.0
    %1588 = vmatprep.subr.mxu0 0.0
    %1589 = vmatpush1.msra.mxu0 0.0
    %1590 = vmatprep.subr.mxu0 0.0
    %1591 = vmatpush1.msra.mxu0 0.0
    %1592 = vmatprep.subr.mxu0 0.0
    %1593 = vmatpush1.msra.mxu0 0.0
    %1594 = vmatprep.subr.mxu0 0.0
    %1595 = vmatpush1.msra.mxu0 0.0
    %1596 = vmatprep.subr.mxu0 0.0
    %1597 = vmatpush1.msra.mxu0 0.0
    %1598 = vmatprep.subr.mxu0 0.0
    %1599 = vmatpush1.msra.mxu0 0.0
    %1600 = vmatprep.subr.mxu0 0.0
    %1601 = vmatpush1.msra.mxu0 0.0
    %1602 = vmatprep.subr.mxu0 0.0
    %1603 = vmatpush1.msra.mxu0 0.0
    %1604 = vmatprep.mubr.f32.mxu0 0.0
    %1605 = vmatmul.mubr.f32.gmra.mrb[0].mxu0 %v1538
    %v1606 = vpop.f32.mrb[0].mxu0
    %v1607 = vadd.f32 0.0, %v1606
    %v1608 = vpop.f32.mrb[0].mxu0
    %1609 = vdwg.mxu0
    %v1610 = vadd.f32 %v1014, %v1607
    %v1611 = vmul.f32 %v1314, 0.35355338
    %v1613 = vsel %vm409, %v1611, 0
    %v1616 = vsel %vm409, %v1380, 0
    %1618 = vmatprep.subr.mxu0 0.0
    %1619 = vmatpush1.xpose.msra.mxu0 %v1616
    %1620 = vmatprep.subr.mxu0 0.0
    %1621 = vmatpush1.xpose.msra.mxu0 0.0
    %1622 = vmatprep.subr.mxu0 0.0
    %1623 = vmatpush1.xpose.msra.mxu0 0.0
    %1624 = vmatprep.subr.mxu0 0.0
    %1625 = vmatpush1.xpose.msra.mxu0 0.0
    %1626 = vmatprep.subr.mxu0 0.0
    %1627 = vmatpush1.xpose.msra.mxu0 0.0
    %1628 = vmatprep.subr.mxu0 0.0
    %1629 = vmatpush1.xpose.msra.mxu0 0.0
    %1630 = vmatprep.subr.mxu0 0.0
    %1631 = vmatpush1.xpose.msra.mxu0 0.0
    %1632 = vmatprep.subr.mxu0 0.0
    %1633 = vmatpush1.xpose.msra.mxu0 0.0
    %1634 = vmatprep.subr.mxu0 0.0
    %1635 = vmatpush1.xpose.msra.mxu0 0.0
    %1636 = vmatprep.subr.mxu0 0.0
    %1637 = vmatpush1.xpose.msra.mxu0 0.0
    %1638 = vmatprep.subr.mxu0 0.0
    %1639 = vmatpush1.xpose.msra.mxu0 0.0
    %1640 = vmatprep.subr.mxu0 0.0
    %1641 = vmatpush1.xpose.msra.mxu0 0.0
    %1642 = vmatprep.subr.mxu0 0.0
    %1643 = vmatpush1.xpose.msra.mxu0 0.0
    %1644 = vmatprep.subr.mxu0 0.0
    %1645 = vmatpush1.xpose.msra.mxu0 0.0
    %1646 = vmatprep.subr.mxu0 0.0
    %1647 = vmatpush1.xpose.msra.mxu0 0.0
    %1648 = vmatprep.subr.mxu0 0.0
    %1649 = vmatpush1.xpose.msra.mxu0 0.0
    %1650 = vmatprep.subr.mxu0 0.0
    %1651 = vmatpush1.xpose.msra.mxu0 0.0
    %1652 = vmatprep.subr.mxu0 0.0
    %1653 = vmatpush1.xpose.msra.mxu0 0.0
    %1654 = vmatprep.subr.mxu0 0.0
    %1655 = vmatpush1.xpose.msra.mxu0 0.0
    %1656 = vmatprep.subr.mxu0 0.0
    %1657 = vmatpush1.xpose.msra.mxu0 0.0
    %1658 = vmatprep.subr.mxu0 0.0
    %1659 = vmatpush1.xpose.msra.mxu0 0.0
    %1660 = vmatprep.subr.mxu0 0.0
    %1661 = vmatpush1.xpose.msra.mxu0 0.0
    %1662 = vmatprep.subr.mxu0 0.0
    %1663 = vmatpush1.xpose.msra.mxu0 0.0
    %1664 = vmatprep.subr.mxu0 0.0
    %1665 = vmatpush1.xpose.msra.mxu0 0.0
    %1666 = vmatprep.subr.mxu0 0.0
    %1667 = vmatpush1.xpose.msra.mxu0 0.0
    %1668 = vmatprep.subr.mxu0 0.0
    %1669 = vmatpush1.xpose.msra.mxu0 0.0
    %1670 = vmatprep.subr.mxu0 0.0
    %1671 = vmatpush1.xpose.msra.mxu0 0.0
    %1672 = vmatprep.subr.mxu0 0.0
    %1673 = vmatpush1.xpose.msra.mxu0 0.0
    %1674 = vmatprep.subr.mxu0 0.0
    %1675 = vmatpush1.xpose.msra.mxu0 0.0
    %1676 = vmatprep.subr.mxu0 0.0
    %1677 = vmatpush1.xpose.msra.mxu0 0.0
    %1678 = vmatprep.subr.mxu0 0.0
    %1679 = vmatpush1.xpose.msra.mxu0 0.0
    %1680 = vmatprep.subr.mxu0 0.0
    %1681 = vmatpush1.xpose.msra.mxu0 0.0
    %1682 = vmatprep.mubr.f32.mxu0 0.0
    %1683 = vmatmul.mubr.f32.gmra.mrb[0].mxu0 %v1613
    %v1684 = vpop.f32.mrb[0].mxu0
    %v1685 = vadd.f32 0.0, %v1684
    %v1686 = vpop.f32.mrb[0].mxu0
    %1687 = vdwg.mxu0
    %v1688 = vsel %vm409, %v1685, -inf
    %1689 = vmax.xlane.f32.xlu0 %v1688
    %v1690 = vpop.xlane.xlu0 %1689
    %v1691 = vsub.f32 %v1685, %v1690
    %v1692 = vmul.f32 %v1691, 1.442695
    %v1693 = vpow.pop %v1692
    %v1694 = vsel %vm409, %v1693, 0.0
    %1695 = vadd.xlane.f32.xlu0 %v1694
    %v1696 = vpop.xlane.xlu0 %1695
    %v1697 = vrcp.pop %v1696
    %v1698 = vmul.f32 %v1693, %v1697
    %v1700 = vsel %vm409, %v1698, 0
    %1702 = vmatprep.subr.mxu0 0.0
    %1703 = vmatpush1.msra.mxu0 %v1446
    %1704 = vmatprep.subr.mxu0 0.0
    %1705 = vmatpush1.msra.mxu0 0.0
    %1706 = vmatprep.subr.mxu0 0.0
    %1707 = vmatpush1.msra.mxu0 0.0
    %1708 = vmatprep.subr.mxu0 0.0
    %1709 = vmatpush1.msra.mxu0 0.0
    %1710 = vmatprep.subr.mxu0 0.0
    %1711 = vmatpush1.msra.mxu0 0.0
    %1712 = vmatprep.subr.mxu0 0.0
    %1713 = vmatpush1.msra.mxu0 0.0
    %1714 = vmatprep.subr.mxu0 0.0
    %1715 = vmatpush1.msra.mxu0 0.0
    %1716 = vmatprep.subr.mxu0 0.0
    %1717 = vmatpush1.msra.mxu0 0.0
    %1718 = vmatprep.subr.mxu0 0.0
    %1719 = vmatpush1.msra.mxu0 0.0
    %1720 = vmatprep.subr.mxu0 0.0
    %1721 = vmatpush1.msra.mxu0 0.0
    %1722 = vmatprep.subr.mxu0 0.0
    %1723 = vmatpush1.msra.mxu0 0.0
    %1724 = vmatprep.subr.mxu0 0.0
    %1725 = vmatpush1.msra.mxu0 0.0
    %1726 = vmatprep.subr.mxu0 0.0
    %1727 = vmatpush1.msra.mxu0 0.0
    %1728 = vmatprep.subr.mxu0 0.0
    %1729 = vmatpush1.msra.mxu0 0.0
    %1730 = vmatprep.subr.mxu0 0.0
    %1731 = vmatpush1.msra.mxu0 0.0
    %1732 = vmatprep.subr.mxu0 0.0
    %1733 = vmatpush1.msra.mxu0 0.0
    %1734 = vmatprep.subr.mxu0 0.0
    %1735 = vmatpush1.msra.mxu0 0.0
    %1736 = vmatprep.subr.mxu0 0.0
    %1737 = vmatpush1.msra.mxu0 0.0
    %1738 = vmatprep.subr.mxu0 0.0
    %1739 = vmatpush1.msra.mxu0 0.0
    %1740 = vmatprep.subr.mxu0 0.0
    %1741 = vmatpush1.msra.mxu0 0.0
    %1742 = vmatprep.subr.mxu0 0.0
    %1743 = vmatpush1.msra.mxu0 0.0
    %1744 = vmatprep.subr.mxu0 0.0
    %1745 = vmatpush1.msra.mxu0 0.0
    %1746 = vmatprep.subr.mxu0 0.0
    %1747 = vmatpush1.msra.mxu0 0.0
    %1748 = vmatprep.subr.mxu0 0.0
    %1749 = vmatpush1.msra.mxu0 0.0
    %1750 = vmatprep.subr.mxu0 0.0
    %1751 = vmatpush1.msra.mxu0 0.0
    %1752 = vmatprep.subr.mxu0 0.0
    %1753 = vmatpush1.msra.mxu0 0.0
    %1754 = vmatprep.subr.mxu0 0.0
    %1755 = vmatpush1.msra.mxu0 0.0
    %1756 = vmatprep.subr.mxu0 0.0
    %1757 = vmatpush1.msra.mxu0 0.0
    %1758 = vmatprep.subr.mxu0 0.0
    %1759 = vmatpush1.msra.mxu0 0.0
    %1760 = vmatprep.subr.mxu0 0.0
    %1761 = vmatpush1.msra.mxu0 0.0
    %1762 = vmatprep.subr.mxu0 0.0
    %1763 = vmatpush1.msra.mxu0 0.0
    %1764 = vmatprep.subr.mxu0 0.0
    %1765 = vmatpush1.msra.mxu0 0.0
    %1766 = vmatprep.mubr.f32.mxu0 0.0
    %1767 = vmatmul.mubr.f32.gmra.mrb[0].mxu0 %v1700
    %v1768 = vpop.f32.mrb[0].mxu0
    %v1769 = vadd.f32 0.0, %v1768
    %v1770 = vpop.f32.mrb[0].mxu0
    %1771 = vdwg.mxu0
    %v1772 = vadd.f32 %v1248, %v1769
    %s1773 = scalar_lea.vmem %s7, 48
    %v1774 = vld [vmem:[%s1773] sm:$0xf]
    %v1775 = vld [vmem:[%s1773 + $0x4] sm:$0xf]
    %v1776 = vld [vmem:[%s1773 + $0x8] sm:$0xf]
    %v1777 = vld [vmem:[%s1773 + $0xc] sm:$0xf]
    %s1778 = scalar_lea.vmem %s9, 3
    %v1779 = vld [vmem:[%s1778] sm:$0x1]
    %v1781 = vlaneseq
    %v1782 = vshrl.u32 %v1781, 7
    %v1783 = vsub.s32 0, %v1782
    %v1784 = vrot.slane %v1779, %v1783
    %v1790 = vunpack.c.l.b16 %v1774
    %v1791 = vunpack.c.l.b16 %v1775
    %v1792 = vunpack.c.l.b16 %v1776
    %v1793 = vunpack.c.l.b16 %v1777
    %v1794 = vpack.c.b16 %v1791, %v1790
    %v1795 = vpack.c.b16 %v1793, %v1792
    %1798 = vmatprep.subr.bf16.mxu0 0
    %1799 = vmatpush1.bf16.msra.mxu0 %v1794
    %1800 = vmatprep.subr.bf16.mxu0 0
    %1801 = vmatpush1.bf16.msra.mxu0 %v1795
    %1802 = vmatprep.subr.bf16.mxu0 0
    %1803 = vmatpush1.bf16.msra.mxu0 0
    %1804 = vmatprep.subr.bf16.mxu0 0
    %1805 = vmatpush1.bf16.msra.mxu0 0
    %1806 = vmatprep.subr.bf16.mxu0 0
    %1807 = vmatpush1.bf16.msra.mxu0 0
    %1808 = vmatprep.subr.bf16.mxu0 0
    %1809 = vmatpush1.bf16.msra.mxu0 0
    %1810 = vmatprep.subr.bf16.mxu0 0
    %1811 = vmatpush1.bf16.msra.mxu0 0
    %1812 = vmatprep.subr.bf16.mxu0 0
    %1813 = vmatpush1.bf16.msra.mxu0 0
    %1814 = vmatprep.subr.bf16.mxu0 0
    %1815 = vmatpush1.bf16.msra.mxu0 0
    %1816 = vmatprep.subr.bf16.mxu0 0
    %1817 = vmatpush1.bf16.msra.mxu0 0
    %1818 = vmatprep.subr.bf16.mxu0 0
    %1819 = vmatpush1.bf16.msra.mxu0 0
    %1820 = vmatprep.subr.bf16.mxu0 0
    %1821 = vmatpush1.bf16.msra.mxu0 0
    %1822 = vmatprep.subr.bf16.mxu0 0
    %1823 = vmatpush1.bf16.msra.mxu0 0
    %1824 = vmatprep.subr.bf16.mxu0 0
    %1825 = vmatpush1.bf16.msra.mxu0 0
    %1826 = vmatprep.subr.bf16.mxu0 0
    %1827 = vmatpush1.bf16.msra.mxu0 0
    %1828 = vmatprep.subr.bf16.mxu0 0
    %1829 = vmatpush1.bf16.msra.mxu0 0
    %1830 = vmatprep.mubr.bf16.mxu0 0
    %1831 = vmatmul.mubr.bf16.gmra.mrb[0].mxu0 %v237
    %v1832 = vpop.f32.mrb[0].mxu0
    %v1833 = vadd.f32 %v1784, %v1832
    %v1834 = vpop.f32.mrb[0].mxu0
    %v1835 = vpop.f32.mrb[0].mxu0
    %v1836 = vadd.f32 %v1784, %v1835
    %v1837 = vpop.f32.mrb[0].mxu0
    %1838 = vdwg.mxu0
    %s1839 = scalar_lea.vmem %s11, 48
    %v1840 = vld [vmem:[%s1839] sm:$0xf]
    %v1841 = vld [vmem:[%s1839 + $0x4] sm:$0xf]
    %v1842 = vld [vmem:[%s1839 + $0x8] sm:$0xf]
    %v1843 = vld [vmem:[%s1839 + $0xc] sm:$0xf]
    %s1844 = scalar_lea.vmem %s13, 3
    %v1845 = vld [vmem:[%s1844] sm:$0x1]
    %v1847 = vlaneseq
    %v1848 = vshrl.u32 %v1847, 7
    %v1849 = vsub.s32 0, %v1848
    %v1850 = vrot.slane %v1845, %v1849
    %v1856 = vunpack.c.l.b16 %v1840
    %v1857 = vunpack.c.l.b16 %v1841
    %v1858 = vunpack.c.l.b16 %v1842
    %v1859 = vunpack.c.l.b16 %v1843
    %v1860 = vpack.c.b16 %v1857, %v1856
    %v1861 = vpack.c.b16 %v1859, %v1858
    %1864 = vmatprep.subr.bf16.mxu0 0
    %1865 = vmatpush1.bf16.msra.mxu0 %v1860
    %1866 = vmatprep.subr.bf16.mxu0 0
    %1867 = vmatpush1.bf16.msra.mxu0 %v1861
    %1868 = vmatprep.subr.bf16.mxu0 0
    %1869 = vmatpush1.bf16.msra.mxu0 0
    %1870 = vmatprep.subr.bf16.mxu0 0
    %1871 = vmatpush1.bf16.msra.mxu0 0
    %1872 = vmatprep.subr.bf16.mxu0 0
    %1873 = vmatpush1.bf16.msra.mxu0 0
    %1874 = vmatprep.subr.bf16.mxu0 0
    %1875 = vmatpush1.bf16.msra.mxu0 0
    %1876 = vmatprep.subr.bf16.mxu0 0
    %1877 = vmatpush1.bf16.msra.mxu0 0
    %1878 = vmatprep.subr.bf16.mxu0 0
    %1879 = vmatpush1.bf16.msra.mxu0 0
    %1880 = vmatprep.subr.bf16.mxu0 0
    %1881 = vmatpush1.bf16.msra.mxu0 0
    %1882 = vmatprep.subr.bf16.mxu0 0
    %1883 = vmatpush1.bf16.msra.mxu0 0
    %1884 = vmatprep.subr.bf16.mxu0 0
    %1885 = vmatpush1.bf16.msra.mxu0 0
    %1886 = vmatprep.subr.bf16.mxu0 0
    %1887 = vmatpush1.bf16.msra.mxu0 0
    %1888 = vmatprep.subr.bf16.mxu0 0
    %1889 = vmatpush1.bf16.msra.mxu0 0
    %1890 = vmatprep.subr.bf16.mxu0 0
    %1891 = vmatpush1.bf16.msra.mxu0 0
    %1892 = vmatprep.subr.bf16.mxu0 0
    %1893 = vmatpush1.bf16.msra.mxu0 0
    %1894 = vmatprep.subr.bf16.mxu0 0
    %1895 = vmatpush1.bf16.msra.mxu0 0
    %1896 = vmatprep.mubr.bf16.mxu0 0
    %1897 = vmatmul.mubr.bf16.gmra.mrb[0].mxu0 %v237
    %v1898 = vpop.f32.mrb[0].mxu0
    %v1899 = vadd.f32 %v1850, %v1898
    %v1900 = vpop.f32.mrb[0].mxu0
    %v1901 = vpop.f32.mrb[0].mxu0
    %v1902 = vadd.f32 %v1850, %v1901
    %v1903 = vpop.f32.mrb[0].mxu0
    %1904 = vdwg.mxu0
    %s1905 = scalar_lea.vmem %s15, 48
    %v1906 = vld [vmem:[%s1905] sm:$0xf]
    %v1907 = vld [vmem:[%s1905 + $0x4] sm:$0xf]
    %v1908 = vld [vmem:[%s1905 + $0x8] sm:$0xf]
    %v1909 = vld [vmem:[%s1905 + $0xc] sm:$0xf]
    %s1910 = scalar_lea.vmem %s17, 3
    %v1911 = vld [vmem:[%s1910] sm:$0x1]
    %v1913 = vlaneseq
    %v1914 = vshrl.u32 %v1913, 7
    %v1915 = vsub.s32 0, %v1914
    %v1916 = vrot.slane %v1911, %v1915
    %v1922 = vunpack.c.l.b16 %v1906
    %v1923 = vunpack.c.l.b16 %v1907
    %v1924 = vunpack.c.l.b16 %v1908
    %v1925 = vunpack.c.l.b16 %v1909
    %v1926 = vpack.c.b16 %v1923, %v1922
    %v1927 = vpack.c.b16 %v1925, %v1924
    %1930 = vmatprep.subr.bf16.mxu0 0
    %1931 = vmatpush1.bf16.msra.mxu0 %v1926
    %1932 = vmatprep.subr.bf16.mxu0 0
    %1933 = vmatpush1.bf16.msra.mxu0 %v1927
    %1934 = vmatprep.subr.bf16.mxu0 0
    %1935 = vmatpush1.bf16.msra.mxu0 0
    %1936 = vmatprep.subr.bf16.mxu0 0
    %1937 = vmatpush1.bf16.msra.mxu0 0
    %1938 = vmatprep.subr.bf16.mxu0 0
    %1939 = vmatpush1.bf16.msra.mxu0 0
    %1940 = vmatprep.subr.bf16.mxu0 0
    %1941 = vmatpush1.bf16.msra.mxu0 0
    %1942 = vmatprep.subr.bf16.mxu0 0
    %1943 = vmatpush1.bf16.msra.mxu0 0
    %1944 = vmatprep.subr.bf16.mxu0 0
    %1945 = vmatpush1.bf16.msra.mxu0 0
    %1946 = vmatprep.subr.bf16.mxu0 0
    %1947 = vmatpush1.bf16.msra.mxu0 0
    %1948 = vmatprep.subr.bf16.mxu0 0
    %1949 = vmatpush1.bf16.msra.mxu0 0
    %1950 = vmatprep.subr.bf16.mxu0 0
    %1951 = vmatpush1.bf16.msra.mxu0 0
    %1952 = vmatprep.subr.bf16.mxu0 0
    %1953 = vmatpush1.bf16.msra.mxu0 0
    %1954 = vmatprep.subr.bf16.mxu0 0
    %1955 = vmatpush1.bf16.msra.mxu0 0
    %1956 = vmatprep.subr.bf16.mxu0 0
    %1957 = vmatpush1.bf16.msra.mxu0 0
    %1958 = vmatprep.subr.bf16.mxu0 0
    %1959 = vmatpush1.bf16.msra.mxu0 0
    %1960 = vmatprep.subr.bf16.mxu0 0
    %1961 = vmatpush1.bf16.msra.mxu0 0
    %1962 = vmatprep.mubr.bf16.mxu0 0
    %1963 = vmatmul.mubr.bf16.gmra.mrb[0].mxu0 %v237
    %v1964 = vpop.f32.mrb[0].mxu0
    %v1965 = vadd.f32 %v1916, %v1964
    %v1966 = vpop.f32.mrb[0].mxu0
    %v1967 = vpop.f32.mrb[0].mxu0
    %v1968 = vadd.f32 %v1916, %v1967
    %v1969 = vpop.f32.mrb[0].mxu0
    %1970 = vdwg.mxu0
    %v1971 = vmul.f32 %v1833, 0.35355338
    %v1973 = vsel %vm409, %v1971, 0
    %v1976 = vsel %vm409, %v1899, 0
    %1978 = vmatprep.subr.mxu0 0.0
    %1979 = vmatpush1.xpose.msra.mxu0 %v1976
    %1980 = vmatprep.subr.mxu0 0.0
    %1981 = vmatpush1.xpose.msra.mxu0 0.0
    %1982 = vmatprep.subr.mxu0 0.0
    %1983 = vmatpush1.xpose.msra.mxu0 0.0
    %1984 = vmatprep.subr.mxu0 0.0
    %1985 = vmatpush1.xpose.msra.mxu0 0.0
    %1986 = vmatprep.subr.mxu0 0.0
    %1987 = vmatpush1.xpose.msra.mxu0 0.0
    %1988 = vmatprep.subr.mxu0 0.0
    %1989 = vmatpush1.xpose.msra.mxu0 0.0
    %1990 = vmatprep.subr.mxu0 0.0
    %1991 = vmatpush1.xpose.msra.mxu0 0.0
    %1992 = vmatprep.subr.mxu0 0.0
    %1993 = vmatpush1.xpose.msra.mxu0 0.0
    %1994 = vmatprep.subr.mxu0 0.0
    %1995 = vmatpush1.xpose.msra.mxu0 0.0
    %1996 = vmatprep.subr.mxu0 0.0
    %1997 = vmatpush1.xpose.msra.mxu0 0.0
    %1998 = vmatprep.subr.mxu0 0.0
    %1999 = vmatpush1.xpose.msra.mxu0 0.0
    %2000 = vmatprep.subr.mxu0 0.0
    %2001 = vmatpush1.xpose.msra.mxu0 0.0
    %2002 = vmatprep.subr.mxu0 0.0
    %2003 = vmatpush1.xpose.msra.mxu0 0.0
    %2004 = vmatprep.subr.mxu0 0.0
    %2005 = vmatpush1.xpose.msra.mxu0 0.0
    %2006 = vmatprep.subr.mxu0 0.0
    %2007 = vmatpush1.xpose.msra.mxu0 0.0
    %2008 = vmatprep.subr.mxu0 0.0
    %2009 = vmatpush1.xpose.msra.mxu0 0.0
    %2010 = vmatprep.subr.mxu0 0.0
    %2011 = vmatpush1.xpose.msra.mxu0 0.0
    %2012 = vmatprep.subr.mxu0 0.0
    %2013 = vmatpush1.xpose.msra.mxu0 0.0
    %2014 = vmatprep.subr.mxu0 0.0
    %2015 = vmatpush1.xpose.msra.mxu0 0.0
    %2016 = vmatprep.subr.mxu0 0.0
    %2017 = vmatpush1.xpose.msra.mxu0 0.0
    %2018 = vmatprep.subr.mxu0 0.0
    %2019 = vmatpush1.xpose.msra.mxu0 0.0
    %2020 = vmatprep.subr.mxu0 0.0
    %2021 = vmatpush1.xpose.msra.mxu0 0.0
    %2022 = vmatprep.subr.mxu0 0.0
    %2023 = vmatpush1.xpose.msra.mxu0 0.0
    %2024 = vmatprep.subr.mxu0 0.0
    %2025 = vmatpush1.xpose.msra.mxu0 0.0
    %2026 = vmatprep.subr.mxu0 0.0
    %2027 = vmatpush1.xpose.msra.mxu0 0.0
    %2028 = vmatprep.subr.mxu0 0.0
    %2029 = vmatpush1.xpose.msra.mxu0 0.0
    %2030 = vmatprep.subr.mxu0 0.0
    %2031 = vmatpush1.xpose.msra.mxu0 0.0
    %2032 = vmatprep.subr.mxu0 0.0
    %2033 = vmatpush1.xpose.msra.mxu0 0.0
    %2034 = vmatprep.subr.mxu0 0.0
    %2035 = vmatpush1.xpose.msra.mxu0 0.0
    %2036 = vmatprep.subr.mxu0 0.0
    %2037 = vmatpush1.xpose.msra.mxu0 0.0
    %2038 = vmatprep.subr.mxu0 0.0
    %2039 = vmatpush1.xpose.msra.mxu0 0.0
    %2040 = vmatprep.subr.mxu0 0.0
    %2041 = vmatpush1.xpose.msra.mxu0 0.0
    %2042 = vmatprep.mubr.f32.mxu0 0.0
    %2043 = vmatmul.mubr.f32.gmra.mrb[0].mxu0 %v1973
    %v2044 = vpop.f32.mrb[0].mxu0
    %v2045 = vadd.f32 0.0, %v2044
    %v2046 = vpop.f32.mrb[0].mxu0
    %2047 = vdwg.mxu0
    %v2048 = vsel %vm409, %v2045, -inf
    %2049 = vmax.xlane.f32.xlu0 %v2048
    %v2050 = vpop.xlane.xlu0 %2049
    %v2051 = vsub.f32 %v2045, %v2050
    %v2052 = vmul.f32 %v2051, 1.442695
    %v2053 = vpow.pop %v2052
    %v2054 = vsel %vm409, %v2053, 0.0
    %2055 = vadd.xlane.f32.xlu0 %v2054
    %v2056 = vpop.xlane.xlu0 %2055
    %v2057 = vrcp.pop %v2056
    %v2058 = vmul.f32 %v2053, %v2057
    %v2060 = vsel %vm409, %v2058, 0
    %2062 = vmatprep.subr.mxu0 0.0
    %2063 = vmatpush1.msra.mxu0 %v1965
    %2064 = vmatprep.subr.mxu0 0.0
    %2065 = vmatpush1.msra.mxu0 0.0
    %2066 = vmatprep.subr.mxu0 0.0
    %2067 = vmatpush1.msra.mxu0 0.0
    %2068 = vmatprep.subr.mxu0 0.0
    %2069 = vmatpush1.msra.mxu0 0.0
    %2070 = vmatprep.subr.mxu0 0.0
    %2071 = vmatpush1.msra.mxu0 0.0
    %2072 = vmatprep.subr.mxu0 0.0
    %2073 = vmatpush1.msra.mxu0 0.0
    %2074 = vmatprep.subr.mxu0 0.0
    %2075 = vmatpush1.msra.mxu0 0.0
    %2076 = vmatprep.subr.mxu0 0.0
    %2077 = vmatpush1.msra.mxu0 0.0
    %2078 = vmatprep.subr.mxu0 0.0
    %2079 = vmatpush1.msra.mxu0 0.0
    %2080 = vmatprep.subr.mxu0 0.0
    %2081 = vmatpush1.msra.mxu0 0.0
    %2082 = vmatprep.subr.mxu0 0.0
    %2083 = vmatpush1.msra.mxu0 0.0
    %2084 = vmatprep.subr.mxu0 0.0
    %2085 = vmatpush1.msra.mxu0 0.0
    %2086 = vmatprep.subr.mxu0 0.0
    %2087 = vmatpush1.msra.mxu0 0.0
    %2088 = vmatprep.subr.mxu0 0.0
    %2089 = vmatpush1.msra.mxu0 0.0
    %2090 = vmatprep.subr.mxu0 0.0
    %2091 = vmatpush1.msra.mxu0 0.0
    %2092 = vmatprep.subr.mxu0 0.0
    %2093 = vmatpush1.msra.mxu0 0.0
    %2094 = vmatprep.subr.mxu0 0.0
    %2095 = vmatpush1.msra.mxu0 0.0
    %2096 = vmatprep.subr.mxu0 0.0
    %2097 = vmatpush1.msra.mxu0 0.0
    %2098 = vmatprep.subr.mxu0 0.0
    %2099 = vmatpush1.msra.mxu0 0.0
    %2100 = vmatprep.subr.mxu0 0.0
    %2101 = vmatpush1.msra.mxu0 0.0
    %2102 = vmatprep.subr.mxu0 0.0
    %2103 = vmatpush1.msra.mxu0 0.0
    %2104 = vmatprep.subr.mxu0 0.0
    %2105 = vmatpush1.msra.mxu0 0.0
    %2106 = vmatprep.subr.mxu0 0.0
    %2107 = vmatpush1.msra.mxu0 0.0
    %2108 = vmatprep.subr.mxu0 0.0
    %2109 = vmatpush1.msra.mxu0 0.0
    %2110 = vmatprep.subr.mxu0 0.0
    %2111 = vmatpush1.msra.mxu0 0.0
    %2112 = vmatprep.subr.mxu0 0.0
    %2113 = vmatpush1.msra.mxu0 0.0
    %2114 = vmatprep.subr.mxu0 0.0
    %2115 = vmatpush1.msra.mxu0 0.0
    %2116 = vmatprep.subr.mxu0 0.0
    %2117 = vmatpush1.msra.mxu0 0.0
    %2118 = vmatprep.subr.mxu0 0.0
    %2119 = vmatpush1.msra.mxu0 0.0
    %2120 = vmatprep.subr.mxu0 0.0
    %2121 = vmatpush1.msra.mxu0 0.0
    %2122 = vmatprep.subr.mxu0 0.0
    %2123 = vmatpush1.msra.mxu0 0.0
    %2124 = vmatprep.subr.mxu0 0.0
    %2125 = vmatpush1.msra.mxu0 0.0
    %2126 = vmatprep.mubr.f32.mxu0 0.0
    %2127 = vmatmul.mubr.f32.gmra.mrb[0].mxu0 %v2060
    %v2128 = vpop.f32.mrb[0].mxu0
    %v2129 = vadd.f32 0.0, %v2128
    %v2130 = vpop.f32.mrb[0].mxu0
    %2131 = vdwg.mxu0
    %v2132 = vadd.f32 %v1610, %v2129
    %v2133 = vmul.f32 %v1836, 0.35355338
    %v2135 = vsel %vm409, %v2133, 0
    %v2138 = vsel %vm409, %v1902, 0
    %2140 = vmatprep.subr.mxu0 0.0
    %2141 = vmatpush1.xpose.msra.mxu0 %v2138
    %2142 = vmatprep.subr.mxu0 0.0
    %2143 = vmatpush1.xpose.msra.mxu0 0.0
    %2144 = vmatprep.subr.mxu0 0.0
    %2145 = vmatpush1.xpose.msra.mxu0 0.0
    %2146 = vmatprep.subr.mxu0 0.0
    %2147 = vmatpush1.xpose.msra.mxu0 0.0
    %2148 = vmatprep.subr.mxu0 0.0
    %2149 = vmatpush1.xpose.msra.mxu0 0.0
    %2150 = vmatprep.subr.mxu0 0.0
    %2151 = vmatpush1.xpose.msra.mxu0 0.0
    %2152 = vmatprep.subr.mxu0 0.0
    %2153 = vmatpush1.xpose.msra.mxu0 0.0
    %2154 = vmatprep.subr.mxu0 0.0
    %2155 = vmatpush1.xpose.msra.mxu0 0.0
    %2156 = vmatprep.subr.mxu0 0.0
    %2157 = vmatpush1.xpose.msra.mxu0 0.0
    %2158 = vmatprep.subr.mxu0 0.0
    %2159 = vmatpush1.xpose.msra.mxu0 0.0
    %2160 = vmatprep.subr.mxu0 0.0
    %2161 = vmatpush1.xpose.msra.mxu0 0.0
    %2162 = vmatprep.subr.mxu0 0.0
    %2163 = vmatpush1.xpose.msra.mxu0 0.0
    %2164 = vmatprep.subr.mxu0 0.0
    %2165 = vmatpush1.xpose.msra.mxu0 0.0
    %2166 = vmatprep.subr.mxu0 0.0
    %2167 = vmatpush1.xpose.msra.mxu0 0.0
    %2168 = vmatprep.subr.mxu0 0.0
    %2169 = vmatpush1.xpose.msra.mxu0 0.0
    %2170 = vmatprep.subr.mxu0 0.0
    %2171 = vmatpush1.xpose.msra.mxu0 0.0
    %2172 = vmatprep.subr.mxu0 0.0
    %2173 = vmatpush1.xpose.msra.mxu0 0.0
    %2174 = vmatprep.subr.mxu0 0.0
    %2175 = vmatpush1.xpose.msra.mxu0 0.0
    %2176 = vmatprep.subr.mxu0 0.0
    %2177 = vmatpush1.xpose.msra.mxu0 0.0
    %2178 = vmatprep.subr.mxu0 0.0
    %2179 = vmatpush1.xpose.msra.mxu0 0.0
    %2180 = vmatprep.subr.mxu0 0.0
    %2181 = vmatpush1.xpose.msra.mxu0 0.0
    %2182 = vmatprep.subr.mxu0 0.0
    %2183 = vmatpush1.xpose.msra.mxu0 0.0
    %2184 = vmatprep.subr.mxu0 0.0
    %2185 = vmatpush1.xpose.msra.mxu0 0.0
    %2186 = vmatprep.subr.mxu0 0.0
    %2187 = vmatpush1.xpose.msra.mxu0 0.0
    %2188 = vmatprep.subr.mxu0 0.0
    %2189 = vmatpush1.xpose.msra.mxu0 0.0
    %2190 = vmatprep.subr.mxu0 0.0
    %2191 = vmatpush1.xpose.msra.mxu0 0.0
    %2192 = vmatprep.subr.mxu0 0.0
    %2193 = vmatpush1.xpose.msra.mxu0 0.0
    %2194 = vmatprep.subr.mxu0 0.0
    %2195 = vmatpush1.xpose.msra.mxu0 0.0
    %2196 = vmatprep.subr.mxu0 0.0
    %2197 = vmatpush1.xpose.msra.mxu0 0.0
    %2198 = vmatprep.subr.mxu0 0.0
    %2199 = vmatpush1.xpose.msra.mxu0 0.0
    %2200 = vmatprep.subr.mxu0 0.0
    %2201 = vmatpush1.xpose.msra.mxu0 0.0
    %2202 = vmatprep.subr.mxu0 0.0
    %2203 = vmatpush1.xpose.msra.mxu0 0.0
    %2204 = vmatprep.mubr.f32.mxu0 0.0
    %2205 = vmatmul.mubr.f32.gmra.mrb[0].mxu0 %v2135
    %v2206 = vpop.f32.mrb[0].mxu0
    %v2207 = vadd.f32 0.0, %v2206
    %v2208 = vpop.f32.mrb[0].mxu0
    %2209 = vdwg.mxu0
    %v2210 = vsel %vm409, %v2207, -inf
    %2211 = vmax.xlane.f32.xlu0 %v2210
    %v2212 = vpop.xlane.xlu0 %2211
    %v2213 = vsub.f32 %v2207, %v2212
    %v2214 = vmul.f32 %v2213, 1.442695
    %v2215 = vpow.pop %v2214
    %v2216 = vsel %vm409, %v2215, 0.0
    %2217 = vadd.xlane.f32.xlu0 %v2216
    %v2218 = vpop.xlane.xlu0 %2217
    %v2219 = vrcp.pop %v2218
    %v2220 = vmul.f32 %v2215, %v2219
    %v2222 = vsel %vm409, %v2220, 0
    %2224 = vmatprep.subr.mxu0 0.0
    %2225 = vmatpush1.msra.mxu0 %v1968
    %2226 = vmatprep.subr.mxu0 0.0
    %2227 = vmatpush1.msra.mxu0 0.0
    %2228 = vmatprep.subr.mxu0 0.0
    %2229 = vmatpush1.msra.mxu0 0.0
    %2230 = vmatprep.subr.mxu0 0.0
    %2231 = vmatpush1.msra.mxu0 0.0
    %2232 = vmatprep.subr.mxu0 0.0
    %2233 = vmatpush1.msra.mxu0 0.0
    %2234 = vmatprep.subr.mxu0 0.0
    %2235 = vmatpush1.msra.mxu0 0.0
    %2236 = vmatprep.subr.mxu0 0.0
    %2237 = vmatpush1.msra.mxu0 0.0
    %2238 = vmatprep.subr.mxu0 0.0
    %2239 = vmatpush1.msra.mxu0 0.0
    %2240 = vmatprep.subr.mxu0 0.0
    %2241 = vmatpush1.msra.mxu0 0.0
    %2242 = vmatprep.subr.mxu0 0.0
    %2243 = vmatpush1.msra.mxu0 0.0
    %2244 = vmatprep.subr.mxu0 0.0
    %2245 = vmatpush1.msra.mxu0 0.0
    %2246 = vmatprep.subr.mxu0 0.0
    %2247 = vmatpush1.msra.mxu0 0.0
    %2248 = vmatprep.subr.mxu0 0.0
    %2249 = vmatpush1.msra.mxu0 0.0
    %2250 = vmatprep.subr.mxu0 0.0
    %2251 = vmatpush1.msra.mxu0 0.0
    %2252 = vmatprep.subr.mxu0 0.0
    %2253 = vmatpush1.msra.mxu0 0.0
    %2254 = vmatprep.subr.mxu0 0.0
    %2255 = vmatpush1.msra.mxu0 0.0
    %2256 = vmatprep.subr.mxu0 0.0
    %2257 = vmatpush1.msra.mxu0 0.0
    %2258 = vmatprep.subr.mxu0 0.0
    %2259 = vmatpush1.msra.mxu0 0.0
    %2260 = vmatprep.subr.mxu0 0.0
    %2261 = vmatpush1.msra.mxu0 0.0
    %2262 = vmatprep.subr.mxu0 0.0
    %2263 = vmatpush1.msra.mxu0 0.0
    %2264 = vmatprep.subr.mxu0 0.0
    %2265 = vmatpush1.msra.mxu0 0.0
    %2266 = vmatprep.subr.mxu0 0.0
    %2267 = vmatpush1.msra.mxu0 0.0
    %2268 = vmatprep.subr.mxu0 0.0
    %2269 = vmatpush1.msra.mxu0 0.0
    %2270 = vmatprep.subr.mxu0 0.0
    %2271 = vmatpush1.msra.mxu0 0.0
    %2272 = vmatprep.subr.mxu0 0.0
    %2273 = vmatpush1.msra.mxu0 0.0
    %2274 = vmatprep.subr.mxu0 0.0
    %2275 = vmatpush1.msra.mxu0 0.0
    %2276 = vmatprep.subr.mxu0 0.0
    %2277 = vmatpush1.msra.mxu0 0.0
    %2278 = vmatprep.subr.mxu0 0.0
    %2279 = vmatpush1.msra.mxu0 0.0
    %2280 = vmatprep.subr.mxu0 0.0
    %2281 = vmatpush1.msra.mxu0 0.0
    %2282 = vmatprep.subr.mxu0 0.0
    %2283 = vmatpush1.msra.mxu0 0.0
    %2284 = vmatprep.subr.mxu0 0.0
    %2285 = vmatpush1.msra.mxu0 0.0
    %2286 = vmatprep.subr.mxu0 0.0
    %2287 = vmatpush1.msra.mxu0 0.0
    %2288 = vmatprep.mubr.f32.mxu0 0.0
    %2289 = vmatmul.mubr.f32.gmra.mrb[0].mxu0 %v2222
    %v2290 = vpop.f32.mrb[0].mxu0
    %v2291 = vadd.f32 0.0, %v2290
    %v2292 = vpop.f32.mrb[0].mxu0
    %2293 = vdwg.mxu0
    %v2294 = vadd.f32 %v1772, %v2291
    %v2295 = vld [vmem:[%s19] sm:$0x1]
    %v2297 = vlaneseq
    %v2298 = vshrl.u32 %v2297, 7
    %v2299 = vsub.s32 0, %v2298
    %v2300 = vrot.slane %v2295, %v2299
    %v2302 = vadd.f32 %v2132, %v2300
    %v2303 = vadd.f32 %v2294, %v2300
    %v2304 = vadd.f32 %v205, %v2302
    %v2305 = vadd.f32 %v208, %v2303
    %v2306 = vld [vmem:[%s21] sm:$0x1]
    %v2307 = vld [vmem:[%s23] sm:$0x1]
    %v2308 = vsel %vm235, %v2304, 0.0
    %2309 = vadd.xlane.f32.xlu0 %v2308
    %v2310 = vpop.xlane.xlu0 %2309
    %v2311 = vsel %vm235, %v2305, 0.0
    %2312 = vadd.xlane.f32.xlu0 %v2311
    %v2313 = vpop.xlane.xlu0 %2312
    %v2314 = vrcp.pop 32.0
    %v2315 = vmul.f32 %v2310, %v2314
    %v2316 = vmul.f32 %v2313, %v2314
    %v2317 = vsub.f32 %v2304, %v2315
    %v2318 = vsub.f32 %v2305, %v2316
    %v2319 = vmul.f32 %v2317, %v2317
    %v2320 = vmul.f32 %v2318, %v2318
    %v2321 = vsel %vm235, %v2319, 0.0
    %2322 = vadd.xlane.f32.xlu0 %v2321
    %v2323 = vpop.xlane.xlu0 %2322
    %v2324 = vsel %vm235, %v2320, 0.0
    %2325 = vadd.xlane.f32.xlu0 %v2324
    %v2326 = vpop.xlane.xlu0 %2325
    %v2327 = vmul.f32 %v2323, %v2314
    %v2328 = vmul.f32 %v2326, %v2314
    %v2329 = vadd.f32 %v2327, 1e-05
    %v2330 = vadd.f32 %v2328, 1e-05
    %v2331 = vrsqrt.pop %v2329
    %v2332 = vrsqrt.pop %v2330
    %v2333 = vmul.f32 %v2317, %v2331
    %v2334 = vmul.f32 %v2318, %v2332
    %v2336 = vlaneseq
    %v2337 = vshrl.u32 %v2336, 7
    %v2338 = vsub.s32 0, %v2337
    %v2339 = vrot.slane %v2306, %v2338
    %v2341 = vmul.f32 %v2333, %v2339
    %v2342 = vmul.f32 %v2334, %v2339
    %v2344 = vlaneseq
    %v2345 = vshrl.u32 %v2344, 7
    %v2346 = vsub.s32 0, %v2345
    %v2347 = vrot.slane %v2307, %v2346
    %v2349 = vadd.f32 %v2341, %v2347
    %v2350 = vadd.f32 %v2342, %v2347
    %v2351 = vpack.c.bf16 %v2350, %v2349
    %v2352 = vld [vmem:[%s25] sm:$0xf]
    %v2353 = vld [vmem:[%s25 + $0x4] sm:$0xf]
    %v2354 = vld [vmem:[%s25 + $0x8] sm:$0xf]
    %v2355 = vld [vmem:[%s25 + $0xc] sm:$0xf]
    %v2356 = vld [vmem:[%s27] sm:$0x1]
    %v2358 = vlaneseq
    %v2359 = vshrl.u32 %v2358, 7
    %v2360 = vsub.s32 0, %v2359
    %v2361 = vrot.slane %v2356, %v2360
    %v2367 = vunpack.c.l.b16 %v2352
    %v2368 = vunpack.c.l.b16 %v2353
    %v2369 = vunpack.c.l.b16 %v2354
    %v2370 = vunpack.c.l.b16 %v2355
    %v2371 = vpack.c.b16 %v2368, %v2367
    %v2372 = vpack.c.b16 %v2370, %v2369
    %v2376 = vsel %vm235, %v2351, 0
    %2378 = vmatprep.subr.bf16.mxu0 0
    %2379 = vmatpush1.bf16.msra.mxu0 %v2371
    %2380 = vmatprep.subr.bf16.mxu0 0
    %2381 = vmatpush1.bf16.msra.mxu0 %v2372
    %2382 = vmatprep.subr.bf16.mxu0 0
    %2383 = vmatpush1.bf16.msra.mxu0 0
    %2384 = vmatprep.subr.bf16.mxu0 0
    %2385 = vmatpush1.bf16.msra.mxu0 0
    %2386 = vmatprep.subr.bf16.mxu0 0
    %2387 = vmatpush1.bf16.msra.mxu0 0
    %2388 = vmatprep.subr.bf16.mxu0 0
    %2389 = vmatpush1.bf16.msra.mxu0 0
    %2390 = vmatprep.subr.bf16.mxu0 0
    %2391 = vmatpush1.bf16.msra.mxu0 0
    %2392 = vmatprep.subr.bf16.mxu0 0
    %2393 = vmatpush1.bf16.msra.mxu0 0
    %2394 = vmatprep.subr.bf16.mxu0 0
    %2395 = vmatpush1.bf16.msra.mxu0 0
    %2396 = vmatprep.subr.bf16.mxu0 0
    %2397 = vmatpush1.bf16.msra.mxu0 0
    %2398 = vmatprep.subr.bf16.mxu0 0
    %2399 = vmatpush1.bf16.msra.mxu0 0
    %2400 = vmatprep.subr.bf16.mxu0 0
    %2401 = vmatpush1.bf16.msra.mxu0 0
    %2402 = vmatprep.subr.bf16.mxu0 0
    %2403 = vmatpush1.bf16.msra.mxu0 0
    %2404 = vmatprep.subr.bf16.mxu0 0
    %2405 = vmatpush1.bf16.msra.mxu0 0
    %2406 = vmatprep.subr.bf16.mxu0 0
    %2407 = vmatpush1.bf16.msra.mxu0 0
    %2408 = vmatprep.subr.bf16.mxu0 0
    %2409 = vmatpush1.bf16.msra.mxu0 0
    %2410 = vmatprep.mubr.bf16.mxu0 0
    %2411 = vmatmul.mubr.bf16.gmra.mrb[0].mxu0 %v2376
    %v2412 = vpop.f32.mrb[0].mxu0
    %v2413 = vadd.f32 %v2361, %v2412
    %v2414 = vpop.f32.mrb[0].mxu0
    %v2415 = vpop.f32.mrb[0].mxu0
    %v2416 = vadd.f32 %v2361, %v2415
    %v2417 = vpop.f32.mrb[0].mxu0
    %2418 = vdwg.mxu0
    %v2419 = vmax.f32 %v2413, 0.0
    %v2420 = vmax.f32 %v2416, 0.0
    %v2421 = vpack.c.bf16 %v2420, %v2419
    %v2422 = vld [vmem:[%s29] sm:$0xf]
    %v2423 = vld [vmem:[%s29 + $0x4] sm:$0xf]
    %v2424 = vld [vmem:[%s29 + $0x8] sm:$0xf]
    %v2425 = vld [vmem:[%s29 + $0xc] sm:$0xf]
    %v2426 = vld [vmem:[%s29 + $0x10] sm:$0xf]
    %v2427 = vld [vmem:[%s29 + $0x14] sm:$0xf]
    %v2428 = vld [vmem:[%s29 + $0x18] sm:$0xf]
    %v2429 = vld [vmem:[%s29 + $0x1c] sm:$0xf]
    %v2430 = vld [vmem:[%s31] sm:$0x1]
    %v2432 = vlaneseq
    %v2433 = vshrl.u32 %v2432, 7
    %v2434 = vsub.s32 0, %v2433
    %v2435 = vrot.slane %v2430, %v2434
    %v2445 = vunpack.c.l.b16 %v2422
    %v2446 = vunpack.c.l.b16 %v2423
    %v2447 = vunpack.c.l.b16 %v2424
    %v2448 = vunpack.c.l.b16 %v2425
    %v2449 = vunpack.c.l.b16 %v2426
    %v2450 = vunpack.c.l.b16 %v2427
    %v2451 = vunpack.c.l.b16 %v2428
    %v2452 = vunpack.c.l.b16 %v2429
    %v2453 = vpack.c.b16 %v2446, %v2445
    %v2454 = vpack.c.b16 %v2448, %v2447
    %v2455 = vpack.c.b16 %v2450, %v2449
    %v2456 = vpack.c.b16 %v2452, %v2451
    %vm2461 = vcmask 523264
    %v2463 = vsel %vm2461, %v2421, 0
    %2465 = vmatprep.subr.bf16.mxu0 0
    %2466 = vmatpush1.bf16.msra.mxu0 %v2453
    %2467 = vmatprep.subr.bf16.mxu0 0
    %2468 = vmatpush1.bf16.msra.mxu0 %v2454
    %2469 = vmatprep.subr.bf16.mxu0 0
    %2470 = vmatpush1.bf16.msra.mxu0 %v2455
    %2471 = vmatprep.subr.bf16.mxu0 0
    %2472 = vmatpush1.bf16.msra.mxu0 %v2456
    %2473 = vmatprep.subr.bf16.mxu0 0
    %2474 = vmatpush1.bf16.msra.mxu0 0
    %2475 = vmatprep.subr.bf16.mxu0 0
    %2476 = vmatpush1.bf16.msra.mxu0 0
    %2477 = vmatprep.subr.bf16.mxu0 0
    %2478 = vmatpush1.bf16.msra.mxu0 0
    %2479 = vmatprep.subr.bf16.mxu0 0
    %2480 = vmatpush1.bf16.msra.mxu0 0
    %2481 = vmatprep.subr.bf16.mxu0 0
    %2482 = vmatpush1.bf16.msra.mxu0 0
    %2483 = vmatprep.subr.bf16.mxu0 0
    %2484 = vmatpush1.bf16.msra.mxu0 0
    %2485 = vmatprep.subr.bf16.mxu0 0
    %2486 = vmatpush1.bf16.msra.mxu0 0
    %2487 = vmatprep.subr.bf16.mxu0 0
    %2488 = vmatpush1.bf16.msra.mxu0 0
    %2489 = vmatprep.subr.bf16.mxu0 0
    %2490 = vmatpush1.bf16.msra.mxu0 0
    %2491 = vmatprep.subr.bf16.mxu0 0
    %2492 = vmatpush1.bf16.msra.mxu0 0
    %2493 = vmatprep.subr.bf16.mxu0 0
    %2494 = vmatpush1.bf16.msra.mxu0 0
    %2495 = vmatprep.subr.bf16.mxu0 0
    %2496 = vmatpush1.bf16.msra.mxu0 0
    %2497 = vmatprep.mubr.bf16.mxu0 0
    %2498 = vmatmul.mubr.bf16.gmra.mrb[0].mxu0 %v2463
    %v2499 = vpop.f32.mrb[0].mxu0
    %v2500 = vadd.f32 %v2435, %v2499
    %v2501 = vpop.f32.mrb[0].mxu0
    %v2502 = vpop.f32.mrb[0].mxu0
    %v2503 = vadd.f32 %v2435, %v2502
    %v2504 = vpop.f32.mrb[0].mxu0
    %2505 = vdwg.mxu0
    %v2506 = vadd.f32 %v2349, %v2500
    %v2507 = vadd.f32 %v2350, %v2503
    %v2508 = vld [vmem:[%s33] sm:$0x1]
    %v2509 = vld [vmem:[%s35] sm:$0x1]
    %v2510 = vsel %vm235, %v2506, 0.0
    %2511 = vadd.xlane.f32.xlu0 %v2510
    %v2512 = vpop.xlane.xlu0 %2511
    %v2513 = vsel %vm235, %v2507, 0.0
    %2514 = vadd.xlane.f32.xlu0 %v2513
    %v2515 = vpop.xlane.xlu0 %2514
    %v2516 = vmul.f32 %v2512, %v2314
    %v2517 = vmul.f32 %v2515, %v2314
    %v2518 = vsub.f32 %v2506, %v2516
    %v2519 = vsub.f32 %v2507, %v2517
    %v2520 = vmul.f32 %v2518, %v2518
    %v2521 = vmul.f32 %v2519, %v2519
    %v2522 = vsel %vm235, %v2520, 0.0
    %2523 = vadd.xlane.f32.xlu0 %v2522
    %v2524 = vpop.xlane.xlu0 %2523
    %v2525 = vsel %vm235, %v2521, 0.0
    %2526 = vadd.xlane.f32.xlu0 %v2525
    %v2527 = vpop.xlane.xlu0 %2526
    %v2528 = vmul.f32 %v2524, %v2314
    %v2529 = vmul.f32 %v2527, %v2314
    %v2530 = vadd.f32 %v2528, 1e-05
    %v2531 = vadd.f32 %v2529, 1e-05
    %v2532 = vrsqrt.pop %v2530
    %v2533 = vrsqrt.pop %v2531
    %v2534 = vmul.f32 %v2518, %v2532
    %v2535 = vmul.f32 %v2519, %v2533
    %v2537 = vlaneseq
    %v2538 = vshrl.u32 %v2537, 7
    %v2539 = vsub.s32 0, %v2538
    %v2540 = vrot.slane %v2508, %v2539
    %v2542 = vmul.f32 %v2534, %v2540
    %v2543 = vmul.f32 %v2535, %v2540
    %v2545 = vlaneseq
    %v2546 = vshrl.u32 %v2545, 7
    %v2547 = vsub.s32 0, %v2546
    %v2548 = vrot.slane %v2509, %v2547
    %v2550 = vadd.f32 %v2542, %v2548
    %v2551 = vadd.f32 %v2543, %v2548
    %v2552 = vpack.c.bf16 %v2551, %v2550
    %v2553 = vld [vmem:[%s37] sm:$0xf]
    %v2554 = vld [vmem:[%s37 + $0x4] sm:$0xf]
    %v2555 = vld [vmem:[%s37 + $0x8] sm:$0xf]
    %v2556 = vld [vmem:[%s37 + $0xc] sm:$0xf]
    %v2557 = vld [vmem:[%s39] sm:$0x1]
    %v2559 = vlaneseq
    %v2560 = vshrl.u32 %v2559, 7
    %v2561 = vsub.s32 0, %v2560
    %v2562 = vrot.slane %v2557, %v2561
    %v2568 = vunpack.c.l.b16 %v2553
    %v2569 = vunpack.c.l.b16 %v2554
    %v2570 = vunpack.c.l.b16 %v2555
    %v2571 = vunpack.c.l.b16 %v2556
    %v2572 = vpack.c.b16 %v2569, %v2568
    %v2573 = vpack.c.b16 %v2571, %v2570
    %v2577 = vsel %vm235, %v2552, 0
    %2579 = vmatprep.subr.bf16.mxu0 0
    %2580 = vmatpush1.bf16.msra.mxu0 %v2572
    %2581 = vmatprep.subr.bf16.mxu0 0
    %2582 = vmatpush1.bf16.msra.mxu0 %v2573
    %2583 = vmatprep.subr.bf16.mxu0 0
    %2584 = vmatpush1.bf16.msra.mxu0 0
    %2585 = vmatprep.subr.bf16.mxu0 0
    %2586 = vmatpush1.bf16.msra.mxu0 0
    %2587 = vmatprep.subr.bf16.mxu0 0
    %2588 = vmatpush1.bf16.msra.mxu0 0
    %2589 = vmatprep.subr.bf16.mxu0 0
    %2590 = vmatpush1.bf16.msra.mxu0 0
    %2591 = vmatprep.subr.bf16.mxu0 0
    %2592 = vmatpush1.bf16.msra.mxu0 0
    %2593 = vmatprep.subr.bf16.mxu0 0
    %2594 = vmatpush1.bf16.msra.mxu0 0
    %2595 = vmatprep.subr.bf16.mxu0 0
    %2596 = vmatpush1.bf16.msra.mxu0 0
    %2597 = vmatprep.subr.bf16.mxu0 0
    %2598 = vmatpush1.bf16.msra.mxu0 0
    %2599 = vmatprep.subr.bf16.mxu0 0
    %2600 = vmatpush1.bf16.msra.mxu0 0
    %2601 = vmatprep.subr.bf16.mxu0 0
    %2602 = vmatpush1.bf16.msra.mxu0 0
    %2603 = vmatprep.subr.bf16.mxu0 0
    %2604 = vmatpush1.bf16.msra.mxu0 0
    %2605 = vmatprep.subr.bf16.mxu0 0
    %2606 = vmatpush1.bf16.msra.mxu0 0
    %2607 = vmatprep.subr.bf16.mxu0 0
    %2608 = vmatpush1.bf16.msra.mxu0 0
    %2609 = vmatprep.subr.bf16.mxu0 0
    %2610 = vmatpush1.bf16.msra.mxu0 0
    %2611 = vmatprep.mubr.bf16.mxu0 0
    %2612 = vmatmul.mubr.bf16.gmra.mrb[0].mxu0 %v2577
    %v2613 = vpop.f32.mrb[0].mxu0
    %v2614 = vadd.f32 %v2562, %v2613
    %v2615 = vpop.f32.mrb[0].mxu0
    %v2616 = vpop.f32.mrb[0].mxu0
    %v2617 = vadd.f32 %v2562, %v2616
    %v2618 = vpop.f32.mrb[0].mxu0
    %2619 = vdwg.mxu0
    %v2620 = vld [vmem:[%s41] sm:$0xf]
    %v2621 = vld [vmem:[%s41 + $0x4] sm:$0xf]
    %v2622 = vld [vmem:[%s41 + $0x8] sm:$0xf]
    %v2623 = vld [vmem:[%s41 + $0xc] sm:$0xf]
    %v2624 = vld [vmem:[%s43] sm:$0x1]
    %v2626 = vlaneseq
    %v2627 = vshrl.u32 %v2626, 7
    %v2628 = vsub.s32 0, %v2627
    %v2629 = vrot.slane %v2624, %v2628
    %v2635 = vunpack.c.l.b16 %v2620
    %v2636 = vunpack.c.l.b16 %v2621
    %v2637 = vunpack.c.l.b16 %v2622
    %v2638 = vunpack.c.l.b16 %v2623
    %v2639 = vpack.c.b16 %v2636, %v2635
    %v2640 = vpack.c.b16 %v2638, %v2637
    %2643 = vmatprep.subr.bf16.mxu0 0
    %2644 = vmatpush1.bf16.msra.mxu0 %v2639
    %2645 = vmatprep.subr.bf16.mxu0 0
    %2646 = vmatpush1.bf16.msra.mxu0 %v2640
    %2647 = vmatprep.subr.bf16.mxu0 0
    %2648 = vmatpush1.bf16.msra.mxu0 0
    %2649 = vmatprep.subr.bf16.mxu0 0
    %2650 = vmatpush1.bf16.msra.mxu0 0
    %2651 = vmatprep.subr.bf16.mxu0 0
    %2652 = vmatpush1.bf16.msra.mxu0 0
    %2653 = vmatprep.subr.bf16.mxu0 0
    %2654 = vmatpush1.bf16.msra.mxu0 0
    %2655 = vmatprep.subr.bf16.mxu0 0
    %2656 = vmatpush1.bf16.msra.mxu0 0
    %2657 = vmatprep.subr.bf16.mxu0 0
    %2658 = vmatpush1.bf16.msra.mxu0 0
    %2659 = vmatprep.subr.bf16.mxu0 0
    %2660 = vmatpush1.bf16.msra.mxu0 0
    %2661 = vmatprep.subr.bf16.mxu0 0
    %2662 = vmatpush1.bf16.msra.mxu0 0
    %2663 = vmatprep.subr.bf16.mxu0 0
    %2664 = vmatpush1.bf16.msra.mxu0 0
    %2665 = vmatprep.subr.bf16.mxu0 0
    %2666 = vmatpush1.bf16.msra.mxu0 0
    %2667 = vmatprep.subr.bf16.mxu0 0
    %2668 = vmatpush1.bf16.msra.mxu0 0
    %2669 = vmatprep.subr.bf16.mxu0 0
    %2670 = vmatpush1.bf16.msra.mxu0 0
    %2671 = vmatprep.subr.bf16.mxu0 0
    %2672 = vmatpush1.bf16.msra.mxu0 0
    %2673 = vmatprep.subr.bf16.mxu0 0
    %2674 = vmatpush1.bf16.msra.mxu0 0
    %2675 = vmatprep.mubr.bf16.mxu0 0
    %2676 = vmatmul.mubr.bf16.gmra.mrb[0].mxu0 %v2577
    %v2677 = vpop.f32.mrb[0].mxu0
    %v2678 = vadd.f32 %v2629, %v2677
    %v2679 = vpop.f32.mrb[0].mxu0
    %v2680 = vpop.f32.mrb[0].mxu0
    %v2681 = vadd.f32 %v2629, %v2680
    %v2682 = vpop.f32.mrb[0].mxu0
    %2683 = vdwg.mxu0
    %v2684 = vld [vmem:[%s45] sm:$0xf]
    %v2685 = vld [vmem:[%s45 + $0x4] sm:$0xf]
    %v2686 = vld [vmem:[%s45 + $0x8] sm:$0xf]
    %v2687 = vld [vmem:[%s45 + $0xc] sm:$0xf]
    %v2688 = vld [vmem:[%s47] sm:$0x1]
    %v2690 = vlaneseq
    %v2691 = vshrl.u32 %v2690, 7
    %v2692 = vsub.s32 0, %v2691
    %v2693 = vrot.slane %v2688, %v2692
    %v2699 = vunpack.c.l.b16 %v2684
    %v2700 = vunpack.c.l.b16 %v2685
    %v2701 = vunpack.c.l.b16 %v2686
    %v2702 = vunpack.c.l.b16 %v2687
    %v2703 = vpack.c.b16 %v2700, %v2699
    %v2704 = vpack.c.b16 %v2702, %v2701
    %2707 = vmatprep.subr.bf16.mxu0 0
    %2708 = vmatpush1.bf16.msra.mxu0 %v2703
    %2709 = vmatprep.subr.bf16.mxu0 0
    %2710 = vmatpush1.bf16.msra.mxu0 %v2704
    %2711 = vmatprep.subr.bf16.mxu0 0
    %2712 = vmatpush1.bf16.msra.mxu0 0
    %2713 = vmatprep.subr.bf16.mxu0 0
    %2714 = vmatpush1.bf16.msra.mxu0 0
    %2715 = vmatprep.subr.bf16.mxu0 0
    %2716 = vmatpush1.bf16.msra.mxu0 0
    %2717 = vmatprep.subr.bf16.mxu0 0
    %2718 = vmatpush1.bf16.msra.mxu0 0
    %2719 = vmatprep.subr.bf16.mxu0 0
    %2720 = vmatpush1.bf16.msra.mxu0 0
    %2721 = vmatprep.subr.bf16.mxu0 0
    %2722 = vmatpush1.bf16.msra.mxu0 0
    %2723 = vmatprep.subr.bf16.mxu0 0
    %2724 = vmatpush1.bf16.msra.mxu0 0
    %2725 = vmatprep.subr.bf16.mxu0 0
    %2726 = vmatpush1.bf16.msra.mxu0 0
    %2727 = vmatprep.subr.bf16.mxu0 0
    %2728 = vmatpush1.bf16.msra.mxu0 0
    %2729 = vmatprep.subr.bf16.mxu0 0
    %2730 = vmatpush1.bf16.msra.mxu0 0
    %2731 = vmatprep.subr.bf16.mxu0 0
    %2732 = vmatpush1.bf16.msra.mxu0 0
    %2733 = vmatprep.subr.bf16.mxu0 0
    %2734 = vmatpush1.bf16.msra.mxu0 0
    %2735 = vmatprep.subr.bf16.mxu0 0
    %2736 = vmatpush1.bf16.msra.mxu0 0
    %2737 = vmatprep.subr.bf16.mxu0 0
    %2738 = vmatpush1.bf16.msra.mxu0 0
    %2739 = vmatprep.mubr.bf16.mxu0 0
    %2740 = vmatmul.mubr.bf16.gmra.mrb[0].mxu0 %v2577
    %v2741 = vpop.f32.mrb[0].mxu0
    %v2742 = vadd.f32 %v2693, %v2741
    %v2743 = vpop.f32.mrb[0].mxu0
    %v2744 = vpop.f32.mrb[0].mxu0
    %v2745 = vadd.f32 %v2693, %v2744
    %v2746 = vpop.f32.mrb[0].mxu0
    %2747 = vdwg.mxu0
    %v2748 = vmul.f32 %v2614, 0.35355338
    %v2750 = vsel %vm409, %v2748, 0
    %v2753 = vsel %vm409, %v2678, 0
    %2755 = vmatprep.subr.mxu0 0.0
    %2756 = vmatpush1.xpose.msra.mxu0 %v2753
    %2757 = vmatprep.subr.mxu0 0.0
    %2758 = vmatpush1.xpose.msra.mxu0 0.0
    %2759 = vmatprep.subr.mxu0 0.0
    %2760 = vmatpush1.xpose.msra.mxu0 0.0
    %2761 = vmatprep.subr.mxu0 0.0
    %2762 = vmatpush1.xpose.msra.mxu0 0.0
    %2763 = vmatprep.subr.mxu0 0.0
    %2764 = vmatpush1.xpose.msra.mxu0 0.0
    %2765 = vmatprep.subr.mxu0 0.0
    %2766 = vmatpush1.xpose.msra.mxu0 0.0
    %2767 = vmatprep.subr.mxu0 0.0
    %2768 = vmatpush1.xpose.msra.mxu0 0.0
    %2769 = vmatprep.subr.mxu0 0.0
    %2770 = vmatpush1.xpose.msra.mxu0 0.0
    %2771 = vmatprep.subr.mxu0 0.0
    %2772 = vmatpush1.xpose.msra.mxu0 0.0
    %2773 = vmatprep.subr.mxu0 0.0
    %2774 = vmatpush1.xpose.msra.mxu0 0.0
    %2775 = vmatprep.subr.mxu0 0.0
    %2776 = vmatpush1.xpose.msra.mxu0 0.0
    %2777 = vmatprep.subr.mxu0 0.0
    %2778 = vmatpush1.xpose.msra.mxu0 0.0
    %2779 = vmatprep.subr.mxu0 0.0
    %2780 = vmatpush1.xpose.msra.mxu0 0.0
    %2781 = vmatprep.subr.mxu0 0.0
    %2782 = vmatpush1.xpose.msra.mxu0 0.0
    %2783 = vmatprep.subr.mxu0 0.0
    %2784 = vmatpush1.xpose.msra.mxu0 0.0
    %2785 = vmatprep.subr.mxu0 0.0
    %2786 = vmatpush1.xpose.msra.mxu0 0.0
    %2787 = vmatprep.subr.mxu0 0.0
    %2788 = vmatpush1.xpose.msra.mxu0 0.0
    %2789 = vmatprep.subr.mxu0 0.0
    %2790 = vmatpush1.xpose.msra.mxu0 0.0
    %2791 = vmatprep.subr.mxu0 0.0
    %2792 = vmatpush1.xpose.msra.mxu0 0.0
    %2793 = vmatprep.subr.mxu0 0.0
    %2794 = vmatpush1.xpose.msra.mxu0 0.0
    %2795 = vmatprep.subr.mxu0 0.0
    %2796 = vmatpush1.xpose.msra.mxu0 0.0
    %2797 = vmatprep.subr.mxu0 0.0
    %2798 = vmatpush1.xpose.msra.mxu0 0.0
    %2799 = vmatprep.subr.mxu0 0.0
    %2800 = vmatpush1.xpose.msra.mxu0 0.0
    %2801 = vmatprep.subr.mxu0 0.0
    %2802 = vmatpush1.xpose.msra.mxu0 0.0
    %2803 = vmatprep.subr.mxu0 0.0
    %2804 = vmatpush1.xpose.msra.mxu0 0.0
    %2805 = vmatprep.subr.mxu0 0.0
    %2806 = vmatpush1.xpose.msra.mxu0 0.0
    %2807 = vmatprep.subr.mxu0 0.0
    %2808 = vmatpush1.xpose.msra.mxu0 0.0
    %2809 = vmatprep.subr.mxu0 0.0
    %2810 = vmatpush1.xpose.msra.mxu0 0.0
    %2811 = vmatprep.subr.mxu0 0.0
    %2812 = vmatpush1.xpose.msra.mxu0 0.0
    %2813 = vmatprep.subr.mxu0 0.0
    %2814 = vmatpush1.xpose.msra.mxu0 0.0
    %2815 = vmatprep.subr.mxu0 0.0
    %2816 = vmatpush1.xpose.msra.mxu0 0.0
    %2817 = vmatprep.subr.mxu0 0.0
    %2818 = vmatpush1.xpose.msra.mxu0 0.0
    %2819 = vmatprep.mubr.f32.mxu0 0.0
    %2820 = vmatmul.mubr.f32.gmra.mrb[0].mxu0 %v2750
    %v2821 = vpop.f32.mrb[0].mxu0
    %v2822 = vadd.f32 0.0, %v2821
    %v2823 = vpop.f32.mrb[0].mxu0
    %2824 = vdwg.mxu0
    %v2825 = vsel %vm409, %v2822, -inf
    %2826 = vmax.xlane.f32.xlu0 %v2825
    %v2827 = vpop.xlane.xlu0 %2826
    %v2828 = vsub.f32 %v2822, %v2827
    %v2829 = vmul.f32 %v2828, 1.442695
    %v2830 = vpow.pop %v2829
    %v2831 = vsel %vm409, %v2830, 0.0
    %2832 = vadd.xlane.f32.xlu0 %v2831
    %v2833 = vpop.xlane.xlu0 %2832
    %v2834 = vrcp.pop %v2833
    %v2835 = vmul.f32 %v2830, %v2834
    %v2836 = vmul.f32 %v2617, 0.35355338
    %v2838 = vsel %vm409, %v2836, 0
    %v2841 = vsel %vm409, %v2681, 0
    %2843 = vmatprep.subr.mxu0 0.0
    %2844 = vmatpush1.xpose.msra.mxu0 %v2841
    %2845 = vmatprep.subr.mxu0 0.0
    %2846 = vmatpush1.xpose.msra.mxu0 0.0
    %2847 = vmatprep.subr.mxu0 0.0
    %2848 = vmatpush1.xpose.msra.mxu0 0.0
    %2849 = vmatprep.subr.mxu0 0.0
    %2850 = vmatpush1.xpose.msra.mxu0 0.0
    %2851 = vmatprep.subr.mxu0 0.0
    %2852 = vmatpush1.xpose.msra.mxu0 0.0
    %2853 = vmatprep.subr.mxu0 0.0
    %2854 = vmatpush1.xpose.msra.mxu0 0.0
    %2855 = vmatprep.subr.mxu0 0.0
    %2856 = vmatpush1.xpose.msra.mxu0 0.0
    %2857 = vmatprep.subr.mxu0 0.0
    %2858 = vmatpush1.xpose.msra.mxu0 0.0
    %2859 = vmatprep.subr.mxu0 0.0
    %2860 = vmatpush1.xpose.msra.mxu0 0.0
    %2861 = vmatprep.subr.mxu0 0.0
    %2862 = vmatpush1.xpose.msra.mxu0 0.0
    %2863 = vmatprep.subr.mxu0 0.0
    %2864 = vmatpush1.xpose.msra.mxu0 0.0
    %2865 = vmatprep.subr.mxu0 0.0
    %2866 = vmatpush1.xpose.msra.mxu0 0.0
    %2867 = vmatprep.subr.mxu0 0.0
    %2868 = vmatpush1.xpose.msra.mxu0 0.0
    %2869 = vmatprep.subr.mxu0 0.0
    %2870 = vmatpush1.xpose.msra.mxu0 0.0
    %2871 = vmatprep.subr.mxu0 0.0
    %2872 = vmatpush1.xpose.msra.mxu0 0.0
    %2873 = vmatprep.subr.mxu0 0.0
    %2874 = vmatpush1.xpose.msra.mxu0 0.0
    %2875 = vmatprep.subr.mxu0 0.0
    %2876 = vmatpush1.xpose.msra.mxu0 0.0
    %2877 = vmatprep.subr.mxu0 0.0
    %2878 = vmatpush1.xpose.msra.mxu0 0.0
    %2879 = vmatprep.subr.mxu0 0.0
    %2880 = vmatpush1.xpose.msra.mxu0 0.0
    %2881 = vmatprep.subr.mxu0 0.0
    %2882 = vmatpush1.xpose.msra.mxu0 0.0
    %2883 = vmatprep.subr.mxu0 0.0
    %2884 = vmatpush1.xpose.msra.mxu0 0.0
    %2885 = vmatprep.subr.mxu0 0.0
    %2886 = vmatpush1.xpose.msra.mxu0 0.0
    %2887 = vmatprep.subr.mxu0 0.0
    %2888 = vmatpush1.xpose.msra.mxu0 0.0
    %2889 = vmatprep.subr.mxu0 0.0
    %2890 = vmatpush1.xpose.msra.mxu0 0.0
    %2891 = vmatprep.subr.mxu0 0.0
    %2892 = vmatpush1.xpose.msra.mxu0 0.0
    %2893 = vmatprep.subr.mxu0 0.0
    %2894 = vmatpush1.xpose.msra.mxu0 0.0
    %2895 = vmatprep.subr.mxu0 0.0
    %2896 = vmatpush1.xpose.msra.mxu0 0.0
    %2897 = vmatprep.subr.mxu0 0.0
    %2898 = vmatpush1.xpose.msra.mxu0 0.0
    %2899 = vmatprep.subr.mxu0 0.0
    %2900 = vmatpush1.xpose.msra.mxu0 0.0
    %2901 = vmatprep.subr.mxu0 0.0
    %2902 = vmatpush1.xpose.msra.mxu0 0.0
    %2903 = vmatprep.subr.mxu0 0.0
    %2904 = vmatpush1.xpose.msra.mxu0 0.0
    %2905 = vmatprep.subr.mxu0 0.0
    %2906 = vmatpush1.xpose.msra.mxu0 0.0
    %2907 = vmatprep.mubr.f32.mxu0 0.0
    %2908 = vmatmul.mubr.f32.gmra.mrb[0].mxu0 %v2838
    %v2909 = vpop.f32.mrb[0].mxu0
    %v2910 = vadd.f32 0.0, %v2909
    %v2911 = vpop.f32.mrb[0].mxu0
    %2912 = vdwg.mxu0
    %v2913 = vsel %vm409, %v2910, -inf
    %2914 = vmax.xlane.f32.xlu0 %v2913
    %v2915 = vpop.xlane.xlu0 %2914
    %v2916 = vsub.f32 %v2910, %v2915
    %v2917 = vmul.f32 %v2916, 1.442695
    %v2918 = vpow.pop %v2917
    %v2919 = vsel %vm409, %v2918, 0.0
    %2920 = vadd.xlane.f32.xlu0 %v2919
    %v2921 = vpop.xlane.xlu0 %2920
    %v2922 = vrcp.pop %v2921
    %v2923 = vmul.f32 %v2918, %v2922
    %s2924 = scalar_lea.vmem %s37, 16
    %v2925 = vld [vmem:[%s2924] sm:$0xf]
    %v2926 = vld [vmem:[%s2924 + $0x4] sm:$0xf]
    %v2927 = vld [vmem:[%s2924 + $0x8] sm:$0xf]
    %v2928 = vld [vmem:[%s2924 + $0xc] sm:$0xf]
    %s2929 = scalar_lea.vmem %s39, 1
    %v2930 = vld [vmem:[%s2929] sm:$0x1]
    %v2932 = vlaneseq
    %v2933 = vshrl.u32 %v2932, 7
    %v2934 = vsub.s32 0, %v2933
    %v2935 = vrot.slane %v2930, %v2934
    %v2941 = vunpack.c.l.b16 %v2925
    %v2942 = vunpack.c.l.b16 %v2926
    %v2943 = vunpack.c.l.b16 %v2927
    %v2944 = vunpack.c.l.b16 %v2928
    %v2945 = vpack.c.b16 %v2942, %v2941
    %v2946 = vpack.c.b16 %v2944, %v2943
    %2949 = vmatprep.subr.bf16.mxu0 0
    %2950 = vmatpush1.bf16.msra.mxu0 %v2945
    %2951 = vmatprep.subr.bf16.mxu0 0
    %2952 = vmatpush1.bf16.msra.mxu0 %v2946
    %2953 = vmatprep.subr.bf16.mxu0 0
    %2954 = vmatpush1.bf16.msra.mxu0 0
    %2955 = vmatprep.subr.bf16.mxu0 0
    %2956 = vmatpush1.bf16.msra.mxu0 0
    %2957 = vmatprep.subr.bf16.mxu0 0
    %2958 = vmatpush1.bf16.msra.mxu0 0
    %2959 = vmatprep.subr.bf16.mxu0 0
    %2960 = vmatpush1.bf16.msra.mxu0 0
    %2961 = vmatprep.subr.bf16.mxu0 0
    %2962 = vmatpush1.bf16.msra.mxu0 0
    %2963 = vmatprep.subr.bf16.mxu0 0
    %2964 = vmatpush1.bf16.msra.mxu0 0
    %2965 = vmatprep.subr.bf16.mxu0 0
    %2966 = vmatpush1.bf16.msra.mxu0 0
    %2967 = vmatprep.subr.bf16.mxu0 0
    %2968 = vmatpush1.bf16.msra.mxu0 0
    %2969 = vmatprep.subr.bf16.mxu0 0
    %2970 = vmatpush1.bf16.msra.mxu0 0
    %2971 = vmatprep.subr.bf16.mxu0 0
    %2972 = vmatpush1.bf16.msra.mxu0 0
    %2973 = vmatprep.subr.bf16.mxu0 0
    %2974 = vmatpush1.bf16.msra.mxu0 0
    %2975 = vmatprep.subr.bf16.mxu0 0
    %2976 = vmatpush1.bf16.msra.mxu0 0
    %2977 = vmatprep.subr.bf16.mxu0 0
    %2978 = vmatpush1.bf16.msra.mxu0 0
    %2979 = vmatprep.subr.bf16.mxu0 0
    %2980 = vmatpush1.bf16.msra.mxu0 0
    %2981 = vmatprep.mubr.bf16.mxu0 0
    %2982 = vmatmul.mubr.bf16.gmra.mrb[0].mxu0 %v2577
    %v2983 = vpop.f32.mrb[0].mxu0
    %v2984 = vadd.f32 %v2935, %v2983
    %v2985 = vpop.f32.mrb[0].mxu0
    %v2986 = vpop.f32.mrb[0].mxu0
    %v2987 = vadd.f32 %v2935, %v2986
    %v2988 = vpop.f32.mrb[0].mxu0
    %2989 = vdwg.mxu0
    %s2990 = scalar_lea.vmem %s41, 16
    %v2991 = vld [vmem:[%s2990] sm:$0xf]
    %v2992 = vld [vmem:[%s2990 + $0x4] sm:$0xf]
    %v2993 = vld [vmem:[%s2990 + $0x8] sm:$0xf]
    %v2994 = vld [vmem:[%s2990 + $0xc] sm:$0xf]
    %s2995 = scalar_lea.vmem %s43, 1
    %v2996 = vld [vmem:[%s2995] sm:$0x1]
    %v2998 = vlaneseq
    %v2999 = vshrl.u32 %v2998, 7
    %v3000 = vsub.s32 0, %v2999
    %v3001 = vrot.slane %v2996, %v3000
    %v3007 = vunpack.c.l.b16 %v2991
    %v3008 = vunpack.c.l.b16 %v2992
    %v3009 = vunpack.c.l.b16 %v2993
    %v3010 = vunpack.c.l.b16 %v2994
    %v3011 = vpack.c.b16 %v3008, %v3007
    %v3012 = vpack.c.b16 %v3010, %v3009
    %3015 = vmatprep.subr.bf16.mxu0 0
    %3016 = vmatpush1.bf16.msra.mxu0 %v3011
    %3017 = vmatprep.subr.bf16.mxu0 0
    %3018 = vmatpush1.bf16.msra.mxu0 %v3012
    %3019 = vmatprep.subr.bf16.mxu0 0
    %3020 = vmatpush1.bf16.msra.mxu0 0
    %3021 = vmatprep.subr.bf16.mxu0 0
    %3022 = vmatpush1.bf16.msra.mxu0 0
    %3023 = vmatprep.subr.bf16.mxu0 0
    %3024 = vmatpush1.bf16.msra.mxu0 0
    %3025 = vmatprep.subr.bf16.mxu0 0
    %3026 = vmatpush1.bf16.msra.mxu0 0
    %3027 = vmatprep.subr.bf16.mxu0 0
    %3028 = vmatpush1.bf16.msra.mxu0 0
    %3029 = vmatprep.subr.bf16.mxu0 0
    %3030 = vmatpush1.bf16.msra.mxu0 0
    %3031 = vmatprep.subr.bf16.mxu0 0
    %3032 = vmatpush1.bf16.msra.mxu0 0
    %3033 = vmatprep.subr.bf16.mxu0 0
    %3034 = vmatpush1.bf16.msra.mxu0 0
    %3035 = vmatprep.subr.bf16.mxu0 0
    %3036 = vmatpush1.bf16.msra.mxu0 0
    %3037 = vmatprep.subr.bf16.mxu0 0
    %3038 = vmatpush1.bf16.msra.mxu0 0
    %3039 = vmatprep.subr.bf16.mxu0 0
    %3040 = vmatpush1.bf16.msra.mxu0 0
    %3041 = vmatprep.subr.bf16.mxu0 0
    %3042 = vmatpush1.bf16.msra.mxu0 0
    %3043 = vmatprep.subr.bf16.mxu0 0
    %3044 = vmatpush1.bf16.msra.mxu0 0
    %3045 = vmatprep.subr.bf16.mxu0 0
    %3046 = vmatpush1.bf16.msra.mxu0 0
    %3047 = vmatprep.mubr.bf16.mxu0 0
    %3048 = vmatmul.mubr.bf16.gmra.mrb[0].mxu0 %v2577
    %v3049 = vpop.f32.mrb[0].mxu0
    %v3050 = vadd.f32 %v3001, %v3049
    %v3051 = vpop.f32.mrb[0].mxu0
    %v3052 = vpop.f32.mrb[0].mxu0
    %v3053 = vadd.f32 %v3001, %v3052
    %v3054 = vpop.f32.mrb[0].mxu0
    %3055 = vdwg.mxu0
    %s3056 = scalar_lea.vmem %s45, 16
    %v3057 = vld [vmem:[%s3056] sm:$0xf]
    %v3058 = vld [vmem:[%s3056 + $0x4] sm:$0xf]
    %v3059 = vld [vmem:[%s3056 + $0x8] sm:$0xf]
    %v3060 = vld [vmem:[%s3056 + $0xc] sm:$0xf]
    %s3061 = scalar_lea.vmem %s47, 1
    %v3062 = vld [vmem:[%s3061] sm:$0x1]
    %v3064 = vlaneseq
    %v3065 = vshrl.u32 %v3064, 7
    %v3066 = vsub.s32 0, %v3065
    %v3067 = vrot.slane %v3062, %v3066
    %v3073 = vunpack.c.l.b16 %v3057
    %v3074 = vunpack.c.l.b16 %v3058
    %v3075 = vunpack.c.l.b16 %v3059
    %v3076 = vunpack.c.l.b16 %v3060
    %v3077 = vpack.c.b16 %v3074, %v3073
    %v3078 = vpack.c.b16 %v3076, %v3075
    %3081 = vmatprep.subr.bf16.mxu0 0
    %3082 = vmatpush1.bf16.msra.mxu0 %v3077
    %3083 = vmatprep.subr.bf16.mxu0 0
    %3084 = vmatpush1.bf16.msra.mxu0 %v3078
    %3085 = vmatprep.subr.bf16.mxu0 0
    %3086 = vmatpush1.bf16.msra.mxu0 0
    %3087 = vmatprep.subr.bf16.mxu0 0
    %3088 = vmatpush1.bf16.msra.mxu0 0
    %3089 = vmatprep.subr.bf16.mxu0 0
    %3090 = vmatpush1.bf16.msra.mxu0 0
    %3091 = vmatprep.subr.bf16.mxu0 0
    %3092 = vmatpush1.bf16.msra.mxu0 0
    %3093 = vmatprep.subr.bf16.mxu0 0
    %3094 = vmatpush1.bf16.msra.mxu0 0
    %3095 = vmatprep.subr.bf16.mxu0 0
    %3096 = vmatpush1.bf16.msra.mxu0 0
    %3097 = vmatprep.subr.bf16.mxu0 0
    %3098 = vmatpush1.bf16.msra.mxu0 0
    %3099 = vmatprep.subr.bf16.mxu0 0
    %3100 = vmatpush1.bf16.msra.mxu0 0
    %3101 = vmatprep.subr.bf16.mxu0 0
    %3102 = vmatpush1.bf16.msra.mxu0 0
    %3103 = vmatprep.subr.bf16.mxu0 0
    %3104 = vmatpush1.bf16.msra.mxu0 0
    %3105 = vmatprep.subr.bf16.mxu0 0
    %3106 = vmatpush1.bf16.msra.mxu0 0
    %3107 = vmatprep.subr.bf16.mxu0 0
    %3108 = vmatpush1.bf16.msra.mxu0 0
    %3109 = vmatprep.subr.bf16.mxu0 0
    %3110 = vmatpush1.bf16.msra.mxu0 0
    %3111 = vmatprep.subr.bf16.mxu0 0
    %3112 = vmatpush1.bf16.msra.mxu0 0
    %3113 = vmatprep.mubr.bf16.mxu0 0
    %3114 = vmatmul.mubr.bf16.gmra.mrb[0].mxu0 %v2577
    %v3115 = vpop.f32.mrb[0].mxu0
    %v3116 = vadd.f32 %v3067, %v3115
    %v3117 = vpop.f32.mrb[0].mxu0
    %v3118 = vpop.f32.mrb[0].mxu0
    %v3119 = vadd.f32 %v3067, %v3118
    %v3120 = vpop.f32.mrb[0].mxu0
    %3121 = vdwg.mxu0
    %v3122 = vmul.f32 %v2984, 0.35355338
    %v3124 = vsel %vm409, %v3122, 0
    %v3127 = vsel %vm409, %v3050, 0
    %3129 = vmatprep.subr.mxu0 0.0
    %3130 = vmatpush1.xpose.msra.mxu0 %v3127
    %3131 = vmatprep.subr.mxu0 0.0
    %3132 = vmatpush1.xpose.msra.mxu0 0.0
    %3133 = vmatprep.subr.mxu0 0.0
    %3134 = vmatpush1.xpose.msra.mxu0 0.0
    %3135 = vmatprep.subr.mxu0 0.0
    %3136 = vmatpush1.xpose.msra.mxu0 0.0
    %3137 = vmatprep.subr.mxu0 0.0
    %3138 = vmatpush1.xpose.msra.mxu0 0.0
    %3139 = vmatprep.subr.mxu0 0.0
    %3140 = vmatpush1.xpose.msra.mxu0 0.0
    %3141 = vmatprep.subr.mxu0 0.0
    %3142 = vmatpush1.xpose.msra.mxu0 0.0
    %3143 = vmatprep.subr.mxu0 0.0
    %3144 = vmatpush1.xpose.msra.mxu0 0.0
    %3145 = vmatprep.subr.mxu0 0.0
    %3146 = vmatpush1.xpose.msra.mxu0 0.0
    %3147 = vmatprep.subr.mxu0 0.0
    %3148 = vmatpush1.xpose.msra.mxu0 0.0
    %3149 = vmatprep.subr.mxu0 0.0
    %3150 = vmatpush1.xpose.msra.mxu0 0.0
    %3151 = vmatprep.subr.mxu0 0.0
    %3152 = vmatpush1.xpose.msra.mxu0 0.0
    %3153 = vmatprep.subr.mxu0 0.0
    %3154 = vmatpush1.xpose.msra.mxu0 0.0
    %3155 = vmatprep.subr.mxu0 0.0
    %3156 = vmatpush1.xpose.msra.mxu0 0.0
    %3157 = vmatprep.subr.mxu0 0.0
    %3158 = vmatpush1.xpose.msra.mxu0 0.0
    %3159 = vmatprep.subr.mxu0 0.0
    %3160 = vmatpush1.xpose.msra.mxu0 0.0
    %3161 = vmatprep.subr.mxu0 0.0
    %3162 = vmatpush1.xpose.msra.mxu0 0.0
    %3163 = vmatprep.subr.mxu0 0.0
    %3164 = vmatpush1.xpose.msra.mxu0 0.0
    %3165 = vmatprep.subr.mxu0 0.0
    %3166 = vmatpush1.xpose.msra.mxu0 0.0
    %3167 = vmatprep.subr.mxu0 0.0
    %3168 = vmatpush1.xpose.msra.mxu0 0.0
    %3169 = vmatprep.subr.mxu0 0.0
    %3170 = vmatpush1.xpose.msra.mxu0 0.0
    %3171 = vmatprep.subr.mxu0 0.0
    %3172 = vmatpush1.xpose.msra.mxu0 0.0
    %3173 = vmatprep.subr.mxu0 0.0
    %3174 = vmatpush1.xpose.msra.mxu0 0.0
    %3175 = vmatprep.subr.mxu0 0.0
    %3176 = vmatpush1.xpose.msra.mxu0 0.0
    %3177 = vmatprep.subr.mxu0 0.0
    %3178 = vmatpush1.xpose.msra.mxu0 0.0
    %3179 = vmatprep.subr.mxu0 0.0
    %3180 = vmatpush1.xpose.msra.mxu0 0.0
    %3181 = vmatprep.subr.mxu0 0.0
    %3182 = vmatpush1.xpose.msra.mxu0 0.0
    %3183 = vmatprep.subr.mxu0 0.0
    %3184 = vmatpush1.xpose.msra.mxu0 0.0
    %3185 = vmatprep.subr.mxu0 0.0
    %3186 = vmatpush1.xpose.msra.mxu0 0.0
    %3187 = vmatprep.subr.mxu0 0.0
    %3188 = vmatpush1.xpose.msra.mxu0 0.0
    %3189 = vmatprep.subr.mxu0 0.0
    %3190 = vmatpush1.xpose.msra.mxu0 0.0
    %3191 = vmatprep.subr.mxu0 0.0
    %3192 = vmatpush1.xpose.msra.mxu0 0.0
    %3193 = vmatprep.mubr.f32.mxu0 0.0
    %3194 = vmatmul.mubr.f32.gmra.mrb[0].mxu0 %v3124
    %v3195 = vpop.f32.mrb[0].mxu0
    %v3196 = vadd.f32 0.0, %v3195
    %v3197 = vpop.f32.mrb[0].mxu0
    %3198 = vdwg.mxu0
    %v3199 = vsel %vm409, %v3196, -inf
    %3200 = vmax.xlane.f32.xlu0 %v3199
    %v3201 = vpop.xlane.xlu0 %3200
    %v3202 = vsub.f32 %v3196, %v3201
    %v3203 = vmul.f32 %v3202, 1.442695
    %v3204 = vpow.pop %v3203
    %v3205 = vsel %vm409, %v3204, 0.0
    %3206 = vadd.xlane.f32.xlu0 %v3205
    %v3207 = vpop.xlane.xlu0 %3206
    %v3208 = vrcp.pop %v3207
    %v3209 = vmul.f32 %v3204, %v3208
    %v3211 = vsel %vm409, %v3209, 0
    %3213 = vmatprep.subr.mxu0 0.0
    %3214 = vmatpush1.msra.mxu0 %v3116
    %3215 = vmatprep.subr.mxu0 0.0
    %3216 = vmatpush1.msra.mxu0 0.0
    %3217 = vmatprep.subr.mxu0 0.0
    %3218 = vmatpush1.msra.mxu0 0.0
    %3219 = vmatprep.subr.mxu0 0.0
    %3220 = vmatpush1.msra.mxu0 0.0
    %3221 = vmatprep.subr.mxu0 0.0
    %3222 = vmatpush1.msra.mxu0 0.0
    %3223 = vmatprep.subr.mxu0 0.0
    %3224 = vmatpush1.msra.mxu0 0.0
    %3225 = vmatprep.subr.mxu0 0.0
    %3226 = vmatpush1.msra.mxu0 0.0
    %3227 = vmatprep.subr.mxu0 0.0
    %3228 = vmatpush1.msra.mxu0 0.0
    %3229 = vmatprep.subr.mxu0 0.0
    %3230 = vmatpush1.msra.mxu0 0.0
    %3231 = vmatprep.subr.mxu0 0.0
    %3232 = vmatpush1.msra.mxu0 0.0
    %3233 = vmatprep.subr.mxu0 0.0
    %3234 = vmatpush1.msra.mxu0 0.0
    %3235 = vmatprep.subr.mxu0 0.0
    %3236 = vmatpush1.msra.mxu0 0.0
    %3237 = vmatprep.subr.mxu0 0.0
    %3238 = vmatpush1.msra.mxu0 0.0
    %3239 = vmatprep.subr.mxu0 0.0
    %3240 = vmatpush1.msra.mxu0 0.0
    %3241 = vmatprep.subr.mxu0 0.0
    %3242 = vmatpush1.msra.mxu0 0.0
    %3243 = vmatprep.subr.mxu0 0.0
    %3244 = vmatpush1.msra.mxu0 0.0
    %3245 = vmatprep.subr.mxu0 0.0
    %3246 = vmatpush1.msra.mxu0 0.0
    %3247 = vmatprep.subr.mxu0 0.0
    %3248 = vmatpush1.msra.mxu0 0.0
    %3249 = vmatprep.subr.mxu0 0.0
    %3250 = vmatpush1.msra.mxu0 0.0
    %3251 = vmatprep.subr.mxu0 0.0
    %3252 = vmatpush1.msra.mxu0 0.0
    %3253 = vmatprep.subr.mxu0 0.0
    %3254 = vmatpush1.msra.mxu0 0.0
    %3255 = vmatprep.subr.mxu0 0.0
    %3256 = vmatpush1.msra.mxu0 0.0
    %3257 = vmatprep.subr.mxu0 0.0
    %3258 = vmatpush1.msra.mxu0 0.0
    %3259 = vmatprep.subr.mxu0 0.0
    %3260 = vmatpush1.msra.mxu0 0.0
    %3261 = vmatprep.subr.mxu0 0.0
    %3262 = vmatpush1.msra.mxu0 0.0
    %3263 = vmatprep.subr.mxu0 0.0
    %3264 = vmatpush1.msra.mxu0 0.0
    %3265 = vmatprep.subr.mxu0 0.0
    %3266 = vmatpush1.msra.mxu0 0.0
    %3267 = vmatprep.subr.mxu0 0.0
    %3268 = vmatpush1.msra.mxu0 0.0
    %3269 = vmatprep.subr.mxu0 0.0
    %3270 = vmatpush1.msra.mxu0 0.0
    %3271 = vmatprep.subr.mxu0 0.0
    %3272 = vmatpush1.msra.mxu0 0.0
    %3273 = vmatprep.subr.mxu0 0.0
    %3274 = vmatpush1.msra.mxu0 0.0
    %3275 = vmatprep.subr.mxu0 0.0
    %3276 = vmatpush1.msra.mxu0 0.0
    %3277 = vmatprep.mubr.f32.mxu0 0.0
    %3278 = vmatmul.mubr.f32.gmra.mrb[0].mxu0 %v3211
    %v3279 = vpop.f32.mrb[0].mxu0
    %v3280 = vadd.f32 0.0, %v3279
    %v3281 = vpop.f32.mrb[0].mxu0
    %3282 = vdwg.mxu0
    %v3284 = vsel %vm409, %v2835, 0
    %3286 = vmatprep.subr.mxu0 0.0
    %3287 = vmatpush1.msra.mxu0 %v2742
    %3288 = vmatprep.subr.mxu0 0.0
    %3289 = vmatpush1.msra.mxu0 0.0
    %3290 = vmatprep.subr.mxu0 0.0
    %3291 = vmatpush1.msra.mxu0 0.0
    %3292 = vmatprep.subr.mxu0 0.0
    %3293 = vmatpush1.msra.mxu0 0.0
    %3294 = vmatprep.subr.mxu0 0.0
    %3295 = vmatpush1.msra.mxu0 0.0
    %3296 = vmatprep.subr.mxu0 0.0
    %3297 = vmatpush1.msra.mxu0 0.0
    %3298 = vmatprep.subr.mxu0 0.0
    %3299 = vmatpush1.msra.mxu0 0.0
    %3300 = vmatprep.subr.mxu0 0.0
    %3301 = vmatpush1.msra.mxu0 0.0
    %3302 = vmatprep.subr.mxu0 0.0
    %3303 = vmatpush1.msra.mxu0 0.0
    %3304 = vmatprep.subr.mxu0 0.0
    %3305 = vmatpush1.msra.mxu0 0.0
    %3306 = vmatprep.subr.mxu0 0.0
    %3307 = vmatpush1.msra.mxu0 0.0
    %3308 = vmatprep.subr.mxu0 0.0
    %3309 = vmatpush1.msra.mxu0 0.0
    %3310 = vmatprep.subr.mxu0 0.0
    %3311 = vmatpush1.msra.mxu0 0.0
    %3312 = vmatprep.subr.mxu0 0.0
    %3313 = vmatpush1.msra.mxu0 0.0
    %3314 = vmatprep.subr.mxu0 0.0
    %3315 = vmatpush1.msra.mxu0 0.0
    %3316 = vmatprep.subr.mxu0 0.0
    %3317 = vmatpush1.msra.mxu0 0.0
    %3318 = vmatprep.subr.mxu0 0.0
    %3319 = vmatpush1.msra.mxu0 0.0
    %3320 = vmatprep.subr.mxu0 0.0
    %3321 = vmatpush1.msra.mxu0 0.0
    %3322 = vmatprep.subr.mxu0 0.0
    %3323 = vmatpush1.msra.mxu0 0.0
    %3324 = vmatprep.subr.mxu0 0.0
    %3325 = vmatpush1.msra.mxu0 0.0
    %3326 = vmatprep.subr.mxu0 0.0
    %3327 = vmatpush1.msra.mxu0 0.0
    %3328 = vmatprep.subr.mxu0 0.0
    %3329 = vmatpush1.msra.mxu0 0.0
    %3330 = vmatprep.subr.mxu0 0.0
    %3331 = vmatpush1.msra.mxu0 0.0
    %3332 = vmatprep.subr.mxu0 0.0
    %3333 = vmatpush1.msra.mxu0 0.0
    %3334 = vmatprep.subr.mxu0 0.0
    %3335 = vmatpush1.msra.mxu0 0.0
    %3336 = vmatprep.subr.mxu0 0.0
    %3337 = vmatpush1.msra.mxu0 0.0
    %3338 = vmatprep.subr.mxu0 0.0
    %3339 = vmatpush1.msra.mxu0 0.0
    %3340 = vmatprep.subr.mxu0 0.0
    %3341 = vmatpush1.msra.mxu0 0.0
    %3342 = vmatprep.subr.mxu0 0.0
    %3343 = vmatpush1.msra.mxu0 0.0
    %3344 = vmatprep.subr.mxu0 0.0
    %3345 = vmatpush1.msra.mxu0 0.0
    %3346 = vmatprep.subr.mxu0 0.0
    %3347 = vmatpush1.msra.mxu0 0.0
    %3348 = vmatprep.subr.mxu0 0.0
    %3349 = vmatpush1.msra.mxu0 0.0
    %3350 = vmatprep.mubr.f32.mxu0 0.0
    %3351 = vmatmul.mubr.f32.gmra.mrb[0].mxu0 %v3284
    %v3352 = vpop.f32.mrb[0].mxu0
    %v3353 = vadd.f32 %v3280, %v3352
    %v3354 = vpop.f32.mrb[0].mxu0
    %3355 = vdwg.mxu0
    %v3356 = vmul.f32 %v2987, 0.35355338
    %v3358 = vsel %vm409, %v3356, 0
    %v3361 = vsel %vm409, %v3053, 0
    %3363 = vmatprep.subr.mxu0 0.0
    %3364 = vmatpush1.xpose.msra.mxu0 %v3361
    %3365 = vmatprep.subr.mxu0 0.0
    %3366 = vmatpush1.xpose.msra.mxu0 0.0
    %3367 = vmatprep.subr.mxu0 0.0
    %3368 = vmatpush1.xpose.msra.mxu0 0.0
    %3369 = vmatprep.subr.mxu0 0.0
    %3370 = vmatpush1.xpose.msra.mxu0 0.0
    %3371 = vmatprep.subr.mxu0 0.0
    %3372 = vmatpush1.xpose.msra.mxu0 0.0
    %3373 = vmatprep.subr.mxu0 0.0
    %3374 = vmatpush1.xpose.msra.mxu0 0.0
    %3375 = vmatprep.subr.mxu0 0.0
    %3376 = vmatpush1.xpose.msra.mxu0 0.0
    %3377 = vmatprep.subr.mxu0 0.0
    %3378 = vmatpush1.xpose.msra.mxu0 0.0
    %3379 = vmatprep.subr.mxu0 0.0
    %3380 = vmatpush1.xpose.msra.mxu0 0.0
    %3381 = vmatprep.subr.mxu0 0.0
    %3382 = vmatpush1.xpose.msra.mxu0 0.0
    %3383 = vmatprep.subr.mxu0 0.0
    %3384 = vmatpush1.xpose.msra.mxu0 0.0
    %3385 = vmatprep.subr.mxu0 0.0
    %3386 = vmatpush1.xpose.msra.mxu0 0.0
    %3387 = vmatprep.subr.mxu0 0.0
    %3388 = vmatpush1.xpose.msra.mxu0 0.0
    %3389 = vmatprep.subr.mxu0 0.0
    %3390 = vmatpush1.xpose.msra.mxu0 0.0
    %3391 = vmatprep.subr.mxu0 0.0
    %3392 = vmatpush1.xpose.msra.mxu0 0.0
    %3393 = vmatprep.subr.mxu0 0.0
    %3394 = vmatpush1.xpose.msra.mxu0 0.0
    %3395 = vmatprep.subr.mxu0 0.0
    %3396 = vmatpush1.xpose.msra.mxu0 0.0
    %3397 = vmatprep.subr.mxu0 0.0
    %3398 = vmatpush1.xpose.msra.mxu0 0.0
    %3399 = vmatprep.subr.mxu0 0.0
    %3400 = vmatpush1.xpose.msra.mxu0 0.0
    %3401 = vmatprep.subr.mxu0 0.0
    %3402 = vmatpush1.xpose.msra.mxu0 0.0
    %3403 = vmatprep.subr.mxu0 0.0
    %3404 = vmatpush1.xpose.msra.mxu0 0.0
    %3405 = vmatprep.subr.mxu0 0.0
    %3406 = vmatpush1.xpose.msra.mxu0 0.0
    %3407 = vmatprep.subr.mxu0 0.0
    %3408 = vmatpush1.xpose.msra.mxu0 0.0
    %3409 = vmatprep.subr.mxu0 0.0
    %3410 = vmatpush1.xpose.msra.mxu0 0.0
    %3411 = vmatprep.subr.mxu0 0.0
    %3412 = vmatpush1.xpose.msra.mxu0 0.0
    %3413 = vmatprep.subr.mxu0 0.0
    %3414 = vmatpush1.xpose.msra.mxu0 0.0
    %3415 = vmatprep.subr.mxu0 0.0
    %3416 = vmatpush1.xpose.msra.mxu0 0.0
    %3417 = vmatprep.subr.mxu0 0.0
    %3418 = vmatpush1.xpose.msra.mxu0 0.0
    %3419 = vmatprep.subr.mxu0 0.0
    %3420 = vmatpush1.xpose.msra.mxu0 0.0
    %3421 = vmatprep.subr.mxu0 0.0
    %3422 = vmatpush1.xpose.msra.mxu0 0.0
    %3423 = vmatprep.subr.mxu0 0.0
    %3424 = vmatpush1.xpose.msra.mxu0 0.0
    %3425 = vmatprep.subr.mxu0 0.0
    %3426 = vmatpush1.xpose.msra.mxu0 0.0
    %3427 = vmatprep.mubr.f32.mxu0 0.0
    %3428 = vmatmul.mubr.f32.gmra.mrb[0].mxu0 %v3358
    %v3429 = vpop.f32.mrb[0].mxu0
    %v3430 = vadd.f32 0.0, %v3429
    %v3431 = vpop.f32.mrb[0].mxu0
    %3432 = vdwg.mxu0
    %v3433 = vsel %vm409, %v3430, -inf
    %3434 = vmax.xlane.f32.xlu0 %v3433
    %v3435 = vpop.xlane.xlu0 %3434
    %v3436 = vsub.f32 %v3430, %v3435
    %v3437 = vmul.f32 %v3436, 1.442695
    %v3438 = vpow.pop %v3437
    %v3439 = vsel %vm409, %v3438, 0.0
    %3440 = vadd.xlane.f32.xlu0 %v3439
    %v3441 = vpop.xlane.xlu0 %3440
    %v3442 = vrcp.pop %v3441
    %v3443 = vmul.f32 %v3438, %v3442
    %v3445 = vsel %vm409, %v3443, 0
    %3447 = vmatprep.subr.mxu0 0.0
    %3448 = vmatpush1.msra.mxu0 %v3119
    %3449 = vmatprep.subr.mxu0 0.0
    %3450 = vmatpush1.msra.mxu0 0.0
    %3451 = vmatprep.subr.mxu0 0.0
    %3452 = vmatpush1.msra.mxu0 0.0
    %3453 = vmatprep.subr.mxu0 0.0
    %3454 = vmatpush1.msra.mxu0 0.0
    %3455 = vmatprep.subr.mxu0 0.0
    %3456 = vmatpush1.msra.mxu0 0.0
    %3457 = vmatprep.subr.mxu0 0.0
    %3458 = vmatpush1.msra.mxu0 0.0
    %3459 = vmatprep.subr.mxu0 0.0
    %3460 = vmatpush1.msra.mxu0 0.0
    %3461 = vmatprep.subr.mxu0 0.0
    %3462 = vmatpush1.msra.mxu0 0.0
    %3463 = vmatprep.subr.mxu0 0.0
    %3464 = vmatpush1.msra.mxu0 0.0
    %3465 = vmatprep.subr.mxu0 0.0
    %3466 = vmatpush1.msra.mxu0 0.0
    %3467 = vmatprep.subr.mxu0 0.0
    %3468 = vmatpush1.msra.mxu0 0.0
    %3469 = vmatprep.subr.mxu0 0.0
    %3470 = vmatpush1.msra.mxu0 0.0
    %3471 = vmatprep.subr.mxu0 0.0
    %3472 = vmatpush1.msra.mxu0 0.0
    %3473 = vmatprep.subr.mxu0 0.0
    %3474 = vmatpush1.msra.mxu0 0.0
    %3475 = vmatprep.subr.mxu0 0.0
    %3476 = vmatpush1.msra.mxu0 0.0
    %3477 = vmatprep.subr.mxu0 0.0
    %3478 = vmatpush1.msra.mxu0 0.0
    %3479 = vmatprep.subr.mxu0 0.0
    %3480 = vmatpush1.msra.mxu0 0.0
    %3481 = vmatprep.subr.mxu0 0.0
    %3482 = vmatpush1.msra.mxu0 0.0
    %3483 = vmatprep.subr.mxu0 0.0
    %3484 = vmatpush1.msra.mxu0 0.0
    %3485 = vmatprep.subr.mxu0 0.0
    %3486 = vmatpush1.msra.mxu0 0.0
    %3487 = vmatprep.subr.mxu0 0.0
    %3488 = vmatpush1.msra.mxu0 0.0
    %3489 = vmatprep.subr.mxu0 0.0
    %3490 = vmatpush1.msra.mxu0 0.0
    %3491 = vmatprep.subr.mxu0 0.0
    %3492 = vmatpush1.msra.mxu0 0.0
    %3493 = vmatprep.subr.mxu0 0.0
    %3494 = vmatpush1.msra.mxu0 0.0
    %3495 = vmatprep.subr.mxu0 0.0
    %3496 = vmatpush1.msra.mxu0 0.0
    %3497 = vmatprep.subr.mxu0 0.0
    %3498 = vmatpush1.msra.mxu0 0.0
    %3499 = vmatprep.subr.mxu0 0.0
    %3500 = vmatpush1.msra.mxu0 0.0
    %3501 = vmatprep.subr.mxu0 0.0
    %3502 = vmatpush1.msra.mxu0 0.0
    %3503 = vmatprep.subr.mxu0 0.0
    %3504 = vmatpush1.msra.mxu0 0.0
    %3505 = vmatprep.subr.mxu0 0.0
    %3506 = vmatpush1.msra.mxu0 0.0
    %3507 = vmatprep.subr.mxu0 0.0
    %3508 = vmatpush1.msra.mxu0 0.0
    %3509 = vmatprep.subr.mxu0 0.0
    %3510 = vmatpush1.msra.mxu0 0.0
    %3511 = vmatprep.mubr.f32.mxu0 0.0
    %3512 = vmatmul.mubr.f32.gmra.mrb[0].mxu0 %v3445
    %v3513 = vpop.f32.mrb[0].mxu0
    %v3514 = vadd.f32 0.0, %v3513
    %v3515 = vpop.f32.mrb[0].mxu0
    %3516 = vdwg.mxu0
    %v3518 = vsel %vm409, %v2923, 0
    %3520 = vmatprep.subr.mxu0 0.0
    %3521 = vmatpush1.msra.mxu0 %v2745
    %3522 = vmatprep.subr.mxu0 0.0
    %3523 = vmatpush1.msra.mxu0 0.0
    %3524 = vmatprep.subr.mxu0 0.0
    %3525 = vmatpush1.msra.mxu0 0.0
    %3526 = vmatprep.subr.mxu0 0.0
    %3527 = vmatpush1.msra.mxu0 0.0
    %3528 = vmatprep.subr.mxu0 0.0
    %3529 = vmatpush1.msra.mxu0 0.0
    %3530 = vmatprep.subr.mxu0 0.0
    %3531 = vmatpush1.msra.mxu0 0.0
    %3532 = vmatprep.subr.mxu0 0.0
    %3533 = vmatpush1.msra.mxu0 0.0
    %3534 = vmatprep.subr.mxu0 0.0
    %3535 = vmatpush1.msra.mxu0 0.0
    %3536 = vmatprep.subr.mxu0 0.0
    %3537 = vmatpush1.msra.mxu0 0.0
    %3538 = vmatprep.subr.mxu0 0.0
    %3539 = vmatpush1.msra.mxu0 0.0
    %3540 = vmatprep.subr.mxu0 0.0
    %3541 = vmatpush1.msra.mxu0 0.0
    %3542 = vmatprep.subr.mxu0 0.0
    %3543 = vmatpush1.msra.mxu0 0.0
    %3544 = vmatprep.subr.mxu0 0.0
    %3545 = vmatpush1.msra.mxu0 0.0
    %3546 = vmatprep.subr.mxu0 0.0
    %3547 = vmatpush1.msra.mxu0 0.0
    %3548 = vmatprep.subr.mxu0 0.0
    %3549 = vmatpush1.msra.mxu0 0.0
    %3550 = vmatprep.subr.mxu0 0.0
    %3551 = vmatpush1.msra.mxu0 0.0
    %3552 = vmatprep.subr.mxu0 0.0
    %3553 = vmatpush1.msra.mxu0 0.0
    %3554 = vmatprep.subr.mxu0 0.0
    %3555 = vmatpush1.msra.mxu0 0.0
    %3556 = vmatprep.subr.mxu0 0.0
    %3557 = vmatpush1.msra.mxu0 0.0
    %3558 = vmatprep.subr.mxu0 0.0
    %3559 = vmatpush1.msra.mxu0 0.0
    %3560 = vmatprep.subr.mxu0 0.0
    %3561 = vmatpush1.msra.mxu0 0.0
    %3562 = vmatprep.subr.mxu0 0.0
    %3563 = vmatpush1.msra.mxu0 0.0
    %3564 = vmatprep.subr.mxu0 0.0
    %3565 = vmatpush1.msra.mxu0 0.0
    %3566 = vmatprep.subr.mxu0 0.0
    %3567 = vmatpush1.msra.mxu0 0.0
    %3568 = vmatprep.subr.mxu0 0.0
    %3569 = vmatpush1.msra.mxu0 0.0
    %3570 = vmatprep.subr.mxu0 0.0
    %3571 = vmatpush1.msra.mxu0 0.0
    %3572 = vmatprep.subr.mxu0 0.0
    %3573 = vmatpush1.msra.mxu0 0.0
    %3574 = vmatprep.subr.mxu0 0.0
    %3575 = vmatpush1.msra.mxu0 0.0
    %3576 = vmatprep.subr.mxu0 0.0
    %3577 = vmatpush1.msra.mxu0 0.0
    %3578 = vmatprep.subr.mxu0 0.0
    %3579 = vmatpush1.msra.mxu0 0.0
    %3580 = vmatprep.subr.mxu0 0.0
    %3581 = vmatpush1.msra.mxu0 0.0
    %3582 = vmatprep.subr.mxu0 0.0
    %3583 = vmatpush1.msra.mxu0 0.0
    %3584 = vmatprep.mubr.f32.mxu0 0.0
    %3585 = vmatmul.mubr.f32.gmra.mrb[0].mxu0 %v3518
    %v3586 = vpop.f32.mrb[0].mxu0
    %v3587 = vadd.f32 %v3514, %v3586
    %v3588 = vpop.f32.mrb[0].mxu0
    %3589 = vdwg.mxu0
    %s3590 = scalar_lea.vmem %s37, 32
    %v3591 = vld [vmem:[%s3590] sm:$0xf]
    %v3592 = vld [vmem:[%s3590 + $0x4] sm:$0xf]
    %v3593 = vld [vmem:[%s3590 + $0x8] sm:$0xf]
    %v3594 = vld [vmem:[%s3590 + $0xc] sm:$0xf]
    %s3595 = scalar_lea.vmem %s39, 2
    %v3596 = vld [vmem:[%s3595] sm:$0x1]
    %v3598 = vlaneseq
    %v3599 = vshrl.u32 %v3598, 7
    %v3600 = vsub.s32 0, %v3599
    %v3601 = vrot.slane %v3596, %v3600
    %v3607 = vunpack.c.l.b16 %v3591
    %v3608 = vunpack.c.l.b16 %v3592
    %v3609 = vunpack.c.l.b16 %v3593
    %v3610 = vunpack.c.l.b16 %v3594
    %v3611 = vpack.c.b16 %v3608, %v3607
    %v3612 = vpack.c.b16 %v3610, %v3609
    %3615 = vmatprep.subr.bf16.mxu0 0
    %3616 = vmatpush1.bf16.msra.mxu0 %v3611
    %3617 = vmatprep.subr.bf16.mxu0 0
    %3618 = vmatpush1.bf16.msra.mxu0 %v3612
    %3619 = vmatprep.subr.bf16.mxu0 0
    %3620 = vmatpush1.bf16.msra.mxu0 0
    %3621 = vmatprep.subr.bf16.mxu0 0
    %3622 = vmatpush1.bf16.msra.mxu0 0
    %3623 = vmatprep.subr.bf16.mxu0 0
    %3624 = vmatpush1.bf16.msra.mxu0 0
    %3625 = vmatprep.subr.bf16.mxu0 0
    %3626 = vmatpush1.bf16.msra.mxu0 0
    %3627 = vmatprep.subr.bf16.mxu0 0
    %3628 = vmatpush1.bf16.msra.mxu0 0
    %3629 = vmatprep.subr.bf16.mxu0 0
    %3630 = vmatpush1.bf16.msra.mxu0 0
    %3631 = vmatprep.subr.bf16.mxu0 0
    %3632 = vmatpush1.bf16.msra.mxu0 0
    %3633 = vmatprep.subr.bf16.mxu0 0
    %3634 = vmatpush1.bf16.msra.mxu0 0
    %3635 = vmatprep.subr.bf16.mxu0 0
    %3636 = vmatpush1.bf16.msra.mxu0 0
    %3637 = vmatprep.subr.bf16.mxu0 0
    %3638 = vmatpush1.bf16.msra.mxu0 0
    %3639 = vmatprep.subr.bf16.mxu0 0
    %3640 = vmatpush1.bf16.msra.mxu0 0
    %3641 = vmatprep.subr.bf16.mxu0 0
    %3642 = vmatpush1.bf16.msra.mxu0 0
    %3643 = vmatprep.subr.bf16.mxu0 0
    %3644 = vmatpush1.bf16.msra.mxu0 0
    %3645 = vmatprep.subr.bf16.mxu0 0
    %3646 = vmatpush1.bf16.msra.mxu0 0
    %3647 = vmatprep.mubr.bf16.mxu0 0
    %3648 = vmatmul.mubr.bf16.gmra.mrb[0].mxu0 %v2577
    %v3649 = vpop.f32.mrb[0].mxu0
    %v3650 = vadd.f32 %v3601, %v3649
    %v3651 = vpop.f32.mrb[0].mxu0
    %v3652 = vpop.f32.mrb[0].mxu0
    %v3653 = vadd.f32 %v3601, %v3652
    %v3654 = vpop.f32.mrb[0].mxu0
    %3655 = vdwg.mxu0
    %s3656 = scalar_lea.vmem %s41, 32
    %v3657 = vld [vmem:[%s3656] sm:$0xf]
    %v3658 = vld [vmem:[%s3656 + $0x4] sm:$0xf]
    %v3659 = vld [vmem:[%s3656 + $0x8] sm:$0xf]
    %v3660 = vld [vmem:[%s3656 + $0xc] sm:$0xf]
    %s3661 = scalar_lea.vmem %s43, 2
    %v3662 = vld [vmem:[%s3661] sm:$0x1]
    %v3664 = vlaneseq
    %v3665 = vshrl.u32 %v3664, 7
    %v3666 = vsub.s32 0, %v3665
    %v3667 = vrot.slane %v3662, %v3666
    %v3673 = vunpack.c.l.b16 %v3657
    %v3674 = vunpack.c.l.b16 %v3658
    %v3675 = vunpack.c.l.b16 %v3659
    %v3676 = vunpack.c.l.b16 %v3660
    %v3677 = vpack.c.b16 %v3674, %v3673
    %v3678 = vpack.c.b16 %v3676, %v3675
    %3681 = vmatprep.subr.bf16.mxu0 0
    %3682 = vmatpush1.bf16.msra.mxu0 %v3677
    %3683 = vmatprep.subr.bf16.mxu0 0
    %3684 = vmatpush1.bf16.msra.mxu0 %v3678
    %3685 = vmatprep.subr.bf16.mxu0 0
    %3686 = vmatpush1.bf16.msra.mxu0 0
    %3687 = vmatprep.subr.bf16.mxu0 0
    %3688 = vmatpush1.bf16.msra.mxu0 0
    %3689 = vmatprep.subr.bf16.mxu0 0
    %3690 = vmatpush1.bf16.msra.mxu0 0
    %3691 = vmatprep.subr.bf16.mxu0 0
    %3692 = vmatpush1.bf16.msra.mxu0 0
    %3693 = vmatprep.subr.bf16.mxu0 0
    %3694 = vmatpush1.bf16.msra.mxu0 0
    %3695 = vmatprep.subr.bf16.mxu0 0
    %3696 = vmatpush1.bf16.msra.mxu0 0
    %3697 = vmatprep.subr.bf16.mxu0 0
    %3698 = vmatpush1.bf16.msra.mxu0 0
    %3699 = vmatprep.subr.bf16.mxu0 0
    %3700 = vmatpush1.bf16.msra.mxu0 0
    %3701 = vmatprep.subr.bf16.mxu0 0
    %3702 = vmatpush1.bf16.msra.mxu0 0
    %3703 = vmatprep.subr.bf16.mxu0 0
    %3704 = vmatpush1.bf16.msra.mxu0 0
    %3705 = vmatprep.subr.bf16.mxu0 0
    %3706 = vmatpush1.bf16.msra.mxu0 0
    %3707 = vmatprep.subr.bf16.mxu0 0
    %3708 = vmatpush1.bf16.msra.mxu0 0
    %3709 = vmatprep.subr.bf16.mxu0 0
    %3710 = vmatpush1.bf16.msra.mxu0 0
    %3711 = vmatprep.subr.bf16.mxu0 0
    %3712 = vmatpush1.bf16.msra.mxu0 0
    %3713 = vmatprep.mubr.bf16.mxu0 0
    %3714 = vmatmul.mubr.bf16.gmra.mrb[0].mxu0 %v2577
    %v3715 = vpop.f32.mrb[0].mxu0
    %v3716 = vadd.f32 %v3667, %v3715
    %v3717 = vpop.f32.mrb[0].mxu0
    %v3718 = vpop.f32.mrb[0].mxu0
    %v3719 = vadd.f32 %v3667, %v3718
    %v3720 = vpop.f32.mrb[0].mxu0
    %3721 = vdwg.mxu0
    %s3722 = scalar_lea.vmem %s45, 32
    %v3723 = vld [vmem:[%s3722] sm:$0xf]
    %v3724 = vld [vmem:[%s3722 + $0x4] sm:$0xf]
    %v3725 = vld [vmem:[%s3722 + $0x8] sm:$0xf]
    %v3726 = vld [vmem:[%s3722 + $0xc] sm:$0xf]
    %s3727 = scalar_lea.vmem %s47, 2
    %v3728 = vld [vmem:[%s3727] sm:$0x1]
    %v3730 = vlaneseq
    %v3731 = vshrl.u32 %v3730, 7
    %v3732 = vsub.s32 0, %v3731
    %v3733 = vrot.slane %v3728, %v3732
    %v3739 = vunpack.c.l.b16 %v3723
    %v3740 = vunpack.c.l.b16 %v3724
    %v3741 = vunpack.c.l.b16 %v3725
    %v3742 = vunpack.c.l.b16 %v3726
    %v3743 = vpack.c.b16 %v3740, %v3739
    %v3744 = vpack.c.b16 %v3742, %v3741
    %3747 = vmatprep.subr.bf16.mxu0 0
    %3748 = vmatpush1.bf16.msra.mxu0 %v3743
    %3749 = vmatprep.subr.bf16.mxu0 0
    %3750 = vmatpush1.bf16.msra.mxu0 %v3744
    %3751 = vmatprep.subr.bf16.mxu0 0
    %3752 = vmatpush1.bf16.msra.mxu0 0
    %3753 = vmatprep.subr.bf16.mxu0 0
    %3754 = vmatpush1.bf16.msra.mxu0 0
    %3755 = vmatprep.subr.bf16.mxu0 0
    %3756 = vmatpush1.bf16.msra.mxu0 0
    %3757 = vmatprep.subr.bf16.mxu0 0
    %3758 = vmatpush1.bf16.msra.mxu0 0
    %3759 = vmatprep.subr.bf16.mxu0 0
    %3760 = vmatpush1.bf16.msra.mxu0 0
    %3761 = vmatprep.subr.bf16.mxu0 0
    %3762 = vmatpush1.bf16.msra.mxu0 0
    %3763 = vmatprep.subr.bf16.mxu0 0
    %3764 = vmatpush1.bf16.msra.mxu0 0
    %3765 = vmatprep.subr.bf16.mxu0 0
    %3766 = vmatpush1.bf16.msra.mxu0 0
    %3767 = vmatprep.subr.bf16.mxu0 0
    %3768 = vmatpush1.bf16.msra.mxu0 0
    %3769 = vmatprep.subr.bf16.mxu0 0
    %3770 = vmatpush1.bf16.msra.mxu0 0
    %3771 = vmatprep.subr.bf16.mxu0 0
    %3772 = vmatpush1.bf16.msra.mxu0 0
    %3773 = vmatprep.subr.bf16.mxu0 0
    %3774 = vmatpush1.bf16.msra.mxu0 0
    %3775 = vmatprep.subr.bf16.mxu0 0
    %3776 = vmatpush1.bf16.msra.mxu0 0
    %3777 = vmatprep.subr.bf16.mxu0 0
    %3778 = vmatpush1.bf16.msra.mxu0 0
    %3779 = vmatprep.mubr.bf16.mxu0 0
    %3780 = vmatmul.mubr.bf16.gmra.mrb[0].mxu0 %v2577
    %v3781 = vpop.f32.mrb[0].mxu0
    %v3782 = vadd.f32 %v3733, %v3781
    %v3783 = vpop.f32.mrb[0].mxu0
    %v3784 = vpop.f32.mrb[0].mxu0
    %v3785 = vadd.f32 %v3733, %v3784
    %v3786 = vpop.f32.mrb[0].mxu0
    %3787 = vdwg.mxu0
    %v3788 = vmul.f32 %v3650, 0.35355338
    %v3790 = vsel %vm409, %v3788, 0
    %v3793 = vsel %vm409, %v3716, 0
    %3795 = vmatprep.subr.mxu0 0.0
    %3796 = vmatpush1.xpose.msra.mxu0 %v3793
    %3797 = vmatprep.subr.mxu0 0.0
    %3798 = vmatpush1.xpose.msra.mxu0 0.0
    %3799 = vmatprep.subr.mxu0 0.0
    %3800 = vmatpush1.xpose.msra.mxu0 0.0
    %3801 = vmatprep.subr.mxu0 0.0
    %3802 = vmatpush1.xpose.msra.mxu0 0.0
    %3803 = vmatprep.subr.mxu0 0.0
    %3804 = vmatpush1.xpose.msra.mxu0 0.0
    %3805 = vmatprep.subr.mxu0 0.0
    %3806 = vmatpush1.xpose.msra.mxu0 0.0
    %3807 = vmatprep.subr.mxu0 0.0
    %3808 = vmatpush1.xpose.msra.mxu0 0.0
    %3809 = vmatprep.subr.mxu0 0.0
    %3810 = vmatpush1.xpose.msra.mxu0 0.0
    %3811 = vmatprep.subr.mxu0 0.0
    %3812 = vmatpush1.xpose.msra.mxu0 0.0
    %3813 = vmatprep.subr.mxu0 0.0
    %3814 = vmatpush1.xpose.msra.mxu0 0.0
    %3815 = vmatprep.subr.mxu0 0.0
    %3816 = vmatpush1.xpose.msra.mxu0 0.0
    %3817 = vmatprep.subr.mxu0 0.0
    %3818 = vmatpush1.xpose.msra.mxu0 0.0
    %3819 = vmatprep.subr.mxu0 0.0
    %3820 = vmatpush1.xpose.msra.mxu0 0.0
    %3821 = vmatprep.subr.mxu0 0.0
    %3822 = vmatpush1.xpose.msra.mxu0 0.0
    %3823 = vmatprep.subr.mxu0 0.0
    %3824 = vmatpush1.xpose.msra.mxu0 0.0
    %3825 = vmatprep.subr.mxu0 0.0
    %3826 = vmatpush1.xpose.msra.mxu0 0.0
    %3827 = vmatprep.subr.mxu0 0.0
    %3828 = vmatpush1.xpose.msra.mxu0 0.0
    %3829 = vmatprep.subr.mxu0 0.0
    %3830 = vmatpush1.xpose.msra.mxu0 0.0
    %3831 = vmatprep.subr.mxu0 0.0
    %3832 = vmatpush1.xpose.msra.mxu0 0.0
    %3833 = vmatprep.subr.mxu0 0.0
    %3834 = vmatpush1.xpose.msra.mxu0 0.0
    %3835 = vmatprep.subr.mxu0 0.0
    %3836 = vmatpush1.xpose.msra.mxu0 0.0
    %3837 = vmatprep.subr.mxu0 0.0
    %3838 = vmatpush1.xpose.msra.mxu0 0.0
    %3839 = vmatprep.subr.mxu0 0.0
    %3840 = vmatpush1.xpose.msra.mxu0 0.0
    %3841 = vmatprep.subr.mxu0 0.0
    %3842 = vmatpush1.xpose.msra.mxu0 0.0
    %3843 = vmatprep.subr.mxu0 0.0
    %3844 = vmatpush1.xpose.msra.mxu0 0.0
    %3845 = vmatprep.subr.mxu0 0.0
    %3846 = vmatpush1.xpose.msra.mxu0 0.0
    %3847 = vmatprep.subr.mxu0 0.0
    %3848 = vmatpush1.xpose.msra.mxu0 0.0
    %3849 = vmatprep.subr.mxu0 0.0
    %3850 = vmatpush1.xpose.msra.mxu0 0.0
    %3851 = vmatprep.subr.mxu0 0.0
    %3852 = vmatpush1.xpose.msra.mxu0 0.0
    %3853 = vmatprep.subr.mxu0 0.0
    %3854 = vmatpush1.xpose.msra.mxu0 0.0
    %3855 = vmatprep.subr.mxu0 0.0
    %3856 = vmatpush1.xpose.msra.mxu0 0.0
    %3857 = vmatprep.subr.mxu0 0.0
    %3858 = vmatpush1.xpose.msra.mxu0 0.0
    %3859 = vmatprep.mubr.f32.mxu0 0.0
    %3860 = vmatmul.mubr.f32.gmra.mrb[0].mxu0 %v3790
    %v3861 = vpop.f32.mrb[0].mxu0
    %v3862 = vadd.f32 0.0, %v3861
    %v3863 = vpop.f32.mrb[0].mxu0
    %3864 = vdwg.mxu0
    %v3865 = vsel %vm409, %v3862, -inf
    %3866 = vmax.xlane.f32.xlu0 %v3865
    %v3867 = vpop.xlane.xlu0 %3866
    %v3868 = vsub.f32 %v3862, %v3867
    %v3869 = vmul.f32 %v3868, 1.442695
    %v3870 = vpow.pop %v3869
    %v3871 = vsel %vm409, %v3870, 0.0
    %3872 = vadd.xlane.f32.xlu0 %v3871
    %v3873 = vpop.xlane.xlu0 %3872
    %v3874 = vrcp.pop %v3873
    %v3875 = vmul.f32 %v3870, %v3874
    %v3877 = vsel %vm409, %v3875, 0
    %3879 = vmatprep.subr.mxu0 0.0
    %3880 = vmatpush1.msra.mxu0 %v3782
    %3881 = vmatprep.subr.mxu0 0.0
    %3882 = vmatpush1.msra.mxu0 0.0
    %3883 = vmatprep.subr.mxu0 0.0
    %3884 = vmatpush1.msra.mxu0 0.0
    %3885 = vmatprep.subr.mxu0 0.0
    %3886 = vmatpush1.msra.mxu0 0.0
    %3887 = vmatprep.subr.mxu0 0.0
    %3888 = vmatpush1.msra.mxu0 0.0
    %3889 = vmatprep.subr.mxu0 0.0
    %3890 = vmatpush1.msra.mxu0 0.0
    %3891 = vmatprep.subr.mxu0 0.0
    %3892 = vmatpush1.msra.mxu0 0.0
    %3893 = vmatprep.subr.mxu0 0.0
    %3894 = vmatpush1.msra.mxu0 0.0
    %3895 = vmatprep.subr.mxu0 0.0
    %3896 = vmatpush1.msra.mxu0 0.0
    %3897 = vmatprep.subr.mxu0 0.0
    %3898 = vmatpush1.msra.mxu0 0.0
    %3899 = vmatprep.subr.mxu0 0.0
    %3900 = vmatpush1.msra.mxu0 0.0
    %3901 = vmatprep.subr.mxu0 0.0
    %3902 = vmatpush1.msra.mxu0 0.0
    %3903 = vmatprep.subr.mxu0 0.0
    %3904 = vmatpush1.msra.mxu0 0.0
    %3905 = vmatprep.subr.mxu0 0.0
    %3906 = vmatpush1.msra.mxu0 0.0
    %3907 = vmatprep.subr.mxu0 0.0
    %3908 = vmatpush1.msra.mxu0 0.0
    %3909 = vmatprep.subr.mxu0 0.0
    %3910 = vmatpush1.msra.mxu0 0.0
    %3911 = vmatprep.subr.mxu0 0.0
    %3912 = vmatpush1.msra.mxu0 0.0
    %3913 = vmatprep.subr.mxu0 0.0
    %3914 = vmatpush1.msra.mxu0 0.0
    %3915 = vmatprep.subr.mxu0 0.0
    %3916 = vmatpush1.msra.mxu0 0.0
    %3917 = vmatprep.subr.mxu0 0.0
    %3918 = vmatpush1.msra.mxu0 0.0
    %3919 = vmatprep.subr.mxu0 0.0
    %3920 = vmatpush1.msra.mxu0 0.0
    %3921 = vmatprep.subr.mxu0 0.0
    %3922 = vmatpush1.msra.mxu0 0.0
    %3923 = vmatprep.subr.mxu0 0.0
    %3924 = vmatpush1.msra.mxu0 0.0
    %3925 = vmatprep.subr.mxu0 0.0
    %3926 = vmatpush1.msra.mxu0 0.0
    %3927 = vmatprep.subr.mxu0 0.0
    %3928 = vmatpush1.msra.mxu0 0.0
    %3929 = vmatprep.subr.mxu0 0.0
    %3930 = vmatpush1.msra.mxu0 0.0
    %3931 = vmatprep.subr.mxu0 0.0
    %3932 = vmatpush1.msra.mxu0 0.0
    %3933 = vmatprep.subr.mxu0 0.0
    %3934 = vmatpush1.msra.mxu0 0.0
    %3935 = vmatprep.subr.mxu0 0.0
    %3936 = vmatpush1.msra.mxu0 0.0
    %3937 = vmatprep.subr.mxu0 0.0
    %3938 = vmatpush1.msra.mxu0 0.0
    %3939 = vmatprep.subr.mxu0 0.0
    %3940 = vmatpush1.msra.mxu0 0.0
    %3941 = vmatprep.subr.mxu0 0.0
    %3942 = vmatpush1.msra.mxu0 0.0
    %3943 = vmatprep.mubr.f32.mxu0 0.0
    %3944 = vmatmul.mubr.f32.gmra.mrb[0].mxu0 %v3877
    %v3945 = vpop.f32.mrb[0].mxu0
    %v3946 = vadd.f32 0.0, %v3945
    %v3947 = vpop.f32.mrb[0].mxu0
    %3948 = vdwg.mxu0
    %v3949 = vadd.f32 %v3353, %v3946
    %v3950 = vmul.f32 %v3653, 0.35355338
    %v3952 = vsel %vm409, %v3950, 0
    %v3955 = vsel %vm409, %v3719, 0
    %3957 = vmatprep.subr.mxu0 0.0
    %3958 = vmatpush1.xpose.msra.mxu0 %v3955
    %3959 = vmatprep.subr.mxu0 0.0
    %3960 = vmatpush1.xpose.msra.mxu0 0.0
    %3961 = vmatprep.subr.mxu0 0.0
    %3962 = vmatpush1.xpose.msra.mxu0 0.0
    %3963 = vmatprep.subr.mxu0 0.0
    %3964 = vmatpush1.xpose.msra.mxu0 0.0
    %3965 = vmatprep.subr.mxu0 0.0
    %3966 = vmatpush1.xpose.msra.mxu0 0.0
    %3967 = vmatprep.subr.mxu0 0.0
    %3968 = vmatpush1.xpose.msra.mxu0 0.0
    %3969 = vmatprep.subr.mxu0 0.0
    %3970 = vmatpush1.xpose.msra.mxu0 0.0
    %3971 = vmatprep.subr.mxu0 0.0
    %3972 = vmatpush1.xpose.msra.mxu0 0.0
    %3973 = vmatprep.subr.mxu0 0.0
    %3974 = vmatpush1.xpose.msra.mxu0 0.0
    %3975 = vmatprep.subr.mxu0 0.0
    %3976 = vmatpush1.xpose.msra.mxu0 0.0
    %3977 = vmatprep.subr.mxu0 0.0
    %3978 = vmatpush1.xpose.msra.mxu0 0.0
    %3979 = vmatprep.subr.mxu0 0.0
    %3980 = vmatpush1.xpose.msra.mxu0 0.0
    %3981 = vmatprep.subr.mxu0 0.0
    %3982 = vmatpush1.xpose.msra.mxu0 0.0
    %3983 = vmatprep.subr.mxu0 0.0
    %3984 = vmatpush1.xpose.msra.mxu0 0.0
    %3985 = vmatprep.subr.mxu0 0.0
    %3986 = vmatpush1.xpose.msra.mxu0 0.0
    %3987 = vmatprep.subr.mxu0 0.0
    %3988 = vmatpush1.xpose.msra.mxu0 0.0
    %3989 = vmatprep.subr.mxu0 0.0
    %3990 = vmatpush1.xpose.msra.mxu0 0.0
    %3991 = vmatprep.subr.mxu0 0.0
    %3992 = vmatpush1.xpose.msra.mxu0 0.0
    %3993 = vmatprep.subr.mxu0 0.0
    %3994 = vmatpush1.xpose.msra.mxu0 0.0
    %3995 = vmatprep.subr.mxu0 0.0
    %3996 = vmatpush1.xpose.msra.mxu0 0.0
    %3997 = vmatprep.subr.mxu0 0.0
    %3998 = vmatpush1.xpose.msra.mxu0 0.0
    %3999 = vmatprep.subr.mxu0 0.0
    %4000 = vmatpush1.xpose.msra.mxu0 0.0
    %4001 = vmatprep.subr.mxu0 0.0
    %4002 = vmatpush1.xpose.msra.mxu0 0.0
    %4003 = vmatprep.subr.mxu0 0.0
    %4004 = vmatpush1.xpose.msra.mxu0 0.0
    %4005 = vmatprep.subr.mxu0 0.0
    %4006 = vmatpush1.xpose.msra.mxu0 0.0
    %4007 = vmatprep.subr.mxu0 0.0
    %4008 = vmatpush1.xpose.msra.mxu0 0.0
    %4009 = vmatprep.subr.mxu0 0.0
    %4010 = vmatpush1.xpose.msra.mxu0 0.0
    %4011 = vmatprep.subr.mxu0 0.0
    %4012 = vmatpush1.xpose.msra.mxu0 0.0
    %4013 = vmatprep.subr.mxu0 0.0
    %4014 = vmatpush1.xpose.msra.mxu0 0.0
    %4015 = vmatprep.subr.mxu0 0.0
    %4016 = vmatpush1.xpose.msra.mxu0 0.0
    %4017 = vmatprep.subr.mxu0 0.0
    %4018 = vmatpush1.xpose.msra.mxu0 0.0
    %4019 = vmatprep.subr.mxu0 0.0
    %4020 = vmatpush1.xpose.msra.mxu0 0.0
    %4021 = vmatprep.mubr.f32.mxu0 0.0
    %4022 = vmatmul.mubr.f32.gmra.mrb[0].mxu0 %v3952
    %v4023 = vpop.f32.mrb[0].mxu0
    %v4024 = vadd.f32 0.0, %v4023
    %v4025 = vpop.f32.mrb[0].mxu0
    %4026 = vdwg.mxu0
    %v4027 = vsel %vm409, %v4024, -inf
    %4028 = vmax.xlane.f32.xlu0 %v4027
    %v4029 = vpop.xlane.xlu0 %4028
    %v4030 = vsub.f32 %v4024, %v4029
    %v4031 = vmul.f32 %v4030, 1.442695
    %v4032 = vpow.pop %v4031
    %v4033 = vsel %vm409, %v4032, 0.0
    %4034 = vadd.xlane.f32.xlu0 %v4033
    %v4035 = vpop.xlane.xlu0 %4034
    %v4036 = vrcp.pop %v4035
    %v4037 = vmul.f32 %v4032, %v4036
    %v4039 = vsel %vm409, %v4037, 0
    %4041 = vmatprep.subr.mxu0 0.0
    %4042 = vmatpush1.msra.mxu0 %v3785
    %4043 = vmatprep.subr.mxu0 0.0
    %4044 = vmatpush1.msra.mxu0 0.0
    %4045 = vmatprep.subr.mxu0 0.0
    %4046 = vmatpush1.msra.mxu0 0.0
    %4047 = vmatprep.subr.mxu0 0.0
    %4048 = vmatpush1.msra.mxu0 0.0
    %4049 = vmatprep.subr.mxu0 0.0
    %4050 = vmatpush1.msra.mxu0 0.0
    %4051 = vmatprep.subr.mxu0 0.0
    %4052 = vmatpush1.msra.mxu0 0.0
    %4053 = vmatprep.subr.mxu0 0.0
    %4054 = vmatpush1.msra.mxu0 0.0
    %4055 = vmatprep.subr.mxu0 0.0
    %4056 = vmatpush1.msra.mxu0 0.0
    %4057 = vmatprep.subr.mxu0 0.0
    %4058 = vmatpush1.msra.mxu0 0.0
    %4059 = vmatprep.subr.mxu0 0.0
    %4060 = vmatpush1.msra.mxu0 0.0
    %4061 = vmatprep.subr.mxu0 0.0
    %4062 = vmatpush1.msra.mxu0 0.0
    %4063 = vmatprep.subr.mxu0 0.0
    %4064 = vmatpush1.msra.mxu0 0.0
    %4065 = vmatprep.subr.mxu0 0.0
    %4066 = vmatpush1.msra.mxu0 0.0
    %4067 = vmatprep.subr.mxu0 0.0
    %4068 = vmatpush1.msra.mxu0 0.0
    %4069 = vmatprep.subr.mxu0 0.0
    %4070 = vmatpush1.msra.mxu0 0.0
    %4071 = vmatprep.subr.mxu0 0.0
    %4072 = vmatpush1.msra.mxu0 0.0
    %4073 = vmatprep.subr.mxu0 0.0
    %4074 = vmatpush1.msra.mxu0 0.0
    %4075 = vmatprep.subr.mxu0 0.0
    %4076 = vmatpush1.msra.mxu0 0.0
    %4077 = vmatprep.subr.mxu0 0.0
    %4078 = vmatpush1.msra.mxu0 0.0
    %4079 = vmatprep.subr.mxu0 0.0
    %4080 = vmatpush1.msra.mxu0 0.0
    %4081 = vmatprep.subr.mxu0 0.0
    %4082 = vmatpush1.msra.mxu0 0.0
    %4083 = vmatprep.subr.mxu0 0.0
    %4084 = vmatpush1.msra.mxu0 0.0
    %4085 = vmatprep.subr.mxu0 0.0
    %4086 = vmatpush1.msra.mxu0 0.0
    %4087 = vmatprep.subr.mxu0 0.0
    %4088 = vmatpush1.msra.mxu0 0.0
    %4089 = vmatprep.subr.mxu0 0.0
    %4090 = vmatpush1.msra.mxu0 0.0
    %4091 = vmatprep.subr.mxu0 0.0
    %4092 = vmatpush1.msra.mxu0 0.0
    %4093 = vmatprep.subr.mxu0 0.0
    %4094 = vmatpush1.msra.mxu0 0.0
    %4095 = vmatprep.subr.mxu0 0.0
    %4096 = vmatpush1.msra.mxu0 0.0
    %4097 = vmatprep.subr.mxu0 0.0
    %4098 = vmatpush1.msra.mxu0 0.0
    %4099 = vmatprep.subr.mxu0 0.0
    %4100 = vmatpush1.msra.mxu0 0.0
    %4101 = vmatprep.subr.mxu0 0.0
    %4102 = vmatpush1.msra.mxu0 0.0
    %4103 = vmatprep.subr.mxu0 0.0
    %4104 = vmatpush1.msra.mxu0 0.0
    %4105 = vmatprep.mubr.f32.mxu0 0.0
    %4106 = vmatmul.mubr.f32.gmra.mrb[0].mxu0 %v4039
    %v4107 = vpop.f32.mrb[0].mxu0
    %v4108 = vadd.f32 0.0, %v4107
    %v4109 = vpop.f32.mrb[0].mxu0
    %4110 = vdwg.mxu0
    %v4111 = vadd.f32 %v3587, %v4108
    %s4112 = scalar_lea.vmem %s37, 48
    %v4113 = vld [vmem:[%s4112] sm:$0xf]
    %v4114 = vld [vmem:[%s4112 + $0x4] sm:$0xf]
    %v4115 = vld [vmem:[%s4112 + $0x8] sm:$0xf]
    %v4116 = vld [vmem:[%s4112 + $0xc] sm:$0xf]
    %s4117 = scalar_lea.vmem %s39, 3
    %v4118 = vld [vmem:[%s4117] sm:$0x1]
    %v4120 = vlaneseq
    %v4121 = vshrl.u32 %v4120, 7
    %v4122 = vsub.s32 0, %v4121
    %v4123 = vrot.slane %v4118, %v4122
    %v4129 = vunpack.c.l.b16 %v4113
    %v4130 = vunpack.c.l.b16 %v4114
    %v4131 = vunpack.c.l.b16 %v4115
    %v4132 = vunpack.c.l.b16 %v4116
    %v4133 = vpack.c.b16 %v4130, %v4129
    %v4134 = vpack.c.b16 %v4132, %v4131
    %4137 = vmatprep.subr.bf16.mxu0 0
    %4138 = vmatpush1.bf16.msra.mxu0 %v4133
    %4139 = vmatprep.subr.bf16.mxu0 0
    %4140 = vmatpush1.bf16.msra.mxu0 %v4134
    %4141 = vmatprep.subr.bf16.mxu0 0
    %4142 = vmatpush1.bf16.msra.mxu0 0
    %4143 = vmatprep.subr.bf16.mxu0 0
    %4144 = vmatpush1.bf16.msra.mxu0 0
    %4145 = vmatprep.subr.bf16.mxu0 0
    %4146 = vmatpush1.bf16.msra.mxu0 0
    %4147 = vmatprep.subr.bf16.mxu0 0
    %4148 = vmatpush1.bf16.msra.mxu0 0
    %4149 = vmatprep.subr.bf16.mxu0 0
    %4150 = vmatpush1.bf16.msra.mxu0 0
    %4151 = vmatprep.subr.bf16.mxu0 0
    %4152 = vmatpush1.bf16.msra.mxu0 0
    %4153 = vmatprep.subr.bf16.mxu0 0
    %4154 = vmatpush1.bf16.msra.mxu0 0
    %4155 = vmatprep.subr.bf16.mxu0 0
    %4156 = vmatpush1.bf16.msra.mxu0 0
    %4157 = vmatprep.subr.bf16.mxu0 0
    %4158 = vmatpush1.bf16.msra.mxu0 0
    %4159 = vmatprep.subr.bf16.mxu0 0
    %4160 = vmatpush1.bf16.msra.mxu0 0
    %4161 = vmatprep.subr.bf16.mxu0 0
    %4162 = vmatpush1.bf16.msra.mxu0 0
    %4163 = vmatprep.subr.bf16.mxu0 0
    %4164 = vmatpush1.bf16.msra.mxu0 0
    %4165 = vmatprep.subr.bf16.mxu0 0
    %4166 = vmatpush1.bf16.msra.mxu0 0
    %4167 = vmatprep.subr.bf16.mxu0 0
    %4168 = vmatpush1.bf16.msra.mxu0 0
    %4169 = vmatprep.mubr.bf16.mxu0 0
    %4170 = vmatmul.mubr.bf16.gmra.mrb[0].mxu0 %v2577
    %v4171 = vpop.f32.mrb[0].mxu0
    %v4172 = vadd.f32 %v4123, %v4171
    %v4173 = vpop.f32.mrb[0].mxu0
    %v4174 = vpop.f32.mrb[0].mxu0
    %v4175 = vadd.f32 %v4123, %v4174
    %v4176 = vpop.f32.mrb[0].mxu0
    %4177 = vdwg.mxu0
    %s4178 = scalar_lea.vmem %s41, 48
    %v4179 = vld [vmem:[%s4178] sm:$0xf]
    %v4180 = vld [vmem:[%s4178 + $0x4] sm:$0xf]
    %v4181 = vld [vmem:[%s4178 + $0x8] sm:$0xf]
    %v4182 = vld [vmem:[%s4178 + $0xc] sm:$0xf]
    %s4183 = scalar_lea.vmem %s43, 3
    %v4184 = vld [vmem:[%s4183] sm:$0x1]
    %v4186 = vlaneseq
    %v4187 = vshrl.u32 %v4186, 7
    %v4188 = vsub.s32 0, %v4187
    %v4189 = vrot.slane %v4184, %v4188
    %v4195 = vunpack.c.l.b16 %v4179
    %v4196 = vunpack.c.l.b16 %v4180
    %v4197 = vunpack.c.l.b16 %v4181
    %v4198 = vunpack.c.l.b16 %v4182
    %v4199 = vpack.c.b16 %v4196, %v4195
    %v4200 = vpack.c.b16 %v4198, %v4197
    %4203 = vmatprep.subr.bf16.mxu0 0
    %4204 = vmatpush1.bf16.msra.mxu0 %v4199
    %4205 = vmatprep.subr.bf16.mxu0 0
    %4206 = vmatpush1.bf16.msra.mxu0 %v4200
    %4207 = vmatprep.subr.bf16.mxu0 0
    %4208 = vmatpush1.bf16.msra.mxu0 0
    %4209 = vmatprep.subr.bf16.mxu0 0
    %4210 = vmatpush1.bf16.msra.mxu0 0
    %4211 = vmatprep.subr.bf16.mxu0 0
    %4212 = vmatpush1.bf16.msra.mxu0 0
    %4213 = vmatprep.subr.bf16.mxu0 0
    %4214 = vmatpush1.bf16.msra.mxu0 0
    %4215 = vmatprep.subr.bf16.mxu0 0
    %4216 = vmatpush1.bf16.msra.mxu0 0
    %4217 = vmatprep.subr.bf16.mxu0 0
    %4218 = vmatpush1.bf16.msra.mxu0 0
    %4219 = vmatprep.subr.bf16.mxu0 0
    %4220 = vmatpush1.bf16.msra.mxu0 0
    %4221 = vmatprep.subr.bf16.mxu0 0
    %4222 = vmatpush1.bf16.msra.mxu0 0
    %4223 = vmatprep.subr.bf16.mxu0 0
    %4224 = vmatpush1.bf16.msra.mxu0 0
    %4225 = vmatprep.subr.bf16.mxu0 0
    %4226 = vmatpush1.bf16.msra.mxu0 0
    %4227 = vmatprep.subr.bf16.mxu0 0
    %4228 = vmatpush1.bf16.msra.mxu0 0
    %4229 = vmatprep.subr.bf16.mxu0 0
    %4230 = vmatpush1.bf16.msra.mxu0 0
    %4231 = vmatprep.subr.bf16.mxu0 0
    %4232 = vmatpush1.bf16.msra.mxu0 0
    %4233 = vmatprep.subr.bf16.mxu0 0
    %4234 = vmatpush1.bf16.msra.mxu0 0
    %4235 = vmatprep.mubr.bf16.mxu0 0
    %4236 = vmatmul.mubr.bf16.gmra.mrb[0].mxu0 %v2577
    %v4237 = vpop.f32.mrb[0].mxu0
    %v4238 = vadd.f32 %v4189, %v4237
    %v4239 = vpop.f32.mrb[0].mxu0
    %v4240 = vpop.f32.mrb[0].mxu0
    %v4241 = vadd.f32 %v4189, %v4240
    %v4242 = vpop.f32.mrb[0].mxu0
    %4243 = vdwg.mxu0
    %s4244 = scalar_lea.vmem %s45, 48
    %v4245 = vld [vmem:[%s4244] sm:$0xf]
    %v4246 = vld [vmem:[%s4244 + $0x4] sm:$0xf]
    %v4247 = vld [vmem:[%s4244 + $0x8] sm:$0xf]
    %v4248 = vld [vmem:[%s4244 + $0xc] sm:$0xf]
    %s4249 = scalar_lea.vmem %s47, 3
    %v4250 = vld [vmem:[%s4249] sm:$0x1]
    %v4252 = vlaneseq
    %v4253 = vshrl.u32 %v4252, 7
    %v4254 = vsub.s32 0, %v4253
    %v4255 = vrot.slane %v4250, %v4254
    %v4261 = vunpack.c.l.b16 %v4245
    %v4262 = vunpack.c.l.b16 %v4246
    %v4263 = vunpack.c.l.b16 %v4247
    %v4264 = vunpack.c.l.b16 %v4248
    %v4265 = vpack.c.b16 %v4262, %v4261
    %v4266 = vpack.c.b16 %v4264, %v4263
    %4269 = vmatprep.subr.bf16.mxu0 0
    %4270 = vmatpush1.bf16.msra.mxu0 %v4265
    %4271 = vmatprep.subr.bf16.mxu0 0
    %4272 = vmatpush1.bf16.msra.mxu0 %v4266
    %4273 = vmatprep.subr.bf16.mxu0 0
    %4274 = vmatpush1.bf16.msra.mxu0 0
    %4275 = vmatprep.subr.bf16.mxu0 0
    %4276 = vmatpush1.bf16.msra.mxu0 0
    %4277 = vmatprep.subr.bf16.mxu0 0
    %4278 = vmatpush1.bf16.msra.mxu0 0
    %4279 = vmatprep.subr.bf16.mxu0 0
    %4280 = vmatpush1.bf16.msra.mxu0 0
    %4281 = vmatprep.subr.bf16.mxu0 0
    %4282 = vmatpush1.bf16.msra.mxu0 0
    %4283 = vmatprep.subr.bf16.mxu0 0
    %4284 = vmatpush1.bf16.msra.mxu0 0
    %4285 = vmatprep.subr.bf16.mxu0 0
    %4286 = vmatpush1.bf16.msra.mxu0 0
    %4287 = vmatprep.subr.bf16.mxu0 0
    %4288 = vmatpush1.bf16.msra.mxu0 0
    %4289 = vmatprep.subr.bf16.mxu0 0
    %4290 = vmatpush1.bf16.msra.mxu0 0
    %4291 = vmatprep.subr.bf16.mxu0 0
    %4292 = vmatpush1.bf16.msra.mxu0 0
    %4293 = vmatprep.subr.bf16.mxu0 0
    %4294 = vmatpush1.bf16.msra.mxu0 0
    %4295 = vmatprep.subr.bf16.mxu0 0
    %4296 = vmatpush1.bf16.msra.mxu0 0
    %4297 = vmatprep.subr.bf16.mxu0 0
    %4298 = vmatpush1.bf16.msra.mxu0 0
    %4299 = vmatprep.subr.bf16.mxu0 0
    %4300 = vmatpush1.bf16.msra.mxu0 0
    %4301 = vmatprep.mubr.bf16.mxu0 0
    %4302 = vmatmul.mubr.bf16.gmra.mrb[0].mxu0 %v2577
    %v4303 = vpop.f32.mrb[0].mxu0
    %v4304 = vadd.f32 %v4255, %v4303
    %v4305 = vpop.f32.mrb[0].mxu0
    %v4306 = vpop.f32.mrb[0].mxu0
    %v4307 = vadd.f32 %v4255, %v4306
    %v4308 = vpop.f32.mrb[0].mxu0
    %4309 = vdwg.mxu0
    %v4310 = vmul.f32 %v4172, 0.35355338
    %v4312 = vsel %vm409, %v4310, 0
    %v4315 = vsel %vm409, %v4238, 0
    %4317 = vmatprep.subr.mxu0 0.0
    %4318 = vmatpush1.xpose.msra.mxu0 %v4315
    %4319 = vmatprep.subr.mxu0 0.0
    %4320 = vmatpush1.xpose.msra.mxu0 0.0
    %4321 = vmatprep.subr.mxu0 0.0
    %4322 = vmatpush1.xpose.msra.mxu0 0.0
    %4323 = vmatprep.subr.mxu0 0.0
    %4324 = vmatpush1.xpose.msra.mxu0 0.0
    %4325 = vmatprep.subr.mxu0 0.0
    %4326 = vmatpush1.xpose.msra.mxu0 0.0
    %4327 = vmatprep.subr.mxu0 0.0
    %4328 = vmatpush1.xpose.msra.mxu0 0.0
    %4329 = vmatprep.subr.mxu0 0.0
    %4330 = vmatpush1.xpose.msra.mxu0 0.0
    %4331 = vmatprep.subr.mxu0 0.0
    %4332 = vmatpush1.xpose.msra.mxu0 0.0
    %4333 = vmatprep.subr.mxu0 0.0
    %4334 = vmatpush1.xpose.msra.mxu0 0.0
    %4335 = vmatprep.subr.mxu0 0.0
    %4336 = vmatpush1.xpose.msra.mxu0 0.0
    %4337 = vmatprep.subr.mxu0 0.0
    %4338 = vmatpush1.xpose.msra.mxu0 0.0
    %4339 = vmatprep.subr.mxu0 0.0
    %4340 = vmatpush1.xpose.msra.mxu0 0.0
    %4341 = vmatprep.subr.mxu0 0.0
    %4342 = vmatpush1.xpose.msra.mxu0 0.0
    %4343 = vmatprep.subr.mxu0 0.0
    %4344 = vmatpush1.xpose.msra.mxu0 0.0
    %4345 = vmatprep.subr.mxu0 0.0
    %4346 = vmatpush1.xpose.msra.mxu0 0.0
    %4347 = vmatprep.subr.mxu0 0.0
    %4348 = vmatpush1.xpose.msra.mxu0 0.0
    %4349 = vmatprep.subr.mxu0 0.0
    %4350 = vmatpush1.xpose.msra.mxu0 0.0
    %4351 = vmatprep.subr.mxu0 0.0
    %4352 = vmatpush1.xpose.msra.mxu0 0.0
    %4353 = vmatprep.subr.mxu0 0.0
    %4354 = vmatpush1.xpose.msra.mxu0 0.0
    %4355 = vmatprep.subr.mxu0 0.0
    %4356 = vmatpush1.xpose.msra.mxu0 0.0
    %4357 = vmatprep.subr.mxu0 0.0
    %4358 = vmatpush1.xpose.msra.mxu0 0.0
    %4359 = vmatprep.subr.mxu0 0.0
    %4360 = vmatpush1.xpose.msra.mxu0 0.0
    %4361 = vmatprep.subr.mxu0 0.0
    %4362 = vmatpush1.xpose.msra.mxu0 0.0
    %4363 = vmatprep.subr.mxu0 0.0
    %4364 = vmatpush1.xpose.msra.mxu0 0.0
    %4365 = vmatprep.subr.mxu0 0.0
    %4366 = vmatpush1.xpose.msra.mxu0 0.0
    %4367 = vmatprep.subr.mxu0 0.0
    %4368 = vmatpush1.xpose.msra.mxu0 0.0
    %4369 = vmatprep.subr.mxu0 0.0
    %4370 = vmatpush1.xpose.msra.mxu0 0.0
    %4371 = vmatprep.subr.mxu0 0.0
    %4372 = vmatpush1.xpose.msra.mxu0 0.0
    %4373 = vmatprep.subr.mxu0 0.0
    %4374 = vmatpush1.xpose.msra.mxu0 0.0
    %4375 = vmatprep.subr.mxu0 0.0
    %4376 = vmatpush1.xpose.msra.mxu0 0.0
    %4377 = vmatprep.subr.mxu0 0.0
    %4378 = vmatpush1.xpose.msra.mxu0 0.0
    %4379 = vmatprep.subr.mxu0 0.0
    %4380 = vmatpush1.xpose.msra.mxu0 0.0
    %4381 = vmatprep.mubr.f32.mxu0 0.0
    %4382 = vmatmul.mubr.f32.gmra.mrb[0].mxu0 %v4312
    %v4383 = vpop.f32.mrb[0].mxu0
    %v4384 = vadd.f32 0.0, %v4383
    %v4385 = vpop.f32.mrb[0].mxu0
    %4386 = vdwg.mxu0
    %v4387 = vsel %vm409, %v4384, -inf
    %4388 = vmax.xlane.f32.xlu0 %v4387
    %v4389 = vpop.xlane.xlu0 %4388
    %v4390 = vsub.f32 %v4384, %v4389
    %v4391 = vmul.f32 %v4390, 1.442695
    %v4392 = vpow.pop %v4391
    %v4393 = vsel %vm409, %v4392, 0.0
    %4394 = vadd.xlane.f32.xlu0 %v4393
    %v4395 = vpop.xlane.xlu0 %4394
    %v4396 = vrcp.pop %v4395
    %v4397 = vmul.f32 %v4392, %v4396
    %v4399 = vsel %vm409, %v4397, 0
    %4401 = vmatprep.subr.mxu0 0.0
    %4402 = vmatpush1.msra.mxu0 %v4304
    %4403 = vmatprep.subr.mxu0 0.0
    %4404 = vmatpush1.msra.mxu0 0.0
    %4405 = vmatprep.subr.mxu0 0.0
    %4406 = vmatpush1.msra.mxu0 0.0
    %4407 = vmatprep.subr.mxu0 0.0
    %4408 = vmatpush1.msra.mxu0 0.0
    %4409 = vmatprep.subr.mxu0 0.0
    %4410 = vmatpush1.msra.mxu0 0.0
    %4411 = vmatprep.subr.mxu0 0.0
    %4412 = vmatpush1.msra.mxu0 0.0
    %4413 = vmatprep.subr.mxu0 0.0
    %4414 = vmatpush1.msra.mxu0 0.0
    %4415 = vmatprep.subr.mxu0 0.0
    %4416 = vmatpush1.msra.mxu0 0.0
    %4417 = vmatprep.subr.mxu0 0.0
    %4418 = vmatpush1.msra.mxu0 0.0
    %4419 = vmatprep.subr.mxu0 0.0
    %4420 = vmatpush1.msra.mxu0 0.0
    %4421 = vmatprep.subr.mxu0 0.0
    %4422 = vmatpush1.msra.mxu0 0.0
    %4423 = vmatprep.subr.mxu0 0.0
    %4424 = vmatpush1.msra.mxu0 0.0
    %4425 = vmatprep.subr.mxu0 0.0
    %4426 = vmatpush1.msra.mxu0 0.0
    %4427 = vmatprep.subr.mxu0 0.0
    %4428 = vmatpush1.msra.mxu0 0.0
    %4429 = vmatprep.subr.mxu0 0.0
    %4430 = vmatpush1.msra.mxu0 0.0
    %4431 = vmatprep.subr.mxu0 0.0
    %4432 = vmatpush1.msra.mxu0 0.0
    %4433 = vmatprep.subr.mxu0 0.0
    %4434 = vmatpush1.msra.mxu0 0.0
    %4435 = vmatprep.subr.mxu0 0.0
    %4436 = vmatpush1.msra.mxu0 0.0
    %4437 = vmatprep.subr.mxu0 0.0
    %4438 = vmatpush1.msra.mxu0 0.0
    %4439 = vmatprep.subr.mxu0 0.0
    %4440 = vmatpush1.msra.mxu0 0.0
    %4441 = vmatprep.subr.mxu0 0.0
    %4442 = vmatpush1.msra.mxu0 0.0
    %4443 = vmatprep.subr.mxu0 0.0
    %4444 = vmatpush1.msra.mxu0 0.0
    %4445 = vmatprep.subr.mxu0 0.0
    %4446 = vmatpush1.msra.mxu0 0.0
    %4447 = vmatprep.subr.mxu0 0.0
    %4448 = vmatpush1.msra.mxu0 0.0
    %4449 = vmatprep.subr.mxu0 0.0
    %4450 = vmatpush1.msra.mxu0 0.0
    %4451 = vmatprep.subr.mxu0 0.0
    %4452 = vmatpush1.msra.mxu0 0.0
    %4453 = vmatprep.subr.mxu0 0.0
    %4454 = vmatpush1.msra.mxu0 0.0
    %4455 = vmatprep.subr.mxu0 0.0
    %4456 = vmatpush1.msra.mxu0 0.0
    %4457 = vmatprep.subr.mxu0 0.0
    %4458 = vmatpush1.msra.mxu0 0.0
    %4459 = vmatprep.subr.mxu0 0.0
    %4460 = vmatpush1.msra.mxu0 0.0
    %4461 = vmatprep.subr.mxu0 0.0
    %4462 = vmatpush1.msra.mxu0 0.0
    %4463 = vmatprep.subr.mxu0 0.0
    %4464 = vmatpush1.msra.mxu0 0.0
    %4465 = vmatprep.mubr.f32.mxu0 0.0
    %4466 = vmatmul.mubr.f32.gmra.mrb[0].mxu0 %v4399
    %v4467 = vpop.f32.mrb[0].mxu0
    %v4468 = vadd.f32 0.0, %v4467
    %v4469 = vpop.f32.mrb[0].mxu0
    %4470 = vdwg.mxu0
    %v4471 = vadd.f32 %v3949, %v4468
    %v4472 = vmul.f32 %v4175, 0.35355338
    %v4474 = vsel %vm409, %v4472, 0
    %v4477 = vsel %vm409, %v4241, 0
    %4479 = vmatprep.subr.mxu0 0.0
    %4480 = vmatpush1.xpose.msra.mxu0 %v4477
    %4481 = vmatprep.subr.mxu0 0.0
    %4482 = vmatpush1.xpose.msra.mxu0 0.0
    %4483 = vmatprep.subr.mxu0 0.0
    %4484 = vmatpush1.xpose.msra.mxu0 0.0
    %4485 = vmatprep.subr.mxu0 0.0
    %4486 = vmatpush1.xpose.msra.mxu0 0.0
    %4487 = vmatprep.subr.mxu0 0.0
    %4488 = vmatpush1.xpose.msra.mxu0 0.0
    %4489 = vmatprep.subr.mxu0 0.0
    %4490 = vmatpush1.xpose.msra.mxu0 0.0
    %4491 = vmatprep.subr.mxu0 0.0
    %4492 = vmatpush1.xpose.msra.mxu0 0.0
    %4493 = vmatprep.subr.mxu0 0.0
    %4494 = vmatpush1.xpose.msra.mxu0 0.0
    %4495 = vmatprep.subr.mxu0 0.0
    %4496 = vmatpush1.xpose.msra.mxu0 0.0
    %4497 = vmatprep.subr.mxu0 0.0
    %4498 = vmatpush1.xpose.msra.mxu0 0.0
    %4499 = vmatprep.subr.mxu0 0.0
    %4500 = vmatpush1.xpose.msra.mxu0 0.0
    %4501 = vmatprep.subr.mxu0 0.0
    %4502 = vmatpush1.xpose.msra.mxu0 0.0
    %4503 = vmatprep.subr.mxu0 0.0
    %4504 = vmatpush1.xpose.msra.mxu0 0.0
    %4505 = vmatprep.subr.mxu0 0.0
    %4506 = vmatpush1.xpose.msra.mxu0 0.0
    %4507 = vmatprep.subr.mxu0 0.0
    %4508 = vmatpush1.xpose.msra.mxu0 0.0
    %4509 = vmatprep.subr.mxu0 0.0
    %4510 = vmatpush1.xpose.msra.mxu0 0.0
    %4511 = vmatprep.subr.mxu0 0.0
    %4512 = vmatpush1.xpose.msra.mxu0 0.0
    %4513 = vmatprep.subr.mxu0 0.0
    %4514 = vmatpush1.xpose.msra.mxu0 0.0
    %4515 = vmatprep.subr.mxu0 0.0
    %4516 = vmatpush1.xpose.msra.mxu0 0.0
    %4517 = vmatprep.subr.mxu0 0.0
    %4518 = vmatpush1.xpose.msra.mxu0 0.0
    %4519 = vmatprep.subr.mxu0 0.0
    %4520 = vmatpush1.xpose.msra.mxu0 0.0
    %4521 = vmatprep.subr.mxu0 0.0
    %4522 = vmatpush1.xpose.msra.mxu0 0.0
    %4523 = vmatprep.subr.mxu0 0.0
    %4524 = vmatpush1.xpose.msra.mxu0 0.0
    %4525 = vmatprep.subr.mxu0 0.0
    %4526 = vmatpush1.xpose.msra.mxu0 0.0
    %4527 = vmatprep.subr.mxu0 0.0
    %4528 = vmatpush1.xpose.msra.mxu0 0.0
    %4529 = vmatprep.subr.mxu0 0.0
    %4530 = vmatpush1.xpose.msra.mxu0 0.0
    %4531 = vmatprep.subr.mxu0 0.0
    %4532 = vmatpush1.xpose.msra.mxu0 0.0
    %4533 = vmatprep.subr.mxu0 0.0
    %4534 = vmatpush1.xpose.msra.mxu0 0.0
    %4535 = vmatprep.subr.mxu0 0.0
    %4536 = vmatpush1.xpose.msra.mxu0 0.0
    %4537 = vmatprep.subr.mxu0 0.0
    %4538 = vmatpush1.xpose.msra.mxu0 0.0
    %4539 = vmatprep.subr.mxu0 0.0
    %4540 = vmatpush1.xpose.msra.mxu0 0.0
    %4541 = vmatprep.subr.mxu0 0.0
    %4542 = vmatpush1.xpose.msra.mxu0 0.0
    %4543 = vmatprep.mubr.f32.mxu0 0.0
    %4544 = vmatmul.mubr.f32.gmra.mrb[0].mxu0 %v4474
    %v4545 = vpop.f32.mrb[0].mxu0
    %v4546 = vadd.f32 0.0, %v4545
    %v4547 = vpop.f32.mrb[0].mxu0
    %4548 = vdwg.mxu0
    %v4549 = vsel %vm409, %v4546, -inf
    %4550 = vmax.xlane.f32.xlu0 %v4549
    %v4551 = vpop.xlane.xlu0 %4550
    %v4552 = vsub.f32 %v4546, %v4551
    %v4553 = vmul.f32 %v4552, 1.442695
    %v4554 = vpow.pop %v4553
    %v4555 = vsel %vm409, %v4554, 0.0
    %4556 = vadd.xlane.f32.xlu0 %v4555
    %v4557 = vpop.xlane.xlu0 %4556
    %v4558 = vrcp.pop %v4557
    %v4559 = vmul.f32 %v4554, %v4558
    %v4561 = vsel %vm409, %v4559, 0
    %4563 = vmatprep.subr.mxu0 0.0
    %4564 = vmatpush1.msra.mxu0 %v4307
    %4565 = vmatprep.subr.mxu0 0.0
    %4566 = vmatpush1.msra.mxu0 0.0
    %4567 = vmatprep.subr.mxu0 0.0
    %4568 = vmatpush1.msra.mxu0 0.0
    %4569 = vmatprep.subr.mxu0 0.0
    %4570 = vmatpush1.msra.mxu0 0.0
    %4571 = vmatprep.subr.mxu0 0.0
    %4572 = vmatpush1.msra.mxu0 0.0
    %4573 = vmatprep.subr.mxu0 0.0
    %4574 = vmatpush1.msra.mxu0 0.0
    %4575 = vmatprep.subr.mxu0 0.0
    %4576 = vmatpush1.msra.mxu0 0.0
    %4577 = vmatprep.subr.mxu0 0.0
    %4578 = vmatpush1.msra.mxu0 0.0
    %4579 = vmatprep.subr.mxu0 0.0
    %4580 = vmatpush1.msra.mxu0 0.0
    %4581 = vmatprep.subr.mxu0 0.0
    %4582 = vmatpush1.msra.mxu0 0.0
    %4583 = vmatprep.subr.mxu0 0.0
    %4584 = vmatpush1.msra.mxu0 0.0
    %4585 = vmatprep.subr.mxu0 0.0
    %4586 = vmatpush1.msra.mxu0 0.0
    %4587 = vmatprep.subr.mxu0 0.0
    %4588 = vmatpush1.msra.mxu0 0.0
    %4589 = vmatprep.subr.mxu0 0.0
    %4590 = vmatpush1.msra.mxu0 0.0
    %4591 = vmatprep.subr.mxu0 0.0
    %4592 = vmatpush1.msra.mxu0 0.0
    %4593 = vmatprep.subr.mxu0 0.0
    %4594 = vmatpush1.msra.mxu0 0.0
    %4595 = vmatprep.subr.mxu0 0.0
    %4596 = vmatpush1.msra.mxu0 0.0
    %4597 = vmatprep.subr.mxu0 0.0
    %4598 = vmatpush1.msra.mxu0 0.0
    %4599 = vmatprep.subr.mxu0 0.0
    %4600 = vmatpush1.msra.mxu0 0.0
    %4601 = vmatprep.subr.mxu0 0.0
    %4602 = vmatpush1.msra.mxu0 0.0
    %4603 = vmatprep.subr.mxu0 0.0
    %4604 = vmatpush1.msra.mxu0 0.0
    %4605 = vmatprep.subr.mxu0 0.0
    %4606 = vmatpush1.msra.mxu0 0.0
    %4607 = vmatprep.subr.mxu0 0.0
    %4608 = vmatpush1.msra.mxu0 0.0
    %4609 = vmatprep.subr.mxu0 0.0
    %4610 = vmatpush1.msra.mxu0 0.0
    %4611 = vmatprep.subr.mxu0 0.0
    %4612 = vmatpush1.msra.mxu0 0.0
    %4613 = vmatprep.subr.mxu0 0.0
    %4614 = vmatpush1.msra.mxu0 0.0
    %4615 = vmatprep.subr.mxu0 0.0
    %4616 = vmatpush1.msra.mxu0 0.0
    %4617 = vmatprep.subr.mxu0 0.0
    %4618 = vmatpush1.msra.mxu0 0.0
    %4619 = vmatprep.subr.mxu0 0.0
    %4620 = vmatpush1.msra.mxu0 0.0
    %4621 = vmatprep.subr.mxu0 0.0
    %4622 = vmatpush1.msra.mxu0 0.0
    %4623 = vmatprep.subr.mxu0 0.0
    %4624 = vmatpush1.msra.mxu0 0.0
    %4625 = vmatprep.subr.mxu0 0.0
    %4626 = vmatpush1.msra.mxu0 0.0
    %4627 = vmatprep.mubr.f32.mxu0 0.0
    %4628 = vmatmul.mubr.f32.gmra.mrb[0].mxu0 %v4561
    %v4629 = vpop.f32.mrb[0].mxu0
    %v4630 = vadd.f32 0.0, %v4629
    %v4631 = vpop.f32.mrb[0].mxu0
    %4632 = vdwg.mxu0
    %v4633 = vadd.f32 %v4111, %v4630
    %v4634 = vld [vmem:[%s49] sm:$0x1]
    %v4636 = vlaneseq
    %v4637 = vshrl.u32 %v4636, 7
    %v4638 = vsub.s32 0, %v4637
    %v4639 = vrot.slane %v4634, %v4638
    %v4641 = vadd.f32 %v4471, %v4639
    %v4642 = vadd.f32 %v4633, %v4639
    %v4643 = vadd.f32 %v2550, %v4641
    %v4644 = vadd.f32 %v2551, %v4642
    %v4645 = vld [vmem:[%s51] sm:$0x1]
    %v4646 = vld [vmem:[%s53] sm:$0x1]
    %v4647 = vsel %vm235, %v4643, 0.0
    %4648 = vadd.xlane.f32.xlu0 %v4647
    %v4649 = vpop.xlane.xlu0 %4648
    %v4650 = vsel %vm235, %v4644, 0.0
    %4651 = vadd.xlane.f32.xlu0 %v4650
    %v4652 = vpop.xlane.xlu0 %4651
    %v4653 = vmul.f32 %v4649, %v2314
    %v4654 = vmul.f32 %v4652, %v2314
    %v4655 = vsub.f32 %v4643, %v4653
    %v4656 = vsub.f32 %v4644, %v4654
    %v4657 = vmul.f32 %v4655, %v4655
    %v4658 = vmul.f32 %v4656, %v4656
    %v4659 = vsel %vm235, %v4657, 0.0
    %4660 = vadd.xlane.f32.xlu0 %v4659
    %v4661 = vpop.xlane.xlu0 %4660
    %v4662 = vsel %vm235, %v4658, 0.0
    %4663 = vadd.xlane.f32.xlu0 %v4662
    %v4664 = vpop.xlane.xlu0 %4663
    %v4665 = vmul.f32 %v4661, %v2314
    %v4666 = vmul.f32 %v4664, %v2314
    %v4667 = vadd.f32 %v4665, 1e-05
    %v4668 = vadd.f32 %v4666, 1e-05
    %v4669 = vrsqrt.pop %v4667
    %v4670 = vrsqrt.pop %v4668
    %v4671 = vmul.f32 %v4655, %v4669
    %v4672 = vmul.f32 %v4656, %v4670
    %v4674 = vlaneseq
    %v4675 = vshrl.u32 %v4674, 7
    %v4676 = vsub.s32 0, %v4675
    %v4677 = vrot.slane %v4645, %v4676
    %v4679 = vmul.f32 %v4671, %v4677
    %v4680 = vmul.f32 %v4672, %v4677
    %v4682 = vlaneseq
    %v4683 = vshrl.u32 %v4682, 7
    %v4684 = vsub.s32 0, %v4683
    %v4685 = vrot.slane %v4646, %v4684
    %v4687 = vadd.f32 %v4679, %v4685
    %v4688 = vadd.f32 %v4680, %v4685
    %v4689 = vpack.c.bf16 %v4688, %v4687
    %v4690 = vld [vmem:[%s55] sm:$0xf]
    %v4691 = vld [vmem:[%s55 + $0x4] sm:$0xf]
    %v4692 = vld [vmem:[%s55 + $0x8] sm:$0xf]
    %v4693 = vld [vmem:[%s55 + $0xc] sm:$0xf]
    %v4694 = vld [vmem:[%s57] sm:$0x1]
    %v4696 = vlaneseq
    %v4697 = vshrl.u32 %v4696, 7
    %v4698 = vsub.s32 0, %v4697
    %v4699 = vrot.slane %v4694, %v4698
    %v4705 = vunpack.c.l.b16 %v4690
    %v4706 = vunpack.c.l.b16 %v4691
    %v4707 = vunpack.c.l.b16 %v4692
    %v4708 = vunpack.c.l.b16 %v4693
    %v4709 = vpack.c.b16 %v4706, %v4705
    %v4710 = vpack.c.b16 %v4708, %v4707
    %v4714 = vsel %vm235, %v4689, 0
    %4716 = vmatprep.subr.bf16.mxu0 0
    %4717 = vmatpush1.bf16.msra.mxu0 %v4709
    %4718 = vmatprep.subr.bf16.mxu0 0
    %4719 = vmatpush1.bf16.msra.mxu0 %v4710
    %4720 = vmatprep.subr.bf16.mxu0 0
    %4721 = vmatpush1.bf16.msra.mxu0 0
    %4722 = vmatprep.subr.bf16.mxu0 0
    %4723 = vmatpush1.bf16.msra.mxu0 0
    %4724 = vmatprep.subr.bf16.mxu0 0
    %4725 = vmatpush1.bf16.msra.mxu0 0
    %4726 = vmatprep.subr.bf16.mxu0 0
    %4727 = vmatpush1.bf16.msra.mxu0 0
    %4728 = vmatprep.subr.bf16.mxu0 0
    %4729 = vmatpush1.bf16.msra.mxu0 0
    %4730 = vmatprep.subr.bf16.mxu0 0
    %4731 = vmatpush1.bf16.msra.mxu0 0
    %4732 = vmatprep.subr.bf16.mxu0 0
    %4733 = vmatpush1.bf16.msra.mxu0 0
    %4734 = vmatprep.subr.bf16.mxu0 0
    %4735 = vmatpush1.bf16.msra.mxu0 0
    %4736 = vmatprep.subr.bf16.mxu0 0
    %4737 = vmatpush1.bf16.msra.mxu0 0
    %4738 = vmatprep.subr.bf16.mxu0 0
    %4739 = vmatpush1.bf16.msra.mxu0 0
    %4740 = vmatprep.subr.bf16.mxu0 0
    %4741 = vmatpush1.bf16.msra.mxu0 0
    %4742 = vmatprep.subr.bf16.mxu0 0
    %4743 = vmatpush1.bf16.msra.mxu0 0
    %4744 = vmatprep.subr.bf16.mxu0 0
    %4745 = vmatpush1.bf16.msra.mxu0 0
    %4746 = vmatprep.subr.bf16.mxu0 0
    %4747 = vmatpush1.bf16.msra.mxu0 0
    %4748 = vmatprep.mubr.bf16.mxu0 0
    %4749 = vmatmul.mubr.bf16.gmra.mrb[0].mxu0 %v4714
    %v4750 = vpop.f32.mrb[0].mxu0
    %v4751 = vadd.f32 %v4699, %v4750
    %v4752 = vpop.f32.mrb[0].mxu0
    %v4753 = vpop.f32.mrb[0].mxu0
    %v4754 = vadd.f32 %v4699, %v4753
    %v4755 = vpop.f32.mrb[0].mxu0
    %4756 = vdwg.mxu0
    %v4757 = vmax.f32 %v4751, 0.0
    %v4758 = vmax.f32 %v4754, 0.0
    %v4759 = vpack.c.bf16 %v4758, %v4757
    %v4760 = vld [vmem:[%s59] sm:$0xf]
    %v4761 = vld [vmem:[%s59 + $0x4] sm:$0xf]
    %v4762 = vld [vmem:[%s59 + $0x8] sm:$0xf]
    %v4763 = vld [vmem:[%s59 + $0xc] sm:$0xf]
    %v4764 = vld [vmem:[%s59 + $0x10] sm:$0xf]
    %v4765 = vld [vmem:[%s59 + $0x14] sm:$0xf]
    %v4766 = vld [vmem:[%s59 + $0x18] sm:$0xf]
    %v4767 = vld [vmem:[%s59 + $0x1c] sm:$0xf]
    %v4768 = vld [vmem:[%s61] sm:$0x1]
    %v4770 = vlaneseq
    %v4771 = vshrl.u32 %v4770, 7
    %v4772 = vsub.s32 0, %v4771
    %v4773 = vrot.slane %v4768, %v4772
    %v4783 = vunpack.c.l.b16 %v4760
    %v4784 = vunpack.c.l.b16 %v4761
    %v4785 = vunpack.c.l.b16 %v4762
    %v4786 = vunpack.c.l.b16 %v4763
    %v4787 = vunpack.c.l.b16 %v4764
    %v4788 = vunpack.c.l.b16 %v4765
    %v4789 = vunpack.c.l.b16 %v4766
    %v4790 = vunpack.c.l.b16 %v4767
    %v4791 = vpack.c.b16 %v4784, %v4783
    %v4792 = vpack.c.b16 %v4786, %v4785
    %v4793 = vpack.c.b16 %v4788, %v4787
    %v4794 = vpack.c.b16 %v4790, %v4789
    %v4800 = vsel %vm2461, %v4759, 0
    %4802 = vmatprep.subr.bf16.mxu0 0
    %4803 = vmatpush1.bf16.msra.mxu0 %v4791
    %4804 = vmatprep.subr.bf16.mxu0 0
    %4805 = vmatpush1.bf16.msra.mxu0 %v4792
    %4806 = vmatprep.subr.bf16.mxu0 0
    %4807 = vmatpush1.bf16.msra.mxu0 %v4793
    %4808 = vmatprep.subr.bf16.mxu0 0
    %4809 = vmatpush1.bf16.msra.mxu0 %v4794
    %4810 = vmatprep.subr.bf16.mxu0 0
    %4811 = vmatpush1.bf16.msra.mxu0 0
    %4812 = vmatprep.subr.bf16.mxu0 0
    %4813 = vmatpush1.bf16.msra.mxu0 0
    %4814 = vmatprep.subr.bf16.mxu0 0
    %4815 = vmatpush1.bf16.msra.mxu0 0
    %4816 = vmatprep.subr.bf16.mxu0 0
    %4817 = vmatpush1.bf16.msra.mxu0 0
    %4818 = vmatprep.subr.bf16.mxu0 0
    %4819 = vmatpush1.bf16.msra.mxu0 0
    %4820 = vmatprep.subr.bf16.mxu0 0
    %4821 = vmatpush1.bf16.msra.mxu0 0
    %4822 = vmatprep.subr.bf16.mxu0 0
    %4823 = vmatpush1.bf16.msra.mxu0 0
    %4824 = vmatprep.subr.bf16.mxu0 0
    %4825 = vmatpush1.bf16.msra.mxu0 0
    %4826 = vmatprep.subr.bf16.mxu0 0
    %4827 = vmatpush1.bf16.msra.mxu0 0
    %4828 = vmatprep.subr.bf16.mxu0 0
    %4829 = vmatpush1.bf16.msra.mxu0 0
    %4830 = vmatprep.subr.bf16.mxu0 0
    %4831 = vmatpush1.bf16.msra.mxu0 0
    %4832 = vmatprep.subr.bf16.mxu0 0
    %4833 = vmatpush1.bf16.msra.mxu0 0
    %4834 = vmatprep.mubr.bf16.mxu0 0
    %4835 = vmatmul.mubr.bf16.gmra.mrb[0].mxu0 %v4800
    %v4836 = vpop.f32.mrb[0].mxu0
    %v4837 = vadd.f32 %v4773, %v4836
    %v4838 = vpop.f32.mrb[0].mxu0
    %v4839 = vpop.f32.mrb[0].mxu0
    %v4840 = vadd.f32 %v4773, %v4839
    %v4841 = vpop.f32.mrb[0].mxu0
    %4842 = vdwg.mxu0
    %v4843 = vadd.f32 %v4687, %v4837
    %v4844 = vadd.f32 %v4688, %v4840
    %v4845 = vld [vmem:[%s63] sm:$0x1]
    %v4846 = vld [vmem:[%s65] sm:$0x1]
    %v4847 = vsel %vm235, %v4843, 0.0
    %4848 = vadd.xlane.f32.xlu0 %v4847
    %v4849 = vpop.xlane.xlu0 %4848
    %v4850 = vsel %vm235, %v4844, 0.0
    %4851 = vadd.xlane.f32.xlu0 %v4850
    %v4852 = vpop.xlane.xlu0 %4851
    %v4853 = vmul.f32 %v4849, %v2314
    %v4854 = vmul.f32 %v4852, %v2314
    %v4855 = vsub.f32 %v4843, %v4853
    %v4856 = vsub.f32 %v4844, %v4854
    %v4857 = vmul.f32 %v4855, %v4855
    %v4858 = vmul.f32 %v4856, %v4856
    %v4859 = vsel %vm235, %v4857, 0.0
    %4860 = vadd.xlane.f32.xlu0 %v4859
    %v4861 = vpop.xlane.xlu0 %4860
    %v4862 = vsel %vm235, %v4858, 0.0
    %4863 = vadd.xlane.f32.xlu0 %v4862
    %v4864 = vpop.xlane.xlu0 %4863
    %v4865 = vmul.f32 %v4861, %v2314
    %v4866 = vmul.f32 %v4864, %v2314
    %v4867 = vadd.f32 %v4865, 1e-05
    %v4868 = vadd.f32 %v4866, 1e-05
    %v4869 = vrsqrt.pop %v4867
    %v4870 = vrsqrt.pop %v4868
    %v4871 = vmul.f32 %v4855, %v4869
    %v4872 = vmul.f32 %v4856, %v4870
    %v4874 = vlaneseq
    %v4875 = vshrl.u32 %v4874, 7
    %v4876 = vsub.s32 0, %v4875
    %v4877 = vrot.slane %v4845, %v4876
    %v4879 = vmul.f32 %v4871, %v4877
    %v4880 = vmul.f32 %v4872, %v4877
    %v4882 = vlaneseq
    %v4883 = vshrl.u32 %v4882, 7
    %v4884 = vsub.s32 0, %v4883
    %v4885 = vrot.slane %v4846, %v4884
    %v4887 = vadd.f32 %v4879, %v4885
    %v4888 = vadd.f32 %v4880, %v4885
    %v4889 = vpack.c.bf16 %v4888, %v4887
    %v4890 = vld [vmem:[%s67] sm:$0xf]
    %v4891 = vld [vmem:[%s67 + $0x4] sm:$0xf]
    %v4892 = vld [vmem:[%s67 + $0x8] sm:$0xf]
    %v4893 = vld [vmem:[%s67 + $0xc] sm:$0xf]
    %v4894 = vld [vmem:[%s69] sm:$0x1]
    %v4896 = vlaneseq
    %v4897 = vshrl.u32 %v4896, 7
    %v4898 = vsub.s32 0, %v4897
    %v4899 = vrot.slane %v4894, %v4898
    %v4905 = vunpack.c.l.b16 %v4890
    %v4906 = vunpack.c.l.b16 %v4891
    %v4907 = vunpack.c.l.b16 %v4892
    %v4908 = vunpack.c.l.b16 %v4893
    %v4909 = vpack.c.b16 %v4906, %v4905
    %v4910 = vpack.c.b16 %v4908, %v4907
    %v4914 = vsel %vm235, %v4889, 0
    %4916 = vmatprep.subr.bf16.mxu0 0
    %4917 = vmatpush1.bf16.msra.mxu0 %v4909
    %4918 = vmatprep.subr.bf16.mxu0 0
    %4919 = vmatpush1.bf16.msra.mxu0 %v4910
    %4920 = vmatprep.subr.bf16.mxu0 0
    %4921 = vmatpush1.bf16.msra.mxu0 0
    %4922 = vmatprep.subr.bf16.mxu0 0
    %4923 = vmatpush1.bf16.msra.mxu0 0
    %4924 = vmatprep.subr.bf16.mxu0 0
    %4925 = vmatpush1.bf16.msra.mxu0 0
    %4926 = vmatprep.subr.bf16.mxu0 0
    %4927 = vmatpush1.bf16.msra.mxu0 0
    %4928 = vmatprep.subr.bf16.mxu0 0
    %4929 = vmatpush1.bf16.msra.mxu0 0
    %4930 = vmatprep.subr.bf16.mxu0 0
    %4931 = vmatpush1.bf16.msra.mxu0 0
    %4932 = vmatprep.subr.bf16.mxu0 0
    %4933 = vmatpush1.bf16.msra.mxu0 0
    %4934 = vmatprep.subr.bf16.mxu0 0
    %4935 = vmatpush1.bf16.msra.mxu0 0
    %4936 = vmatprep.subr.bf16.mxu0 0
    %4937 = vmatpush1.bf16.msra.mxu0 0
    %4938 = vmatprep.subr.bf16.mxu0 0
    %4939 = vmatpush1.bf16.msra.mxu0 0
    %4940 = vmatprep.subr.bf16.mxu0 0
    %4941 = vmatpush1.bf16.msra.mxu0 0
    %4942 = vmatprep.subr.bf16.mxu0 0
    %4943 = vmatpush1.bf16.msra.mxu0 0
    %4944 = vmatprep.subr.bf16.mxu0 0
    %4945 = vmatpush1.bf16.msra.mxu0 0
    %4946 = vmatprep.subr.bf16.mxu0 0
    %4947 = vmatpush1.bf16.msra.mxu0 0
    %4948 = vmatprep.mubr.bf16.mxu0 0
    %4949 = vmatmul.mubr.bf16.gmra.mrb[0].mxu0 %v4914
    %v4950 = vpop.f32.mrb[0].mxu0
    %v4951 = vadd.f32 %v4899, %v4950
    %v4952 = vpop.f32.mrb[0].mxu0
    %v4953 = vpop.f32.mrb[0].mxu0
    %v4954 = vadd.f32 %v4899, %v4953
    %v4955 = vpop.f32.mrb[0].mxu0
    %4956 = vdwg.mxu0
    %vm4957 = vcmask 64519
    %4958 = vst.msk [vmem:[#allocation2 - $0x7] sm:$0x80] %vm4957, %v4951
    %4959 = vst.msk [vmem:[#allocation2 - $0x6] sm:$0x80] %vm4957, %v4954
    // Predicated region
    $region142: #{attention_transformer_forward.1} parent=1 // pred_check
      _
    $region143: #{attention_transformer_forward.1} parent=1 // pred_check_branch
      %4961 = sbr.rel (0) target = $region145
    $region144: #{attention_transformer_forward.1} parent=1 // pred_region
      %s4963 = ssub.s32 32, 32
      %4964 = vsyncadd [#allocation3], %s4963
      %s4966 = sshll.u32 [#allocation2], 4
      %s4967 = int_to_ptr.vmem [resolvable:$true] %s4966
      %4969 = dma.vmem_to_hbm [thread:$0]  %s4967, 32, %s71, [#allocation3]
    $region145: #{attention_transformer_forward.1} parent=1 // pred_fallthru
      _
    // Predicated region
    $region146: #{attention_transformer_forward.1} parent=1 // pred_check
      _
    $region147: #{attention_transformer_forward.1} parent=1 // pred_check_branch
      %4971 = sbr.rel (0) target = $region149
    $region148: #{attention_transformer_forward.1} parent=1 // pred_region
      %4972 = dma.done [#allocation3], 32
    $region149: #{attention_transformer_forward.1} parent=1 // pred_fallthru
      _
    %4973 = vsyncpa [#allocation3], 1

</llo_original>
